<compile_context>
chip_gen: v7x
topology: tpu7x:2x2x1
jax: 0.10.0
libtpu: 0.0.40
codegen_flags: <defaults>
</compile_context>

<pallas_src>
import jax
import jax.numpy as jnp
from jax.experimental import pallas as pl
from jax.experimental.pallas import tpu as pltpu

TOWER_LAYERS = (1, 2, 4)  # rnn_1, rnn_2, rnn_3 layer counts (matches the PyTorch module)

VMEM_SPEC = pl.BlockSpec(memory_space=pltpu.MemorySpace.VMEM)
ANY_SPEC = pl.BlockSpec(memory_space=pl.ANY)


def _round_up(n, m):
    return ((n + m - 1) // m) * m


def _vmem_limit_bytes(T, Bp, F, H, Tc, Rmax, n_units, E, O):
    """Derive the per-call VMEM budget from actual shapes, clamped to the chip ceiling."""
    G = 4 * H
    need = (
        2 * T * Bp * F * 4                              # x input + stats temporaries
        + 2 * Rmax * G * 2                              # double-buffered layer weight slabs (bf16)
        + T * Bp * H * 2                                # inter-layer sequence (bf16)
        + 3 * Tc * Bp * G * 2                           # pre chunk (bf16) + f32 matmul transient
        + n_units * 8 * G * 4                           # folded biases (sublane-padded)
        + (5 * F + 3 * H + O) * _round_up(E, 128) * 2   # head weights (bf16)
        + 24 * Bp * G * 4                               # gates / h / c / spill headroom
    )
    limit = int(need * 1.5) + (4 << 20)
    try:
        info = pltpu.get_tpu_info()
        ceiling = int(getattr(info, "vmem_capacity_bytes", 128 << 20) * 0.85)
    except Exception:  # pragma: no cover - conservative fallback if HW query unavailable
        ceiling = 100 << 20
    return max(min(limit, ceiling), 32 << 20)


# ----------------------------------------------------------------------------
# Fused kernel: 3 LSTM towers (weights streamed from HBM) + stats + head.
# PyTorch gate order: i, f, g, o.
# ----------------------------------------------------------------------------
def _make_fused_kernel(T, Bp, F, H, tower_layers, Tc, Rmax, E, O):
    G = 4 * H
    n_units = sum(tower_layers)        # total LSTM layers across the 3 towers
    off_hh = Rmax - H                  # row offset of W_hh^T inside each weight slab

    def kernel(*refs):
        x_ref = refs[0]                                    # (T, Bp, F)   f32  VMEM
        w_hbm = refs[1:1 + n_units]                        # n_units x (Rmax, G) bf16 HBM
        b_refs = refs[1 + n_units:1 + 2 * n_units]         # n_units x (1, G)  f32  VMEM
        fc_ws_ref, fc_wr_ref, fc_b_ref, fin_w_ref, fin_b_ref = \
            refs[1 + 2 * n_units:1 + 2 * n_units + 5]
        out_ref = refs[1 + 2 * n_units + 5]                # (Bp, O)
        wbuf, sem, seq_ref, pre_ref = refs[1 + 2 * n_units + 6:]
        # wbuf : (2, Rmax, G) bf16  -- double-buffered [W_ih^T ; W_hh^T] slab
        # sem  : DMA semaphores (2,)
        # seq  : (T, Bp, H)  bf16   -- inter-layer sequence (shared by all towers)
        # pre  : (Tc, Bp, G) bf16   -- hoisted input projection, one time-chunk

        # Static prefetch chain over all 7 layer-units (weights streamed from HBM).
        copies = [pltpu.make_async_copy(w_hbm[j], wbuf.at[j % 2], sem.at[j % 2])
                  for j in range(n_units)]
        copies[0].start()

        tower_outs = []
        unit = 0
        for num_layers in tower_layers:
            h_top = None
            for l in range(num_layers):
                copies[unit].wait()                        # weights for this layer ready
                if unit + 1 < n_units:
                    copies[unit + 1].start()               # prefetch next layer into other slot
                slot = unit % 2
                din = F if l == 0 else H
                bias = b_refs[unit][...]                   # (1, G) f32, b_ih + b_hh folded
                write_seq = l < num_layers - 1             # last layer only emits h_T

                h_st = jnp.zeros((Bp, H), jnp.float32)
                c_st = jnp.zeros((Bp, H), jnp.float32)

                # Time-chunked hoisted projection + recurrence.
                for t0 in range(0, T, Tc):
                    tc_len = min(Tc, T - t0)
                    if l == 0:
                        xin = x_ref[t0:t0 + tc_len].reshape(tc_len * Bp, F)
                        xin = xin.astype(jnp.bfloat16)
                    else:
                        xin = seq_ref[t0:t0 + tc_len].reshape(tc_len * Bp, H)  # already bf16
                    wih = wbuf[slot, 0:din, :]             # (din, G) bf16
                    pre = jnp.dot(xin, wih, preferred_element_type=jnp.float32) + bias
                    # Write directly into the chunk scratch (bf16), no full-size f32 temp.
                    pre_ref[0:tc_len] = pre.reshape(tc_len, Bp, G).astype(jnp.bfloat16)

                    def step(t, carry, _slot=slot, _t0=t0, _ws=write_seq):
                        h_c, c_c = carry
                        whh = wbuf[_slot, off_hh:off_hh + H, :]       # (H, G) bf16
                        gates = (pre_ref[t].astype(jnp.float32)
                                 + jnp.dot(h_c.astype(jnp.bfloat16), whh,
                                           preferred_element_type=jnp.float32))
                        # Gate slices are lane-aligned when H % 128 == 0 (real model H=1280).
                        i_g = jax.nn.sigmoid(gates[:, 0 * H:1 * H])
                        f_g = jax.nn.sigmoid(gates[:, 1 * H:2 * H])
                        g_g = jnp.tanh(gates[:, 2 * H:3 * H])
                        o_g = jax.nn.sigmoid(gates[:, 3 * H:4 * H])
                        c_new = f_g * c_c + i_g * g_g
                        h_new = o_g * jnp.tanh(c_new)
                        if _ws:
                            seq_ref[_t0 + t] = h_new.astype(jnp.bfloat16)
                        return h_new, c_new

                    h_st, c_st = jax.lax.fori_loop(0, tc_len, step, (h_st, c_st),
                                                   unroll=1)
                h_top = h_st
                unit += 1
            tower_outs.append(h_top)

        # ---- StatsModel: last / min / max / mean / std(unbiased=False) over T ----
        x_all = x_ref[...].astype(jnp.float32)             # (T, Bp, F)
        last = x_all[T - 1]
        mn = jnp.min(x_all, axis=0)
        mx = jnp.max(x_all, axis=0)
        mean = jnp.mean(x_all, axis=0)
        std = jnp.sqrt(jnp.mean(jnp.square(x_all - mean[None, :, :]), axis=0))
        stats = jnp.concatenate([last, mn, mx, mean, std], axis=1)     # (Bp, 5F)

        # ---- RnnModel tail: concat last hidden states + SiLU ----
        rnn = jax.nn.silu(jnp.concatenate(tower_outs, axis=1))         # (Bp, 3H)

        # ---- Head: dropout == identity at eval; norm_linear as plain affine ----
        # fc is split host-side into the ragged stats part and the lane-aligned rnn part.
        h_fc = jnp.tanh(
            jnp.dot(stats.astype(jnp.bfloat16), fc_ws_ref[...],
                    preferred_element_type=jnp.float32)
            + jnp.dot(rnn.astype(jnp.bfloat16), fc_wr_ref[...],
                      preferred_element_type=jnp.float32)
            + fc_b_ref[...])
        out = (jnp.dot(h_fc.astype(jnp.bfloat16), fin_w_ref[...],
                       preferred_element_type=jnp.float32)
               + fin_b_ref[...])
        out_ref[...] = out.astype(out_ref.dtype)

    return kernel


def _vid2fmri_fused(x_tm, prepped):
    """x_tm: (T, Bp, F) time-major f32. Returns (Bp, output_size) f32."""
    T, Bp, F = x_tm.shape
    w_list = prepped["lstm_w"]                 # n_units x (Rmax, 4H) bf16 (stay in HBM)
    b_list = prepped["lstm_b"]                 # n_units x (1, 4H)   f32
    Rmax, G = w_list[0].shape
    H = G // 4
    E = prepped["fc_b"].shape[1]
    O = prepped["final_b"].shape[1]
    n_units = len(w_list)
    Tc = min(T, 32)                            # time-chunk length for the hoisted projection

    args = ([x_tm] + list(w_list) + list(b_list)
            + [prepped["fc_w_stats"], prepped["fc_w_rnn"], prepped["fc_b"],
               prepped["final_w"], prepped["final_b"]])
    in_specs = ([VMEM_SPEC]
                + [ANY_SPEC] * n_units         # weight slabs stay in HBM, streamed manually
                + [VMEM_SPEC] * n_units
                + [VMEM_SPEC] * 5)

    vmem_limit = _vmem_limit_bytes(T, Bp, F, H, Tc, Rmax, n_units, E, O)

    return pl.pallas_call(
        _make_fused_kernel(T, Bp, F, H, TOWER_LAYERS, Tc, Rmax, E, O),
        out_shape=jax.ShapeDtypeStruct((Bp, O), jnp.float32),
        in_specs=in_specs,
        out_specs=VMEM_SPEC,
        scratch_shapes=[
            pltpu.VMEM((2, Rmax, G), jnp.bfloat16),   # double-buffered weight slab
            pltpu.SemaphoreType.DMA((2,)),            # one DMA sem per slot
            pltpu.VMEM((T, Bp, H), jnp.bfloat16),     # inter-layer sequence (shared)
            pltpu.VMEM((Tc, Bp, G), jnp.bfloat16),    # hoisted projection, one chunk
        ],
        compiler_params=pltpu.CompilerParams(vmem_limit_bytes=vmem_limit),
    )(*args)


# ----------------------------------------------------------------------------
# Parameter construction (PyTorch layout) + host-side prep.
# ----------------------------------------------------------------------------
def init_params(key, num_of_features, embed_size, output_size, rnn_size):
    scale = 0.05
    keys = iter(jax.random.split(key, 64))

    def lin(shape):
        return scale * jax.random.normal(next(keys), shape, jnp.float32)

    def lstm_stack(num_layers):
        layers = []
        for l in range(num_layers):
            din = num_of_features if l == 0 else rnn_size
            layers.append((
                lin((4 * rnn_size, din)),        # weight_ih_l{l}
                lin((4 * rnn_size, rnn_size)),   # weight_hh_l{l}
                lin((4 * rnn_size,)),            # bias_ih_l{l}
                lin((4 * rnn_size,)),            # bias_hh_l{l}
            ))
        return layers

    fc_size = num_of_features * 5 + rnn_size * 3
    return {
        "rnn_1": lstm_stack(1),
        "rnn_2": lstm_stack(2),
        "rnn_3": lstm_stack(4),
        "fc_w": lin((embed_size, fc_size)),
        "fc_b": lin((embed_size,)),
        "final_w": lin((output_size, embed_size)),
        "final_b": lin((output_size,)),
    }


def prepare_params(params, weight_dtype=jnp.bfloat16):
    """Host-side one-time prep: transpose, cast to bf16, fold LSTM biases, and stack
    each layer's [W_ih^T ; W_hh^T] into one uniformly-shaped HBM slab for streaming."""
    F = params["rnn_1"][0][0].shape[1]          # W_ih_l0 is (4H, F)
    H = params["rnn_1"][0][1].shape[1]          # W_hh    is (4H, H)
    G = 4 * H
    rmax = max(_round_up(F, 8), H) + H          # rows: [W_ih^T pad | W_hh^T at rmax-H]

    def prep_tower(layers):
        ws, bs = [], []
        for w_ih, w_hh, b_ih, b_hh in layers:
            din = w_ih.shape[1]
            slab = jnp.zeros((rmax, G), weight_dtype)
            slab = slab.at[:din].set(jnp.asarray(w_ih.T, weight_dtype))        # (din, 4H)
            slab = slab.at[rmax - H:].set(jnp.asarray(w_hh.T, weight_dtype))   # (H, 4H)
            ws.append(slab)
            bs.append(jnp.asarray((b_ih + b_hh).reshape(1, -1), jnp.float32))  # (1, 4H)
        return ws, bs

    w_list, b_list = [], []
    for name in ("rnn_1", "rnn_2", "rnn_3"):
        ws, bs = prep_tower(params[name])
        w_list += ws
        b_list += bs

    n_stats = 5 * F
    fc_w_t = jnp.asarray(params["fc_w"], jnp.float32).T                        # (fc_size, E)
    return {
        "lstm_w": w_list,                                                      # streamed (HBM)
        "lstm_b": b_list,
        "fc_w_stats": jnp.asarray(fc_w_t[:n_stats], weight_dtype),             # (5F, E)
        "fc_w_rnn": jnp.asarray(fc_w_t[n_stats:], weight_dtype),               # (3H, E)
        "fc_b": jnp.asarray(params["fc_b"].reshape(1, -1), jnp.float32),
        "final_w": jnp.asarray(params["final_w"].T, weight_dtype),             # (E, O)
        "final_b": jnp.asarray(params["final_b"].reshape(1, -1), jnp.float32),
    }


# ----------------------------------------------------------------------------
# Full forward: pad batch to >=8 sublanes, go time-major, one fused kernel.
# ----------------------------------------------------------------------------
@jax.jit
def vid2fmri_forward(x, prepped):
    B, T, F = x.shape
    Bp = max(8, _round_up(B, 8))
    if Bp != B:
        x = jnp.pad(x, ((0, Bp - B), (0, 0), (0, 0)))
    x_tm = jnp.transpose(x, (1, 0, 2))                    # (T, Bp, F) time-major
    out = _vid2fmri_fused(x_tm, prepped)                  # (Bp, output_size)
    return out[:B]


if __name__ == "__main__":
    # Small shapes consistent with the module's forward.
    B, T, F = 2, 8, 16          # batch, sequence length, num_of_features
    embed_size = 32
    output_size = 16
    rnn_size = 32               # module hardcodes 1024+256; shrunk for the demo

    key = jax.random.PRNGKey(0)
    k_x, k_p = jax.random.split(key)
    x = jax.random.normal(k_x, (B, T, F), jnp.float32)
    params = init_params(k_p, F, embed_size, output_size, rnn_size)
    prepped = prepare_params(params)

    out = vid2fmri_forward(x, prepped)
    out = jax.block_until_ready(out)
    assert out.shape == (B, output_size), out.shape
    print("KERNEL_OK")
</pallas_src>

<mosaic_0001>
module attributes {stable_mosaic.version = 11 : i64} {
  func.func @kernel(%arg0: memref<8x8x16xf32, #tpu.memory_space<vmem>>, %arg1: memref<64x128xbf16, #tpu.memory_space<any>>, %arg2: memref<64x128xbf16, #tpu.memory_space<any>>, %arg3: memref<64x128xbf16, #tpu.memory_space<any>>, %arg4: memref<64x128xbf16, #tpu.memory_space<any>>, %arg5: memref<64x128xbf16, #tpu.memory_space<any>>, %arg6: memref<64x128xbf16, #tpu.memory_space<any>>, %arg7: memref<64x128xbf16, #tpu.memory_space<any>>, %arg8: memref<1x128xf32, #tpu.memory_space<vmem>>, %arg9: memref<1x128xf32, #tpu.memory_space<vmem>>, %arg10: memref<1x128xf32, #tpu.memory_space<vmem>>, %arg11: memref<1x128xf32, #tpu.memory_space<vmem>>, %arg12: memref<1x128xf32, #tpu.memory_space<vmem>>, %arg13: memref<1x128xf32, #tpu.memory_space<vmem>>, %arg14: memref<1x128xf32, #tpu.memory_space<vmem>>, %arg15: memref<80x32xbf16, #tpu.memory_space<vmem>>, %arg16: memref<96x32xbf16, #tpu.memory_space<vmem>>, %arg17: memref<1x32xf32, #tpu.memory_space<vmem>>, %arg18: memref<32x16xbf16, #tpu.memory_space<vmem>>, %arg19: memref<1x16xf32, #tpu.memory_space<vmem>>, %arg20: memref<8x16xf32, #tpu.memory_space<vmem>>, %arg21: memref<2x64x128xbf16, #tpu.memory_space<vmem>>, %arg22: memref<2x!tpu.dma_semaphore, #tpu.memory_space<semaphore_mem>>, %arg23: memref<8x8x32xbf16, #tpu.memory_space<vmem>>, %arg24: memref<8x8x128xbf16, #tpu.memory_space<vmem>>) attributes {dimension_semantics = [], scalar_prefetch = 0 : i64, scratch_operands = 4 : i64, tpu.core_type = #tpu.core_type<tc>} {
    %c0_i32 = arith.constant 0 : i32
    %c0_i32_0 = arith.constant 0 : i32
    %c0_i32_1 = arith.constant 0 : i32
    %c0_i32_2 = arith.constant 0 : i32
    %0 = tpu.memref_slice %arg21[%c0_i32, %c0_i32_1, %c0_i32_2] : memref<2x64x128xbf16, #tpu.memory_space<vmem>> -> memref<1x64x128xbf16, #tpu.memory_space<vmem>>
    %1 = tpu.memref_squeeze %0 : memref<1x64x128xbf16, #tpu.memory_space<vmem>> -> memref<64x128xbf16, #tpu.memory_space<vmem>>
    %2 = tpu.memref_slice %arg22[%c0_i32_0] : memref<2x!tpu.dma_semaphore, #tpu.memory_space<semaphore_mem>> -> memref<1x!tpu.dma_semaphore, #tpu.memory_space<semaphore_mem>>
    %3 = tpu.memref_squeeze %2 : memref<1x!tpu.dma_semaphore, #tpu.memory_space<semaphore_mem>> -> memref<!tpu.dma_semaphore, #tpu.memory_space<semaphore_mem>>
    tpu.enqueue_dma source(%arg1 : memref<64x128xbf16, #tpu.memory_space<any>>) target(%1 : memref<64x128xbf16, #tpu.memory_space<vmem>>) target_semaphore(%3 : memref<!tpu.dma_semaphore, #tpu.memory_space<semaphore_mem>>)
    %c0_i32_3 = arith.constant 0 : i32
    %c0_i32_4 = arith.constant 0 : i32
    %c0_i32_5 = arith.constant 0 : i32
    %c0_i32_6 = arith.constant 0 : i32
    %4 = tpu.memref_slice %arg21[%c0_i32_3, %c0_i32_5, %c0_i32_6] : memref<2x64x128xbf16, #tpu.memory_space<vmem>> -> memref<1x64x128xbf16, #tpu.memory_space<vmem>>
    %5 = tpu.memref_squeeze %4 : memref<1x64x128xbf16, #tpu.memory_space<vmem>> -> memref<64x128xbf16, #tpu.memory_space<vmem>>
    %6 = tpu.memref_slice %arg22[%c0_i32_4] : memref<2x!tpu.dma_semaphore, #tpu.memory_space<semaphore_mem>> -> memref<1x!tpu.dma_semaphore, #tpu.memory_space<semaphore_mem>>
    %7 = tpu.memref_squeeze %6 : memref<1x!tpu.dma_semaphore, #tpu.memory_space<semaphore_mem>> -> memref<!tpu.dma_semaphore, #tpu.memory_space<semaphore_mem>>
    tpu.wait_dma2 semaphore(%7 : memref<!tpu.dma_semaphore, #tpu.memory_space<semaphore_mem>>) src(%arg1 : memref<64x128xbf16, #tpu.memory_space<any>>) dst(%5 : memref<64x128xbf16, #tpu.memory_space<vmem>>)
    %c1_i32 = arith.constant 1 : i32
    %c1_i32_7 = arith.constant 1 : i32
    %c0_i32_8 = arith.constant 0 : i32
    %c0_i32_9 = arith.constant 0 : i32
    %8 = tpu.memref_slice %arg21[%c1_i32, %c0_i32_8, %c0_i32_9] : memref<2x64x128xbf16, #tpu.memory_space<vmem>> -> memref<1x64x128xbf16, #tpu.memory_space<vmem>>
    %9 = tpu.memref_squeeze %8 : memref<1x64x128xbf16, #tpu.memory_space<vmem>> -> memref<64x128xbf16, #tpu.memory_space<vmem>>
    %10 = tpu.memref_slice %arg22[%c1_i32_7] : memref<2x!tpu.dma_semaphore, #tpu.memory_space<semaphore_mem>> -> memref<1x!tpu.dma_semaphore, #tpu.memory_space<semaphore_mem>>
    %11 = tpu.memref_squeeze %10 : memref<1x!tpu.dma_semaphore, #tpu.memory_space<semaphore_mem>> -> memref<!tpu.dma_semaphore, #tpu.memory_space<semaphore_mem>>
    tpu.enqueue_dma source(%arg2 : memref<64x128xbf16, #tpu.memory_space<any>>) target(%9 : memref<64x128xbf16, #tpu.memory_space<vmem>>) target_semaphore(%11 : memref<!tpu.dma_semaphore, #tpu.memory_space<semaphore_mem>>)
    %c0 = arith.constant 0 : index
    %c0_10 = arith.constant 0 : index
    %12 = vector.load %arg8[%c0, %c0_10] : memref<1x128xf32, #tpu.memory_space<vmem>>, vector<1x128xf32>
    %cst = arith.constant 0.000000e+00 : f32
    %13 = vector.broadcast %cst : f32 to vector<8x32xf32>
    %cst_11 = arith.constant 0.000000e+00 : f32
    %14 = vector.broadcast %cst_11 : f32 to vector<8x32xf32>
    %c0_12 = arith.constant 0 : index
    %c0_13 = arith.constant 0 : index
    %c0_14 = arith.constant 0 : index
    %15 = vector.load %arg0[%c0_12, %c0_13, %c0_14] : memref<8x8x16xf32, #tpu.memory_space<vmem>>, vector<8x8x16xf32>
    %16 = vector.shape_cast %15 : vector<8x8x16xf32> to vector<64x16xf32>
    %17 = arith.truncf %16 : vector<64x16xf32> to vector<64x16xbf16>
    %c0_15 = arith.constant 0 : index
    %c0_16 = arith.constant 0 : index
    %c0_17 = arith.constant 0 : index
    %18 = vector.load %arg21[%c0_15, %c0_16, %c0_17] : memref<2x64x128xbf16, #tpu.memory_space<vmem>>, vector<1x16x128xbf16>
    %19 = vector.shape_cast %18 : vector<1x16x128xbf16> to vector<16x128xbf16>
    %cst_18 = arith.constant dense<0.000000e+00> : vector<64x128xf32>
    %20 = tpu.matmul %17, %19, %cst_18 {dimension_numbers = #tpu.dot_dimension_numbers<[1], [0], [0], [1], [0, 0, 1, 1], [], []>} : vector<64x16xbf16>, vector<16x128xbf16>, vector<64x128xf32> -> vector<64x128xf32>
    %21 = vector.broadcast %12 : vector<1x128xf32> to vector<64x128xf32>
    %22 = arith.addf %20, %21 : vector<64x128xf32>
    %23 = vector.shape_cast %22 : vector<64x128xf32> to vector<8x8x128xf32>
    %24 = arith.truncf %23 : vector<8x8x128xf32> to vector<8x8x128xbf16>
    %c0_19 = arith.constant 0 : index
    %c0_20 = arith.constant 0 : index
    %c0_21 = arith.constant 0 : index
    %25 = vector.load %arg24[%c0_19, %c0_20, %c0_21] : memref<8x8x128xbf16, #tpu.memory_space<vmem>>, vector<8x8x128xbf16>
    tpu.vector_store %arg24[%c0_19, %c0_20, %c0_21], %24 {strides = array<i32>} : memref<8x8x128xbf16, #tpu.memory_space<vmem>>, vector<8x8x128xbf16>,
    %c0_i32_22 = arith.constant 0 : i32
    %c8_i32 = arith.constant 8 : i32
    %26 = arith.addi %c0_i32_22, %c8_i32 : i32
    %c1_i32_23 = arith.constant 1 : i32
    %27:2 = scf.for %arg25 = %c0_i32_22 to %26 step %c1_i32_23 iter_args(%arg26 = %13, %arg27 = %14) -> (vector<8x32xf32>, vector<8x32xf32>)  : i32 {
      %c0_201 = arith.constant 0 : index
      %c32 = arith.constant 32 : index
      %c0_202 = arith.constant 0 : index
      %206 = vector.load %arg21[%c0_201, %c32, %c0_202] : memref<2x64x128xbf16, #tpu.memory_space<vmem>>, vector<1x32x128xbf16>
      %207 = vector.shape_cast %206 : vector<1x32x128xbf16> to vector<32x128xbf16>
      %208 = arith.index_cast %arg25 : i32 to index
      %c0_203 = arith.constant 0 : index
      %c0_204 = arith.constant 0 : index
      %209 = vector.load %arg24[%208, %c0_203, %c0_204] : memref<8x8x128xbf16, #tpu.memory_space<vmem>>, vector<1x8x128xbf16>
      %210 = vector.shape_cast %209 : vector<1x8x128xbf16> to vector<8x128xbf16>
      %211 = arith.extf %210 : vector<8x128xbf16> to vector<8x128xf32>
      %212 = arith.truncf %arg26 : vector<8x32xf32> to vector<8x32xbf16>
      %cst_205 = arith.constant dense<0.000000e+00> : vector<8x128xf32>
      %213 = tpu.matmul %212, %207, %cst_205 {dimension_numbers = #tpu.dot_dimension_numbers<[1], [0], [0], [1], [0, 0, 1, 1], [], []>} : vector<8x32xbf16>, vector<32x128xbf16>, vector<8x128xf32> -> vector<8x128xf32>
      %214 = arith.addf %211, %213 : vector<8x128xf32>
      %215 = vector.extract_strided_slice %214 {offsets = [0, 0], sizes = [8, 32], strides = [1, 1]} : vector<8x128xf32> to vector<8x32xf32>
      %216 = arith.negf %215 : vector<8x32xf32>
      %217 = math.exp %216 : vector<8x32xf32>
      %cst_206 = arith.constant 1.000000e+00 : f32
      %218 = vector.broadcast %cst_206 : f32 to vector<8x32xf32>
      %219 = arith.addf %218, %217 : vector<8x32xf32>
      %220 = arith.divf %218, %219 : vector<8x32xf32>
      %221 = vector.extract_strided_slice %214 {offsets = [0, 32], sizes = [8, 32], strides = [1, 1]} : vector<8x128xf32> to vector<8x32xf32>
      %222 = arith.negf %221 : vector<8x32xf32>
      %223 = math.exp %222 : vector<8x32xf32>
      %cst_207 = arith.constant 1.000000e+00 : f32
      %224 = vector.broadcast %cst_207 : f32 to vector<8x32xf32>
      %225 = arith.addf %224, %223 : vector<8x32xf32>
      %226 = arith.divf %224, %225 : vector<8x32xf32>
      %227 = vector.extract_strided_slice %214 {offsets = [0, 64], sizes = [8, 32], strides = [1, 1]} : vector<8x128xf32> to vector<8x32xf32>
      %228 = math.tanh %227 : vector<8x32xf32>
      %229 = vector.extract_strided_slice %214 {offsets = [0, 96], sizes = [8, 32], strides = [1, 1]} : vector<8x128xf32> to vector<8x32xf32>
      %230 = arith.negf %229 : vector<8x32xf32>
      %231 = math.exp %230 : vector<8x32xf32>
      %cst_208 = arith.constant 1.000000e+00 : f32
      %232 = vector.broadcast %cst_208 : f32 to vector<8x32xf32>
      %233 = arith.addf %232, %231 : vector<8x32xf32>
      %234 = arith.divf %232, %233 : vector<8x32xf32>
      %235 = arith.mulf %226, %arg27 : vector<8x32xf32>
      %236 = arith.mulf %220, %228 : vector<8x32xf32>
      %237 = arith.addf %235, %236 : vector<8x32xf32>
      %238 = math.tanh %237 : vector<8x32xf32>
      %239 = arith.mulf %234, %238 : vector<8x32xf32>
      scf.yield %239, %237 : vector<8x32xf32>, vector<8x32xf32>
    }
    %c8_i32_24 = arith.constant 8 : i32
    %c1_i32_25 = arith.constant 1 : i32
    %c1_i32_26 = arith.constant 1 : i32
    %c0_i32_27 = arith.constant 0 : i32
    %c0_i32_28 = arith.constant 0 : i32
    %28 = tpu.memref_slice %arg21[%c1_i32_25, %c0_i32_27, %c0_i32_28] : memref<2x64x128xbf16, #tpu.memory_space<vmem>> -> memref<1x64x128xbf16, #tpu.memory_space<vmem>>
    %29 = tpu.memref_squeeze %28 : memref<1x64x128xbf16, #tpu.memory_space<vmem>> -> memref<64x128xbf16, #tpu.memory_space<vmem>>
    %30 = tpu.memref_slice %arg22[%c1_i32_26] : memref<2x!tpu.dma_semaphore, #tpu.memory_space<semaphore_mem>> -> memref<1x!tpu.dma_semaphore, #tpu.memory_space<semaphore_mem>>
    %31 = tpu.memref_squeeze %30 : memref<1x!tpu.dma_semaphore, #tpu.memory_space<semaphore_mem>> -> memref<!tpu.dma_semaphore, #tpu.memory_space<semaphore_mem>>
    tpu.wait_dma2 semaphore(%31 : memref<!tpu.dma_semaphore, #tpu.memory_space<semaphore_mem>>) src(%arg2 : memref<64x128xbf16, #tpu.memory_space<any>>) dst(%29 : memref<64x128xbf16, #tpu.memory_space<vmem>>)
    %c0_i32_29 = arith.constant 0 : i32
    %c0_i32_30 = arith.constant 0 : i32
    %c0_i32_31 = arith.constant 0 : i32
    %c0_i32_32 = arith.constant 0 : i32
    %32 = tpu.memref_slice %arg21[%c0_i32_29, %c0_i32_31, %c0_i32_32] : memref<2x64x128xbf16, #tpu.memory_space<vmem>> -> memref<1x64x128xbf16, #tpu.memory_space<vmem>>
    %33 = tpu.memref_squeeze %32 : memref<1x64x128xbf16, #tpu.memory_space<vmem>> -> memref<64x128xbf16, #tpu.memory_space<vmem>>
    %34 = tpu.memref_slice %arg22[%c0_i32_30] : memref<2x!tpu.dma_semaphore, #tpu.memory_space<semaphore_mem>> -> memref<1x!tpu.dma_semaphore, #tpu.memory_space<semaphore_mem>>
    %35 = tpu.memref_squeeze %34 : memref<1x!tpu.dma_semaphore, #tpu.memory_space<semaphore_mem>> -> memref<!tpu.dma_semaphore, #tpu.memory_space<semaphore_mem>>
    tpu.enqueue_dma source(%arg3 : memref<64x128xbf16, #tpu.memory_space<any>>) target(%33 : memref<64x128xbf16, #tpu.memory_space<vmem>>) target_semaphore(%35 : memref<!tpu.dma_semaphore, #tpu.memory_space<semaphore_mem>>)
    %c0_33 = arith.constant 0 : index
    %c0_34 = arith.constant 0 : index
    %36 = vector.load %arg9[%c0_33, %c0_34] : memref<1x128xf32, #tpu.memory_space<vmem>>, vector<1x128xf32>
    %cst_35 = arith.constant 0.000000e+00 : f32
    %37 = vector.broadcast %cst_35 : f32 to vector<8x32xf32>
    %cst_36 = arith.constant 0.000000e+00 : f32
    %38 = vector.broadcast %cst_36 : f32 to vector<8x32xf32>
    %c0_37 = arith.constant 0 : index
    %c0_38 = arith.constant 0 : index
    %c0_39 = arith.constant 0 : index
    %39 = vector.load %arg0[%c0_37, %c0_38, %c0_39] : memref<8x8x16xf32, #tpu.memory_space<vmem>>, vector<8x8x16xf32>
    %40 = vector.shape_cast %39 : vector<8x8x16xf32> to vector<64x16xf32>
    %41 = arith.truncf %40 : vector<64x16xf32> to vector<64x16xbf16>
    %c1 = arith.constant 1 : index
    %c0_40 = arith.constant 0 : index
    %c0_41 = arith.constant 0 : index
    %42 = vector.load %arg21[%c1, %c0_40, %c0_41] : memref<2x64x128xbf16, #tpu.memory_space<vmem>>, vector<1x16x128xbf16>
    %43 = vector.shape_cast %42 : vector<1x16x128xbf16> to vector<16x128xbf16>
    %cst_42 = arith.constant dense<0.000000e+00> : vector<64x128xf32>
    %44 = tpu.matmul %41, %43, %cst_42 {dimension_numbers = #tpu.dot_dimension_numbers<[1], [0], [0], [1], [0, 0, 1, 1], [], []>} : vector<64x16xbf16>, vector<16x128xbf16>, vector<64x128xf32> -> vector<64x128xf32>
    %45 = vector.broadcast %36 : vector<1x128xf32> to vector<64x128xf32>
    %46 = arith.addf %44, %45 : vector<64x128xf32>
    %47 = vector.shape_cast %46 : vector<64x128xf32> to vector<8x8x128xf32>
    %48 = arith.truncf %47 : vector<8x8x128xf32> to vector<8x8x128xbf16>
    %c0_43 = arith.constant 0 : index
    %c0_44 = arith.constant 0 : index
    %c0_45 = arith.constant 0 : index
    %49 = vector.load %arg24[%c0_43, %c0_44, %c0_45] : memref<8x8x128xbf16, #tpu.memory_space<vmem>>, vector<8x8x128xbf16>
    tpu.vector_store %arg24[%c0_43, %c0_44, %c0_45], %48 {strides = array<i32>} : memref<8x8x128xbf16, #tpu.memory_space<vmem>>, vector<8x8x128xbf16>,
    %c0_i32_46 = arith.constant 0 : i32
    %c8_i32_47 = arith.constant 8 : i32
    %50 = arith.addi %c0_i32_46, %c8_i32_47 : i32
    %c1_i32_48 = arith.constant 1 : i32
    %51:2 = scf.for %arg25 = %c0_i32_46 to %50 step %c1_i32_48 iter_args(%arg26 = %37, %arg27 = %38) -> (vector<8x32xf32>, vector<8x32xf32>)  : i32 {
      %c1_201 = arith.constant 1 : index
      %c32 = arith.constant 32 : index
      %c0_202 = arith.constant 0 : index
      %206 = vector.load %arg21[%c1_201, %c32, %c0_202] : memref<2x64x128xbf16, #tpu.memory_space<vmem>>, vector<1x32x128xbf16>
      %207 = vector.shape_cast %206 : vector<1x32x128xbf16> to vector<32x128xbf16>
      %208 = arith.index_cast %arg25 : i32 to index
      %c0_203 = arith.constant 0 : index
      %c0_204 = arith.constant 0 : index
      %209 = vector.load %arg24[%208, %c0_203, %c0_204] : memref<8x8x128xbf16, #tpu.memory_space<vmem>>, vector<1x8x128xbf16>
      %210 = vector.shape_cast %209 : vector<1x8x128xbf16> to vector<8x128xbf16>
      %211 = arith.extf %210 : vector<8x128xbf16> to vector<8x128xf32>
      %212 = arith.truncf %arg26 : vector<8x32xf32> to vector<8x32xbf16>
      %cst_205 = arith.constant dense<0.000000e+00> : vector<8x128xf32>
      %213 = tpu.matmul %212, %207, %cst_205 {dimension_numbers = #tpu.dot_dimension_numbers<[1], [0], [0], [1], [0, 0, 1, 1], [], []>} : vector<8x32xbf16>, vector<32x128xbf16>, vector<8x128xf32> -> vector<8x128xf32>
      %214 = arith.addf %211, %213 : vector<8x128xf32>
      %215 = vector.extract_strided_slice %214 {offsets = [0, 0], sizes = [8, 32], strides = [1, 1]} : vector<8x128xf32> to vector<8x32xf32>
      %216 = arith.negf %215 : vector<8x32xf32>
      %217 = math.exp %216 : vector<8x32xf32>
      %cst_206 = arith.constant 1.000000e+00 : f32
      %218 = vector.broadcast %cst_206 : f32 to vector<8x32xf32>
      %219 = arith.addf %218, %217 : vector<8x32xf32>
      %220 = arith.divf %218, %219 : vector<8x32xf32>
      %221 = vector.extract_strided_slice %214 {offsets = [0, 32], sizes = [8, 32], strides = [1, 1]} : vector<8x128xf32> to vector<8x32xf32>
      %222 = arith.negf %221 : vector<8x32xf32>
      %223 = math.exp %222 : vector<8x32xf32>
      %cst_207 = arith.constant 1.000000e+00 : f32
      %224 = vector.broadcast %cst_207 : f32 to vector<8x32xf32>
      %225 = arith.addf %224, %223 : vector<8x32xf32>
      %226 = arith.divf %224, %225 : vector<8x32xf32>
      %227 = vector.extract_strided_slice %214 {offsets = [0, 64], sizes = [8, 32], strides = [1, 1]} : vector<8x128xf32> to vector<8x32xf32>
      %228 = math.tanh %227 : vector<8x32xf32>
      %229 = vector.extract_strided_slice %214 {offsets = [0, 96], sizes = [8, 32], strides = [1, 1]} : vector<8x128xf32> to vector<8x32xf32>
      %230 = arith.negf %229 : vector<8x32xf32>
      %231 = math.exp %230 : vector<8x32xf32>
      %cst_208 = arith.constant 1.000000e+00 : f32
      %232 = vector.broadcast %cst_208 : f32 to vector<8x32xf32>
      %233 = arith.addf %232, %231 : vector<8x32xf32>
      %234 = arith.divf %232, %233 : vector<8x32xf32>
      %235 = arith.mulf %226, %arg27 : vector<8x32xf32>
      %236 = arith.mulf %220, %228 : vector<8x32xf32>
      %237 = arith.addf %235, %236 : vector<8x32xf32>
      %238 = math.tanh %237 : vector<8x32xf32>
      %239 = arith.mulf %234, %238 : vector<8x32xf32>
      %240 = arith.truncf %239 : vector<8x32xf32> to vector<8x32xbf16>
      %c0_i32_209 = arith.constant 0 : i32
      %241 = arith.addi %c0_i32_209, %arg25 : i32
      %242 = arith.index_cast %241 : i32 to index
      %c0_210 = arith.constant 0 : index
      %c0_211 = arith.constant 0 : index
      %243 = vector.load %arg23[%242, %c0_210, %c0_211] : memref<8x8x32xbf16, #tpu.memory_space<vmem>>, vector<1x8x32xbf16>
      %244 = vector.shape_cast %243 : vector<1x8x32xbf16> to vector<8x32xbf16>
      %245 = vector.shape_cast %240 : vector<8x32xbf16> to vector<1x8x32xbf16>
      tpu.vector_store %arg23[%242, %c0_210, %c0_211], %245 {strides = array<i32>} : memref<8x8x32xbf16, #tpu.memory_space<vmem>>, vector<1x8x32xbf16>,
      scf.yield %239, %237 : vector<8x32xf32>, vector<8x32xf32>
    }
    %c8_i32_49 = arith.constant 8 : i32
    %c0_i32_50 = arith.constant 0 : i32
    %c0_i32_51 = arith.constant 0 : i32
    %c0_i32_52 = arith.constant 0 : i32
    %c0_i32_53 = arith.constant 0 : i32
    %52 = tpu.memref_slice %arg21[%c0_i32_50, %c0_i32_52, %c0_i32_53] : memref<2x64x128xbf16, #tpu.memory_space<vmem>> -> memref<1x64x128xbf16, #tpu.memory_space<vmem>>
    %53 = tpu.memref_squeeze %52 : memref<1x64x128xbf16, #tpu.memory_space<vmem>> -> memref<64x128xbf16, #tpu.memory_space<vmem>>
    %54 = tpu.memref_slice %arg22[%c0_i32_51] : memref<2x!tpu.dma_semaphore, #tpu.memory_space<semaphore_mem>> -> memref<1x!tpu.dma_semaphore, #tpu.memory_space<semaphore_mem>>
    %55 = tpu.memref_squeeze %54 : memref<1x!tpu.dma_semaphore, #tpu.memory_space<semaphore_mem>> -> memref<!tpu.dma_semaphore, #tpu.memory_space<semaphore_mem>>
    tpu.wait_dma2 semaphore(%55 : memref<!tpu.dma_semaphore, #tpu.memory_space<semaphore_mem>>) src(%arg3 : memref<64x128xbf16, #tpu.memory_space<any>>) dst(%53 : memref<64x128xbf16, #tpu.memory_space<vmem>>)
    %c1_i32_54 = arith.constant 1 : i32
    %c1_i32_55 = arith.constant 1 : i32
    %c0_i32_56 = arith.constant 0 : i32
    %c0_i32_57 = arith.constant 0 : i32
    %56 = tpu.memref_slice %arg21[%c1_i32_54, %c0_i32_56, %c0_i32_57] : memref<2x64x128xbf16, #tpu.memory_space<vmem>> -> memref<1x64x128xbf16, #tpu.memory_space<vmem>>
    %57 = tpu.memref_squeeze %56 : memref<1x64x128xbf16, #tpu.memory_space<vmem>> -> memref<64x128xbf16, #tpu.memory_space<vmem>>
    %58 = tpu.memref_slice %arg22[%c1_i32_55] : memref<2x!tpu.dma_semaphore, #tpu.memory_space<semaphore_mem>> -> memref<1x!tpu.dma_semaphore, #tpu.memory_space<semaphore_mem>>
    %59 = tpu.memref_squeeze %58 : memref<1x!tpu.dma_semaphore, #tpu.memory_space<semaphore_mem>> -> memref<!tpu.dma_semaphore, #tpu.memory_space<semaphore_mem>>
    tpu.enqueue_dma source(%arg4 : memref<64x128xbf16, #tpu.memory_space<any>>) target(%57 : memref<64x128xbf16, #tpu.memory_space<vmem>>) target_semaphore(%59 : memref<!tpu.dma_semaphore, #tpu.memory_space<semaphore_mem>>)
    %c0_58 = arith.constant 0 : index
    %c0_59 = arith.constant 0 : index
    %60 = vector.load %arg10[%c0_58, %c0_59] : memref<1x128xf32, #tpu.memory_space<vmem>>, vector<1x128xf32>
    %cst_60 = arith.constant 0.000000e+00 : f32
    %61 = vector.broadcast %cst_60 : f32 to vector<8x32xf32>
    %cst_61 = arith.constant 0.000000e+00 : f32
    %62 = vector.broadcast %cst_61 : f32 to vector<8x32xf32>
    %c0_62 = arith.constant 0 : index
    %c0_63 = arith.constant 0 : index
    %c0_64 = arith.constant 0 : index
    %63 = vector.load %arg23[%c0_62, %c0_63, %c0_64] : memref<8x8x32xbf16, #tpu.memory_space<vmem>>, vector<8x8x32xbf16>
    %64 = vector.shape_cast %63 : vector<8x8x32xbf16> to vector<64x32xbf16>
    %c0_65 = arith.constant 0 : index
    %c0_66 = arith.constant 0 : index
    %c0_67 = arith.constant 0 : index
    %65 = vector.load %arg21[%c0_65, %c0_66, %c0_67] : memref<2x64x128xbf16, #tpu.memory_space<vmem>>, vector<1x32x128xbf16>
    %66 = vector.shape_cast %65 : vector<1x32x128xbf16> to vector<32x128xbf16>
    %cst_68 = arith.constant dense<0.000000e+00> : vector<64x128xf32>
    %67 = tpu.matmul %64, %66, %cst_68 {dimension_numbers = #tpu.dot_dimension_numbers<[1], [0], [0], [1], [0, 0, 1, 1], [], []>} : vector<64x32xbf16>, vector<32x128xbf16>, vector<64x128xf32> -> vector<64x128xf32>
    %68 = vector.broadcast %60 : vector<1x128xf32> to vector<64x128xf32>
    %69 = arith.addf %67, %68 : vector<64x128xf32>
    %70 = vector.shape_cast %69 : vector<64x128xf32> to vector<8x8x128xf32>
    %71 = arith.truncf %70 : vector<8x8x128xf32> to vector<8x8x128xbf16>
    %c0_69 = arith.constant 0 : index
    %c0_70 = arith.constant 0 : index
    %c0_71 = arith.constant 0 : index
    %72 = vector.load %arg24[%c0_69, %c0_70, %c0_71] : memref<8x8x128xbf16, #tpu.memory_space<vmem>>, vector<8x8x128xbf16>
    tpu.vector_store %arg24[%c0_69, %c0_70, %c0_71], %71 {strides = array<i32>} : memref<8x8x128xbf16, #tpu.memory_space<vmem>>, vector<8x8x128xbf16>,
    %c0_i32_72 = arith.constant 0 : i32
    %c8_i32_73 = arith.constant 8 : i32
    %73 = arith.addi %c0_i32_72, %c8_i32_73 : i32
    %c1_i32_74 = arith.constant 1 : i32
    %74:2 = scf.for %arg25 = %c0_i32_72 to %73 step %c1_i32_74 iter_args(%arg26 = %61, %arg27 = %62) -> (vector<8x32xf32>, vector<8x32xf32>)  : i32 {
      %c0_201 = arith.constant 0 : index
      %c32 = arith.constant 32 : index
      %c0_202 = arith.constant 0 : index
      %206 = vector.load %arg21[%c0_201, %c32, %c0_202] : memref<2x64x128xbf16, #tpu.memory_space<vmem>>, vector<1x32x128xbf16>
      %207 = vector.shape_cast %206 : vector<1x32x128xbf16> to vector<32x128xbf16>
      %208 = arith.index_cast %arg25 : i32 to index
      %c0_203 = arith.constant 0 : index
      %c0_204 = arith.constant 0 : index
      %209 = vector.load %arg24[%208, %c0_203, %c0_204] : memref<8x8x128xbf16, #tpu.memory_space<vmem>>, vector<1x8x128xbf16>
      %210 = vector.shape_cast %209 : vector<1x8x128xbf16> to vector<8x128xbf16>
      %211 = arith.extf %210 : vector<8x128xbf16> to vector<8x128xf32>
      %212 = arith.truncf %arg26 : vector<8x32xf32> to vector<8x32xbf16>
      %cst_205 = arith.constant dense<0.000000e+00> : vector<8x128xf32>
      %213 = tpu.matmul %212, %207, %cst_205 {dimension_numbers = #tpu.dot_dimension_numbers<[1], [0], [0], [1], [0, 0, 1, 1], [], []>} : vector<8x32xbf16>, vector<32x128xbf16>, vector<8x128xf32> -> vector<8x128xf32>
      %214 = arith.addf %211, %213 : vector<8x128xf32>
      %215 = vector.extract_strided_slice %214 {offsets = [0, 0], sizes = [8, 32], strides = [1, 1]} : vector<8x128xf32> to vector<8x32xf32>
      %216 = arith.negf %215 : vector<8x32xf32>
      %217 = math.exp %216 : vector<8x32xf32>
      %cst_206 = arith.constant 1.000000e+00 : f32
      %218 = vector.broadcast %cst_206 : f32 to vector<8x32xf32>
      %219 = arith.addf %218, %217 : vector<8x32xf32>
      %220 = arith.divf %218, %219 : vector<8x32xf32>
      %221 = vector.extract_strided_slice %214 {offsets = [0, 32], sizes = [8, 32], strides = [1, 1]} : vector<8x128xf32> to vector<8x32xf32>
      %222 = arith.negf %221 : vector<8x32xf32>
      %223 = math.exp %222 : vector<8x32xf32>
      %cst_207 = arith.constant 1.000000e+00 : f32
      %224 = vector.broadcast %cst_207 : f32 to vector<8x32xf32>
      %225 = arith.addf %224, %223 : vector<8x32xf32>
      %226 = arith.divf %224, %225 : vector<8x32xf32>
      %227 = vector.extract_strided_slice %214 {offsets = [0, 64], sizes = [8, 32], strides = [1, 1]} : vector<8x128xf32> to vector<8x32xf32>
      %228 = math.tanh %227 : vector<8x32xf32>
      %229 = vector.extract_strided_slice %214 {offsets = [0, 96], sizes = [8, 32], strides = [1, 1]} : vector<8x128xf32> to vector<8x32xf32>
      %230 = arith.negf %229 : vector<8x32xf32>
      %231 = math.exp %230 : vector<8x32xf32>
      %cst_208 = arith.constant 1.000000e+00 : f32
      %232 = vector.broadcast %cst_208 : f32 to vector<8x32xf32>
      %233 = arith.addf %232, %231 : vector<8x32xf32>
      %234 = arith.divf %232, %233 : vector<8x32xf32>
      %235 = arith.mulf %226, %arg27 : vector<8x32xf32>
      %236 = arith.mulf %220, %228 : vector<8x32xf32>
      %237 = arith.addf %235, %236 : vector<8x32xf32>
      %238 = math.tanh %237 : vector<8x32xf32>
      %239 = arith.mulf %234, %238 : vector<8x32xf32>
      scf.yield %239, %237 : vector<8x32xf32>, vector<8x32xf32>
    }
    %c8_i32_75 = arith.constant 8 : i32
    %c1_i32_76 = arith.constant 1 : i32
    %c1_i32_77 = arith.constant 1 : i32
    %c0_i32_78 = arith.constant 0 : i32
    %c0_i32_79 = arith.constant 0 : i32
    %75 = tpu.memref_slice %arg21[%c1_i32_76, %c0_i32_78, %c0_i32_79] : memref<2x64x128xbf16, #tpu.memory_space<vmem>> -> memref<1x64x128xbf16, #tpu.memory_space<vmem>>
    %76 = tpu.memref_squeeze %75 : memref<1x64x128xbf16, #tpu.memory_space<vmem>> -> memref<64x128xbf16, #tpu.memory_space<vmem>>
    %77 = tpu.memref_slice %arg22[%c1_i32_77] : memref<2x!tpu.dma_semaphore, #tpu.memory_space<semaphore_mem>> -> memref<1x!tpu.dma_semaphore, #tpu.memory_space<semaphore_mem>>
    %78 = tpu.memref_squeeze %77 : memref<1x!tpu.dma_semaphore, #tpu.memory_space<semaphore_mem>> -> memref<!tpu.dma_semaphore, #tpu.memory_space<semaphore_mem>>
    tpu.wait_dma2 semaphore(%78 : memref<!tpu.dma_semaphore, #tpu.memory_space<semaphore_mem>>) src(%arg4 : memref<64x128xbf16, #tpu.memory_space<any>>) dst(%76 : memref<64x128xbf16, #tpu.memory_space<vmem>>)
    %c0_i32_80 = arith.constant 0 : i32
    %c0_i32_81 = arith.constant 0 : i32
    %c0_i32_82 = arith.constant 0 : i32
    %c0_i32_83 = arith.constant 0 : i32
    %79 = tpu.memref_slice %arg21[%c0_i32_80, %c0_i32_82, %c0_i32_83] : memref<2x64x128xbf16, #tpu.memory_space<vmem>> -> memref<1x64x128xbf16, #tpu.memory_space<vmem>>
    %80 = tpu.memref_squeeze %79 : memref<1x64x128xbf16, #tpu.memory_space<vmem>> -> memref<64x128xbf16, #tpu.memory_space<vmem>>
    %81 = tpu.memref_slice %arg22[%c0_i32_81] : memref<2x!tpu.dma_semaphore, #tpu.memory_space<semaphore_mem>> -> memref<1x!tpu.dma_semaphore, #tpu.memory_space<semaphore_mem>>
    %82 = tpu.memref_squeeze %81 : memref<1x!tpu.dma_semaphore, #tpu.memory_space<semaphore_mem>> -> memref<!tpu.dma_semaphore, #tpu.memory_space<semaphore_mem>>
    tpu.enqueue_dma source(%arg5 : memref<64x128xbf16, #tpu.memory_space<any>>) target(%80 : memref<64x128xbf16, #tpu.memory_space<vmem>>) target_semaphore(%82 : memref<!tpu.dma_semaphore, #tpu.memory_space<semaphore_mem>>)
    %c0_84 = arith.constant 0 : index
    %c0_85 = arith.constant 0 : index
    %83 = vector.load %arg11[%c0_84, %c0_85] : memref<1x128xf32, #tpu.memory_space<vmem>>, vector<1x128xf32>
    %cst_86 = arith.constant 0.000000e+00 : f32
    %84 = vector.broadcast %cst_86 : f32 to vector<8x32xf32>
    %cst_87 = arith.constant 0.000000e+00 : f32
    %85 = vector.broadcast %cst_87 : f32 to vector<8x32xf32>
    %c0_88 = arith.constant 0 : index
    %c0_89 = arith.constant 0 : index
    %c0_90 = arith.constant 0 : index
    %86 = vector.load %arg0[%c0_88, %c0_89, %c0_90] : memref<8x8x16xf32, #tpu.memory_space<vmem>>, vector<8x8x16xf32>
    %87 = vector.shape_cast %86 : vector<8x8x16xf32> to vector<64x16xf32>
    %88 = arith.truncf %87 : vector<64x16xf32> to vector<64x16xbf16>
    %c1_91 = arith.constant 1 : index
    %c0_92 = arith.constant 0 : index
    %c0_93 = arith.constant 0 : index
    %89 = vector.load %arg21[%c1_91, %c0_92, %c0_93] : memref<2x64x128xbf16, #tpu.memory_space<vmem>>, vector<1x16x128xbf16>
    %90 = vector.shape_cast %89 : vector<1x16x128xbf16> to vector<16x128xbf16>
    %cst_94 = arith.constant dense<0.000000e+00> : vector<64x128xf32>
    %91 = tpu.matmul %88, %90, %cst_94 {dimension_numbers = #tpu.dot_dimension_numbers<[1], [0], [0], [1], [0, 0, 1, 1], [], []>} : vector<64x16xbf16>, vector<16x128xbf16>, vector<64x128xf32> -> vector<64x128xf32>
    %92 = vector.broadcast %83 : vector<1x128xf32> to vector<64x128xf32>
    %93 = arith.addf %91, %92 : vector<64x128xf32>
    %94 = vector.shape_cast %93 : vector<64x128xf32> to vector<8x8x128xf32>
    %95 = arith.truncf %94 : vector<8x8x128xf32> to vector<8x8x128xbf16>
    %c0_95 = arith.constant 0 : index
    %c0_96 = arith.constant 0 : index
    %c0_97 = arith.constant 0 : index
    %96 = vector.load %arg24[%c0_95, %c0_96, %c0_97] : memref<8x8x128xbf16, #tpu.memory_space<vmem>>, vector<8x8x128xbf16>
    tpu.vector_store %arg24[%c0_95, %c0_96, %c0_97], %95 {strides = array<i32>} : memref<8x8x128xbf16, #tpu.memory_space<vmem>>, vector<8x8x128xbf16>,
    %c0_i32_98 = arith.constant 0 : i32
    %c8_i32_99 = arith.constant 8 : i32
    %97 = arith.addi %c0_i32_98, %c8_i32_99 : i32
    %c1_i32_100 = arith.constant 1 : i32
    %98:2 = scf.for %arg25 = %c0_i32_98 to %97 step %c1_i32_100 iter_args(%arg26 = %84, %arg27 = %85) -> (vector<8x32xf32>, vector<8x32xf32>)  : i32 {
      %c1_201 = arith.constant 1 : index
      %c32 = arith.constant 32 : index
      %c0_202 = arith.constant 0 : index
      %206 = vector.load %arg21[%c1_201, %c32, %c0_202] : memref<2x64x128xbf16, #tpu.memory_space<vmem>>, vector<1x32x128xbf16>
      %207 = vector.shape_cast %206 : vector<1x32x128xbf16> to vector<32x128xbf16>
      %208 = arith.index_cast %arg25 : i32 to index
      %c0_203 = arith.constant 0 : index
      %c0_204 = arith.constant 0 : index
      %209 = vector.load %arg24[%208, %c0_203, %c0_204] : memref<8x8x128xbf16, #tpu.memory_space<vmem>>, vector<1x8x128xbf16>
      %210 = vector.shape_cast %209 : vector<1x8x128xbf16> to vector<8x128xbf16>
      %211 = arith.extf %210 : vector<8x128xbf16> to vector<8x128xf32>
      %212 = arith.truncf %arg26 : vector<8x32xf32> to vector<8x32xbf16>
      %cst_205 = arith.constant dense<0.000000e+00> : vector<8x128xf32>
      %213 = tpu.matmul %212, %207, %cst_205 {dimension_numbers = #tpu.dot_dimension_numbers<[1], [0], [0], [1], [0, 0, 1, 1], [], []>} : vector<8x32xbf16>, vector<32x128xbf16>, vector<8x128xf32> -> vector<8x128xf32>
      %214 = arith.addf %211, %213 : vector<8x128xf32>
      %215 = vector.extract_strided_slice %214 {offsets = [0, 0], sizes = [8, 32], strides = [1, 1]} : vector<8x128xf32> to vector<8x32xf32>
      %216 = arith.negf %215 : vector<8x32xf32>
      %217 = math.exp %216 : vector<8x32xf32>
      %cst_206 = arith.constant 1.000000e+00 : f32
      %218 = vector.broadcast %cst_206 : f32 to vector<8x32xf32>
      %219 = arith.addf %218, %217 : vector<8x32xf32>
      %220 = arith.divf %218, %219 : vector<8x32xf32>
      %221 = vector.extract_strided_slice %214 {offsets = [0, 32], sizes = [8, 32], strides = [1, 1]} : vector<8x128xf32> to vector<8x32xf32>
      %222 = arith.negf %221 : vector<8x32xf32>
      %223 = math.exp %222 : vector<8x32xf32>
      %cst_207 = arith.constant 1.000000e+00 : f32
      %224 = vector.broadcast %cst_207 : f32 to vector<8x32xf32>
      %225 = arith.addf %224, %223 : vector<8x32xf32>
      %226 = arith.divf %224, %225 : vector<8x32xf32>
      %227 = vector.extract_strided_slice %214 {offsets = [0, 64], sizes = [8, 32], strides = [1, 1]} : vector<8x128xf32> to vector<8x32xf32>
      %228 = math.tanh %227 : vector<8x32xf32>
      %229 = vector.extract_strided_slice %214 {offsets = [0, 96], sizes = [8, 32], strides = [1, 1]} : vector<8x128xf32> to vector<8x32xf32>
      %230 = arith.negf %229 : vector<8x32xf32>
      %231 = math.exp %230 : vector<8x32xf32>
      %cst_208 = arith.constant 1.000000e+00 : f32
      %232 = vector.broadcast %cst_208 : f32 to vector<8x32xf32>
      %233 = arith.addf %232, %231 : vector<8x32xf32>
      %234 = arith.divf %232, %233 : vector<8x32xf32>
      %235 = arith.mulf %226, %arg27 : vector<8x32xf32>
      %236 = arith.mulf %220, %228 : vector<8x32xf32>
      %237 = arith.addf %235, %236 : vector<8x32xf32>
      %238 = math.tanh %237 : vector<8x32xf32>
      %239 = arith.mulf %234, %238 : vector<8x32xf32>
      %240 = arith.truncf %239 : vector<8x32xf32> to vector<8x32xbf16>
      %c0_i32_209 = arith.constant 0 : i32
      %241 = arith.addi %c0_i32_209, %arg25 : i32
      %242 = arith.index_cast %241 : i32 to index
      %c0_210 = arith.constant 0 : index
      %c0_211 = arith.constant 0 : index
      %243 = vector.load %arg23[%242, %c0_210, %c0_211] : memref<8x8x32xbf16, #tpu.memory_space<vmem>>, vector<1x8x32xbf16>
      %244 = vector.shape_cast %243 : vector<1x8x32xbf16> to vector<8x32xbf16>
      %245 = vector.shape_cast %240 : vector<8x32xbf16> to vector<1x8x32xbf16>
      tpu.vector_store %arg23[%242, %c0_210, %c0_211], %245 {strides = array<i32>} : memref<8x8x32xbf16, #tpu.memory_space<vmem>>, vector<1x8x32xbf16>,
      scf.yield %239, %237 : vector<8x32xf32>, vector<8x32xf32>
    }
    %c8_i32_101 = arith.constant 8 : i32
    %c0_i32_102 = arith.constant 0 : i32
    %c0_i32_103 = arith.constant 0 : i32
    %c0_i32_104 = arith.constant 0 : i32
    %c0_i32_105 = arith.constant 0 : i32
    %99 = tpu.memref_slice %arg21[%c0_i32_102, %c0_i32_104, %c0_i32_105] : memref<2x64x128xbf16, #tpu.memory_space<vmem>> -> memref<1x64x128xbf16, #tpu.memory_space<vmem>>
    %100 = tpu.memref_squeeze %99 : memref<1x64x128xbf16, #tpu.memory_space<vmem>> -> memref<64x128xbf16, #tpu.memory_space<vmem>>
    %101 = tpu.memref_slice %arg22[%c0_i32_103] : memref<2x!tpu.dma_semaphore, #tpu.memory_space<semaphore_mem>> -> memref<1x!tpu.dma_semaphore, #tpu.memory_space<semaphore_mem>>
    %102 = tpu.memref_squeeze %101 : memref<1x!tpu.dma_semaphore, #tpu.memory_space<semaphore_mem>> -> memref<!tpu.dma_semaphore, #tpu.memory_space<semaphore_mem>>
    tpu.wait_dma2 semaphore(%102 : memref<!tpu.dma_semaphore, #tpu.memory_space<semaphore_mem>>) src(%arg5 : memref<64x128xbf16, #tpu.memory_space<any>>) dst(%100 : memref<64x128xbf16, #tpu.memory_space<vmem>>)
    %c1_i32_106 = arith.constant 1 : i32
    %c1_i32_107 = arith.constant 1 : i32
    %c0_i32_108 = arith.constant 0 : i32
    %c0_i32_109 = arith.constant 0 : i32
    %103 = tpu.memref_slice %arg21[%c1_i32_106, %c0_i32_108, %c0_i32_109] : memref<2x64x128xbf16, #tpu.memory_space<vmem>> -> memref<1x64x128xbf16, #tpu.memory_space<vmem>>
    %104 = tpu.memref_squeeze %103 : memref<1x64x128xbf16, #tpu.memory_space<vmem>> -> memref<64x128xbf16, #tpu.memory_space<vmem>>
    %105 = tpu.memref_slice %arg22[%c1_i32_107] : memref<2x!tpu.dma_semaphore, #tpu.memory_space<semaphore_mem>> -> memref<1x!tpu.dma_semaphore, #tpu.memory_space<semaphore_mem>>
    %106 = tpu.memref_squeeze %105 : memref<1x!tpu.dma_semaphore, #tpu.memory_space<semaphore_mem>> -> memref<!tpu.dma_semaphore, #tpu.memory_space<semaphore_mem>>
    tpu.enqueue_dma source(%arg6 : memref<64x128xbf16, #tpu.memory_space<any>>) target(%104 : memref<64x128xbf16, #tpu.memory_space<vmem>>) target_semaphore(%106 : memref<!tpu.dma_semaphore, #tpu.memory_space<semaphore_mem>>)
    %c0_110 = arith.constant 0 : index
    %c0_111 = arith.constant 0 : index
    %107 = vector.load %arg12[%c0_110, %c0_111] : memref<1x128xf32, #tpu.memory_space<vmem>>, vector<1x128xf32>
    %cst_112 = arith.constant 0.000000e+00 : f32
    %108 = vector.broadcast %cst_112 : f32 to vector<8x32xf32>
    %cst_113 = arith.constant 0.000000e+00 : f32
    %109 = vector.broadcast %cst_113 : f32 to vector<8x32xf32>
    %c0_114 = arith.constant 0 : index
    %c0_115 = arith.constant 0 : index
    %c0_116 = arith.constant 0 : index
    %110 = vector.load %arg23[%c0_114, %c0_115, %c0_116] : memref<8x8x32xbf16, #tpu.memory_space<vmem>>, vector<8x8x32xbf16>
    %111 = vector.shape_cast %110 : vector<8x8x32xbf16> to vector<64x32xbf16>
    %c0_117 = arith.constant 0 : index
    %c0_118 = arith.constant 0 : index
    %c0_119 = arith.constant 0 : index
    %112 = vector.load %arg21[%c0_117, %c0_118, %c0_119] : memref<2x64x128xbf16, #tpu.memory_space<vmem>>, vector<1x32x128xbf16>
    %113 = vector.shape_cast %112 : vector<1x32x128xbf16> to vector<32x128xbf16>
    %cst_120 = arith.constant dense<0.000000e+00> : vector<64x128xf32>
    %114 = tpu.matmul %111, %113, %cst_120 {dimension_numbers = #tpu.dot_dimension_numbers<[1], [0], [0], [1], [0, 0, 1, 1], [], []>} : vector<64x32xbf16>, vector<32x128xbf16>, vector<64x128xf32> -> vector<64x128xf32>
    %115 = vector.broadcast %107 : vector<1x128xf32> to vector<64x128xf32>
    %116 = arith.addf %114, %115 : vector<64x128xf32>
    %117 = vector.shape_cast %116 : vector<64x128xf32> to vector<8x8x128xf32>
    %118 = arith.truncf %117 : vector<8x8x128xf32> to vector<8x8x128xbf16>
    %c0_121 = arith.constant 0 : index
    %c0_122 = arith.constant 0 : index
    %c0_123 = arith.constant 0 : index
    %119 = vector.load %arg24[%c0_121, %c0_122, %c0_123] : memref<8x8x128xbf16, #tpu.memory_space<vmem>>, vector<8x8x128xbf16>
    tpu.vector_store %arg24[%c0_121, %c0_122, %c0_123], %118 {strides = array<i32>} : memref<8x8x128xbf16, #tpu.memory_space<vmem>>, vector<8x8x128xbf16>,
    %c0_i32_124 = arith.constant 0 : i32
    %c8_i32_125 = arith.constant 8 : i32
    %120 = arith.addi %c0_i32_124, %c8_i32_125 : i32
    %c1_i32_126 = arith.constant 1 : i32
    %121:2 = scf.for %arg25 = %c0_i32_124 to %120 step %c1_i32_126 iter_args(%arg26 = %108, %arg27 = %109) -> (vector<8x32xf32>, vector<8x32xf32>)  : i32 {
      %c0_201 = arith.constant 0 : index
      %c32 = arith.constant 32 : index
      %c0_202 = arith.constant 0 : index
      %206 = vector.load %arg21[%c0_201, %c32, %c0_202] : memref<2x64x128xbf16, #tpu.memory_space<vmem>>, vector<1x32x128xbf16>
      %207 = vector.shape_cast %206 : vector<1x32x128xbf16> to vector<32x128xbf16>
      %208 = arith.index_cast %arg25 : i32 to index
      %c0_203 = arith.constant 0 : index
      %c0_204 = arith.constant 0 : index
      %209 = vector.load %arg24[%208, %c0_203, %c0_204] : memref<8x8x128xbf16, #tpu.memory_space<vmem>>, vector<1x8x128xbf16>
      %210 = vector.shape_cast %209 : vector<1x8x128xbf16> to vector<8x128xbf16>
      %211 = arith.extf %210 : vector<8x128xbf16> to vector<8x128xf32>
      %212 = arith.truncf %arg26 : vector<8x32xf32> to vector<8x32xbf16>
      %cst_205 = arith.constant dense<0.000000e+00> : vector<8x128xf32>
      %213 = tpu.matmul %212, %207, %cst_205 {dimension_numbers = #tpu.dot_dimension_numbers<[1], [0], [0], [1], [0, 0, 1, 1], [], []>} : vector<8x32xbf16>, vector<32x128xbf16>, vector<8x128xf32> -> vector<8x128xf32>
      %214 = arith.addf %211, %213 : vector<8x128xf32>
      %215 = vector.extract_strided_slice %214 {offsets = [0, 0], sizes = [8, 32], strides = [1, 1]} : vector<8x128xf32> to vector<8x32xf32>
      %216 = arith.negf %215 : vector<8x32xf32>
      %217 = math.exp %216 : vector<8x32xf32>
      %cst_206 = arith.constant 1.000000e+00 : f32
      %218 = vector.broadcast %cst_206 : f32 to vector<8x32xf32>
      %219 = arith.addf %218, %217 : vector<8x32xf32>
      %220 = arith.divf %218, %219 : vector<8x32xf32>
      %221 = vector.extract_strided_slice %214 {offsets = [0, 32], sizes = [8, 32], strides = [1, 1]} : vector<8x128xf32> to vector<8x32xf32>
      %222 = arith.negf %221 : vector<8x32xf32>
      %223 = math.exp %222 : vector<8x32xf32>
      %cst_207 = arith.constant 1.000000e+00 : f32
      %224 = vector.broadcast %cst_207 : f32 to vector<8x32xf32>
      %225 = arith.addf %224, %223 : vector<8x32xf32>
      %226 = arith.divf %224, %225 : vector<8x32xf32>
      %227 = vector.extract_strided_slice %214 {offsets = [0, 64], sizes = [8, 32], strides = [1, 1]} : vector<8x128xf32> to vector<8x32xf32>
      %228 = math.tanh %227 : vector<8x32xf32>
      %229 = vector.extract_strided_slice %214 {offsets = [0, 96], sizes = [8, 32], strides = [1, 1]} : vector<8x128xf32> to vector<8x32xf32>
      %230 = arith.negf %229 : vector<8x32xf32>
      %231 = math.exp %230 : vector<8x32xf32>
      %cst_208 = arith.constant 1.000000e+00 : f32
      %232 = vector.broadcast %cst_208 : f32 to vector<8x32xf32>
      %233 = arith.addf %232, %231 : vector<8x32xf32>
      %234 = arith.divf %232, %233 : vector<8x32xf32>
      %235 = arith.mulf %226, %arg27 : vector<8x32xf32>
      %236 = arith.mulf %220, %228 : vector<8x32xf32>
      %237 = arith.addf %235, %236 : vector<8x32xf32>
      %238 = math.tanh %237 : vector<8x32xf32>
      %239 = arith.mulf %234, %238 : vector<8x32xf32>
      %240 = arith.truncf %239 : vector<8x32xf32> to vector<8x32xbf16>
      %c0_i32_209 = arith.constant 0 : i32
      %241 = arith.addi %c0_i32_209, %arg25 : i32
      %242 = arith.index_cast %241 : i32 to index
      %c0_210 = arith.constant 0 : index
      %c0_211 = arith.constant 0 : index
      %243 = vector.load %arg23[%242, %c0_210, %c0_211] : memref<8x8x32xbf16, #tpu.memory_space<vmem>>, vector<1x8x32xbf16>
      %244 = vector.shape_cast %243 : vector<1x8x32xbf16> to vector<8x32xbf16>
      %245 = vector.shape_cast %240 : vector<8x32xbf16> to vector<1x8x32xbf16>
      tpu.vector_store %arg23[%242, %c0_210, %c0_211], %245 {strides = array<i32>} : memref<8x8x32xbf16, #tpu.memory_space<vmem>>, vector<1x8x32xbf16>,
      scf.yield %239, %237 : vector<8x32xf32>, vector<8x32xf32>
    }
    %c8_i32_127 = arith.constant 8 : i32
    %c1_i32_128 = arith.constant 1 : i32
    %c1_i32_129 = arith.constant 1 : i32
    %c0_i32_130 = arith.constant 0 : i32
    %c0_i32_131 = arith.constant 0 : i32
    %122 = tpu.memref_slice %arg21[%c1_i32_128, %c0_i32_130, %c0_i32_131] : memref<2x64x128xbf16, #tpu.memory_space<vmem>> -> memref<1x64x128xbf16, #tpu.memory_space<vmem>>
    %123 = tpu.memref_squeeze %122 : memref<1x64x128xbf16, #tpu.memory_space<vmem>> -> memref<64x128xbf16, #tpu.memory_space<vmem>>
    %124 = tpu.memref_slice %arg22[%c1_i32_129] : memref<2x!tpu.dma_semaphore, #tpu.memory_space<semaphore_mem>> -> memref<1x!tpu.dma_semaphore, #tpu.memory_space<semaphore_mem>>
    %125 = tpu.memref_squeeze %124 : memref<1x!tpu.dma_semaphore, #tpu.memory_space<semaphore_mem>> -> memref<!tpu.dma_semaphore, #tpu.memory_space<semaphore_mem>>
    tpu.wait_dma2 semaphore(%125 : memref<!tpu.dma_semaphore, #tpu.memory_space<semaphore_mem>>) src(%arg6 : memref<64x128xbf16, #tpu.memory_space<any>>) dst(%123 : memref<64x128xbf16, #tpu.memory_space<vmem>>)
    %c0_i32_132 = arith.constant 0 : i32
    %c0_i32_133 = arith.constant 0 : i32
    %c0_i32_134 = arith.constant 0 : i32
    %c0_i32_135 = arith.constant 0 : i32
    %126 = tpu.memref_slice %arg21[%c0_i32_132, %c0_i32_134, %c0_i32_135] : memref<2x64x128xbf16, #tpu.memory_space<vmem>> -> memref<1x64x128xbf16, #tpu.memory_space<vmem>>
    %127 = tpu.memref_squeeze %126 : memref<1x64x128xbf16, #tpu.memory_space<vmem>> -> memref<64x128xbf16, #tpu.memory_space<vmem>>
    %128 = tpu.memref_slice %arg22[%c0_i32_133] : memref<2x!tpu.dma_semaphore, #tpu.memory_space<semaphore_mem>> -> memref<1x!tpu.dma_semaphore, #tpu.memory_space<semaphore_mem>>
    %129 = tpu.memref_squeeze %128 : memref<1x!tpu.dma_semaphore, #tpu.memory_space<semaphore_mem>> -> memref<!tpu.dma_semaphore, #tpu.memory_space<semaphore_mem>>
    tpu.enqueue_dma source(%arg7 : memref<64x128xbf16, #tpu.memory_space<any>>) target(%127 : memref<64x128xbf16, #tpu.memory_space<vmem>>) target_semaphore(%129 : memref<!tpu.dma_semaphore, #tpu.memory_space<semaphore_mem>>)
    %c0_136 = arith.constant 0 : index
    %c0_137 = arith.constant 0 : index
    %130 = vector.load %arg13[%c0_136, %c0_137] : memref<1x128xf32, #tpu.memory_space<vmem>>, vector<1x128xf32>
    %cst_138 = arith.constant 0.000000e+00 : f32
    %131 = vector.broadcast %cst_138 : f32 to vector<8x32xf32>
    %cst_139 = arith.constant 0.000000e+00 : f32
    %132 = vector.broadcast %cst_139 : f32 to vector<8x32xf32>
    %c0_140 = arith.constant 0 : index
    %c0_141 = arith.constant 0 : index
    %c0_142 = arith.constant 0 : index
    %133 = vector.load %arg23[%c0_140, %c0_141, %c0_142] : memref<8x8x32xbf16, #tpu.memory_space<vmem>>, vector<8x8x32xbf16>
    %134 = vector.shape_cast %133 : vector<8x8x32xbf16> to vector<64x32xbf16>
    %c1_143 = arith.constant 1 : index
    %c0_144 = arith.constant 0 : index
    %c0_145 = arith.constant 0 : index
    %135 = vector.load %arg21[%c1_143, %c0_144, %c0_145] : memref<2x64x128xbf16, #tpu.memory_space<vmem>>, vector<1x32x128xbf16>
    %136 = vector.shape_cast %135 : vector<1x32x128xbf16> to vector<32x128xbf16>
    %cst_146 = arith.constant dense<0.000000e+00> : vector<64x128xf32>
    %137 = tpu.matmul %134, %136, %cst_146 {dimension_numbers = #tpu.dot_dimension_numbers<[1], [0], [0], [1], [0, 0, 1, 1], [], []>} : vector<64x32xbf16>, vector<32x128xbf16>, vector<64x128xf32> -> vector<64x128xf32>
    %138 = vector.broadcast %130 : vector<1x128xf32> to vector<64x128xf32>
    %139 = arith.addf %137, %138 : vector<64x128xf32>
    %140 = vector.shape_cast %139 : vector<64x128xf32> to vector<8x8x128xf32>
    %141 = arith.truncf %140 : vector<8x8x128xf32> to vector<8x8x128xbf16>
    %c0_147 = arith.constant 0 : index
    %c0_148 = arith.constant 0 : index
    %c0_149 = arith.constant 0 : index
    %142 = vector.load %arg24[%c0_147, %c0_148, %c0_149] : memref<8x8x128xbf16, #tpu.memory_space<vmem>>, vector<8x8x128xbf16>
    tpu.vector_store %arg24[%c0_147, %c0_148, %c0_149], %141 {strides = array<i32>} : memref<8x8x128xbf16, #tpu.memory_space<vmem>>, vector<8x8x128xbf16>,
    %c0_i32_150 = arith.constant 0 : i32
    %c8_i32_151 = arith.constant 8 : i32
    %143 = arith.addi %c0_i32_150, %c8_i32_151 : i32
    %c1_i32_152 = arith.constant 1 : i32
    %144:2 = scf.for %arg25 = %c0_i32_150 to %143 step %c1_i32_152 iter_args(%arg26 = %131, %arg27 = %132) -> (vector<8x32xf32>, vector<8x32xf32>)  : i32 {
      %c1_201 = arith.constant 1 : index
      %c32 = arith.constant 32 : index
      %c0_202 = arith.constant 0 : index
      %206 = vector.load %arg21[%c1_201, %c32, %c0_202] : memref<2x64x128xbf16, #tpu.memory_space<vmem>>, vector<1x32x128xbf16>
      %207 = vector.shape_cast %206 : vector<1x32x128xbf16> to vector<32x128xbf16>
      %208 = arith.index_cast %arg25 : i32 to index
      %c0_203 = arith.constant 0 : index
      %c0_204 = arith.constant 0 : index
      %209 = vector.load %arg24[%208, %c0_203, %c0_204] : memref<8x8x128xbf16, #tpu.memory_space<vmem>>, vector<1x8x128xbf16>
      %210 = vector.shape_cast %209 : vector<1x8x128xbf16> to vector<8x128xbf16>
      %211 = arith.extf %210 : vector<8x128xbf16> to vector<8x128xf32>
      %212 = arith.truncf %arg26 : vector<8x32xf32> to vector<8x32xbf16>
      %cst_205 = arith.constant dense<0.000000e+00> : vector<8x128xf32>
      %213 = tpu.matmul %212, %207, %cst_205 {dimension_numbers = #tpu.dot_dimension_numbers<[1], [0], [0], [1], [0, 0, 1, 1], [], []>} : vector<8x32xbf16>, vector<32x128xbf16>, vector<8x128xf32> -> vector<8x128xf32>
      %214 = arith.addf %211, %213 : vector<8x128xf32>
      %215 = vector.extract_strided_slice %214 {offsets = [0, 0], sizes = [8, 32], strides = [1, 1]} : vector<8x128xf32> to vector<8x32xf32>
      %216 = arith.negf %215 : vector<8x32xf32>
      %217 = math.exp %216 : vector<8x32xf32>
      %cst_206 = arith.constant 1.000000e+00 : f32
      %218 = vector.broadcast %cst_206 : f32 to vector<8x32xf32>
      %219 = arith.addf %218, %217 : vector<8x32xf32>
      %220 = arith.divf %218, %219 : vector<8x32xf32>
      %221 = vector.extract_strided_slice %214 {offsets = [0, 32], sizes = [8, 32], strides = [1, 1]} : vector<8x128xf32> to vector<8x32xf32>
      %222 = arith.negf %221 : vector<8x32xf32>
      %223 = math.exp %222 : vector<8x32xf32>
      %cst_207 = arith.constant 1.000000e+00 : f32
      %224 = vector.broadcast %cst_207 : f32 to vector<8x32xf32>
      %225 = arith.addf %224, %223 : vector<8x32xf32>
      %226 = arith.divf %224, %225 : vector<8x32xf32>
      %227 = vector.extract_strided_slice %214 {offsets = [0, 64], sizes = [8, 32], strides = [1, 1]} : vector<8x128xf32> to vector<8x32xf32>
      %228 = math.tanh %227 : vector<8x32xf32>
      %229 = vector.extract_strided_slice %214 {offsets = [0, 96], sizes = [8, 32], strides = [1, 1]} : vector<8x128xf32> to vector<8x32xf32>
      %230 = arith.negf %229 : vector<8x32xf32>
      %231 = math.exp %230 : vector<8x32xf32>
      %cst_208 = arith.constant 1.000000e+00 : f32
      %232 = vector.broadcast %cst_208 : f32 to vector<8x32xf32>
      %233 = arith.addf %232, %231 : vector<8x32xf32>
      %234 = arith.divf %232, %233 : vector<8x32xf32>
      %235 = arith.mulf %226, %arg27 : vector<8x32xf32>
      %236 = arith.mulf %220, %228 : vector<8x32xf32>
      %237 = arith.addf %235, %236 : vector<8x32xf32>
      %238 = math.tanh %237 : vector<8x32xf32>
      %239 = arith.mulf %234, %238 : vector<8x32xf32>
      %240 = arith.truncf %239 : vector<8x32xf32> to vector<8x32xbf16>
      %c0_i32_209 = arith.constant 0 : i32
      %241 = arith.addi %c0_i32_209, %arg25 : i32
      %242 = arith.index_cast %241 : i32 to index
      %c0_210 = arith.constant 0 : index
      %c0_211 = arith.constant 0 : index
      %243 = vector.load %arg23[%242, %c0_210, %c0_211] : memref<8x8x32xbf16, #tpu.memory_space<vmem>>, vector<1x8x32xbf16>
      %244 = vector.shape_cast %243 : vector<1x8x32xbf16> to vector<8x32xbf16>
      %245 = vector.shape_cast %240 : vector<8x32xbf16> to vector<1x8x32xbf16>
      tpu.vector_store %arg23[%242, %c0_210, %c0_211], %245 {strides = array<i32>} : memref<8x8x32xbf16, #tpu.memory_space<vmem>>, vector<1x8x32xbf16>,
      scf.yield %239, %237 : vector<8x32xf32>, vector<8x32xf32>
    }
    %c8_i32_153 = arith.constant 8 : i32
    %c0_i32_154 = arith.constant 0 : i32
    %c0_i32_155 = arith.constant 0 : i32
    %c0_i32_156 = arith.constant 0 : i32
    %c0_i32_157 = arith.constant 0 : i32
    %145 = tpu.memref_slice %arg21[%c0_i32_154, %c0_i32_156, %c0_i32_157] : memref<2x64x128xbf16, #tpu.memory_space<vmem>> -> memref<1x64x128xbf16, #tpu.memory_space<vmem>>
    %146 = tpu.memref_squeeze %145 : memref<1x64x128xbf16, #tpu.memory_space<vmem>> -> memref<64x128xbf16, #tpu.memory_space<vmem>>
    %147 = tpu.memref_slice %arg22[%c0_i32_155] : memref<2x!tpu.dma_semaphore, #tpu.memory_space<semaphore_mem>> -> memref<1x!tpu.dma_semaphore, #tpu.memory_space<semaphore_mem>>
    %148 = tpu.memref_squeeze %147 : memref<1x!tpu.dma_semaphore, #tpu.memory_space<semaphore_mem>> -> memref<!tpu.dma_semaphore, #tpu.memory_space<semaphore_mem>>
    tpu.wait_dma2 semaphore(%148 : memref<!tpu.dma_semaphore, #tpu.memory_space<semaphore_mem>>) src(%arg7 : memref<64x128xbf16, #tpu.memory_space<any>>) dst(%146 : memref<64x128xbf16, #tpu.memory_space<vmem>>)
    %c0_158 = arith.constant 0 : index
    %c0_159 = arith.constant 0 : index
    %149 = vector.load %arg14[%c0_158, %c0_159] : memref<1x128xf32, #tpu.memory_space<vmem>>, vector<1x128xf32>
    %cst_160 = arith.constant 0.000000e+00 : f32
    %150 = vector.broadcast %cst_160 : f32 to vector<8x32xf32>
    %cst_161 = arith.constant 0.000000e+00 : f32
    %151 = vector.broadcast %cst_161 : f32 to vector<8x32xf32>
    %c0_162 = arith.constant 0 : index
    %c0_163 = arith.constant 0 : index
    %c0_164 = arith.constant 0 : index
    %152 = vector.load %arg23[%c0_162, %c0_163, %c0_164] : memref<8x8x32xbf16, #tpu.memory_space<vmem>>, vector<8x8x32xbf16>
    %153 = vector.shape_cast %152 : vector<8x8x32xbf16> to vector<64x32xbf16>
    %c0_165 = arith.constant 0 : index
    %c0_166 = arith.constant 0 : index
    %c0_167 = arith.constant 0 : index
    %154 = vector.load %arg21[%c0_165, %c0_166, %c0_167] : memref<2x64x128xbf16, #tpu.memory_space<vmem>>, vector<1x32x128xbf16>
    %155 = vector.shape_cast %154 : vector<1x32x128xbf16> to vector<32x128xbf16>
    %cst_168 = arith.constant dense<0.000000e+00> : vector<64x128xf32>
    %156 = tpu.matmul %153, %155, %cst_168 {dimension_numbers = #tpu.dot_dimension_numbers<[1], [0], [0], [1], [0, 0, 1, 1], [], []>} : vector<64x32xbf16>, vector<32x128xbf16>, vector<64x128xf32> -> vector<64x128xf32>
    %157 = vector.broadcast %149 : vector<1x128xf32> to vector<64x128xf32>
    %158 = arith.addf %156, %157 : vector<64x128xf32>
    %159 = vector.shape_cast %158 : vector<64x128xf32> to vector<8x8x128xf32>
    %160 = arith.truncf %159 : vector<8x8x128xf32> to vector<8x8x128xbf16>
    %c0_169 = arith.constant 0 : index
    %c0_170 = arith.constant 0 : index
    %c0_171 = arith.constant 0 : index
    %161 = vector.load %arg24[%c0_169, %c0_170, %c0_171] : memref<8x8x128xbf16, #tpu.memory_space<vmem>>, vector<8x8x128xbf16>
    tpu.vector_store %arg24[%c0_169, %c0_170, %c0_171], %160 {strides = array<i32>} : memref<8x8x128xbf16, #tpu.memory_space<vmem>>, vector<8x8x128xbf16>,
    %c0_i32_172 = arith.constant 0 : i32
    %c8_i32_173 = arith.constant 8 : i32
    %162 = arith.addi %c0_i32_172, %c8_i32_173 : i32
    %c1_i32_174 = arith.constant 1 : i32
    %163:2 = scf.for %arg25 = %c0_i32_172 to %162 step %c1_i32_174 iter_args(%arg26 = %150, %arg27 = %151) -> (vector<8x32xf32>, vector<8x32xf32>)  : i32 {
      %c0_201 = arith.constant 0 : index
      %c32 = arith.constant 32 : index
      %c0_202 = arith.constant 0 : index
      %206 = vector.load %arg21[%c0_201, %c32, %c0_202] : memref<2x64x128xbf16, #tpu.memory_space<vmem>>, vector<1x32x128xbf16>
      %207 = vector.shape_cast %206 : vector<1x32x128xbf16> to vector<32x128xbf16>
      %208 = arith.index_cast %arg25 : i32 to index
      %c0_203 = arith.constant 0 : index
      %c0_204 = arith.constant 0 : index
      %209 = vector.load %arg24[%208, %c0_203, %c0_204] : memref<8x8x128xbf16, #tpu.memory_space<vmem>>, vector<1x8x128xbf16>
      %210 = vector.shape_cast %209 : vector<1x8x128xbf16> to vector<8x128xbf16>
      %211 = arith.extf %210 : vector<8x128xbf16> to vector<8x128xf32>
      %212 = arith.truncf %arg26 : vector<8x32xf32> to vector<8x32xbf16>
      %cst_205 = arith.constant dense<0.000000e+00> : vector<8x128xf32>
      %213 = tpu.matmul %212, %207, %cst_205 {dimension_numbers = #tpu.dot_dimension_numbers<[1], [0], [0], [1], [0, 0, 1, 1], [], []>} : vector<8x32xbf16>, vector<32x128xbf16>, vector<8x128xf32> -> vector<8x128xf32>
      %214 = arith.addf %211, %213 : vector<8x128xf32>
      %215 = vector.extract_strided_slice %214 {offsets = [0, 0], sizes = [8, 32], strides = [1, 1]} : vector<8x128xf32> to vector<8x32xf32>
      %216 = arith.negf %215 : vector<8x32xf32>
      %217 = math.exp %216 : vector<8x32xf32>
      %cst_206 = arith.constant 1.000000e+00 : f32
      %218 = vector.broadcast %cst_206 : f32 to vector<8x32xf32>
      %219 = arith.addf %218, %217 : vector<8x32xf32>
      %220 = arith.divf %218, %219 : vector<8x32xf32>
      %221 = vector.extract_strided_slice %214 {offsets = [0, 32], sizes = [8, 32], strides = [1, 1]} : vector<8x128xf32> to vector<8x32xf32>
      %222 = arith.negf %221 : vector<8x32xf32>
      %223 = math.exp %222 : vector<8x32xf32>
      %cst_207 = arith.constant 1.000000e+00 : f32
      %224 = vector.broadcast %cst_207 : f32 to vector<8x32xf32>
      %225 = arith.addf %224, %223 : vector<8x32xf32>
      %226 = arith.divf %224, %225 : vector<8x32xf32>
      %227 = vector.extract_strided_slice %214 {offsets = [0, 64], sizes = [8, 32], strides = [1, 1]} : vector<8x128xf32> to vector<8x32xf32>
      %228 = math.tanh %227 : vector<8x32xf32>
      %229 = vector.extract_strided_slice %214 {offsets = [0, 96], sizes = [8, 32], strides = [1, 1]} : vector<8x128xf32> to vector<8x32xf32>
      %230 = arith.negf %229 : vector<8x32xf32>
      %231 = math.exp %230 : vector<8x32xf32>
      %cst_208 = arith.constant 1.000000e+00 : f32
      %232 = vector.broadcast %cst_208 : f32 to vector<8x32xf32>
      %233 = arith.addf %232, %231 : vector<8x32xf32>
      %234 = arith.divf %232, %233 : vector<8x32xf32>
      %235 = arith.mulf %226, %arg27 : vector<8x32xf32>
      %236 = arith.mulf %220, %228 : vector<8x32xf32>
      %237 = arith.addf %235, %236 : vector<8x32xf32>
      %238 = math.tanh %237 : vector<8x32xf32>
      %239 = arith.mulf %234, %238 : vector<8x32xf32>
      scf.yield %239, %237 : vector<8x32xf32>, vector<8x32xf32>
    }
    %c8_i32_175 = arith.constant 8 : i32
    %c0_176 = arith.constant 0 : index
    %c0_177 = arith.constant 0 : index
    %c0_178 = arith.constant 0 : index
    %164 = vector.load %arg0[%c0_176, %c0_177, %c0_178] : memref<8x8x16xf32, #tpu.memory_space<vmem>>, vector<8x8x16xf32>
    %165 = vector.extract_strided_slice %164 {offsets = [7, 0, 0], sizes = [1, 8, 16], strides = [1, 1, 1]} : vector<8x8x16xf32> to vector<1x8x16xf32>
    %166 = vector.shape_cast %165 : vector<1x8x16xf32> to vector<8x16xf32>
    %cst_179 = arith.constant dense<0x7F800000> : vector<8x16xf32>
    %167 = vector.multi_reduction <minimumf>, %164, %cst_179 [0] : vector<8x8x16xf32> to vector<8x16xf32>
    %cst_180 = arith.constant dense<0xFF800000> : vector<8x16xf32>
    %168 = vector.multi_reduction <maximumf>, %164, %cst_180 [0] : vector<8x8x16xf32> to vector<8x16xf32>
    %cst_181 = arith.constant dense<0.000000e+00> : vector<8x16xf32>
    %169 = vector.multi_reduction <add>, %164, %cst_181 [0] : vector<8x8x16xf32> to vector<8x16xf32>
    %cst_182 = arith.constant 8.000000e+00 : f32
    %170 = vector.broadcast %cst_182 : f32 to vector<8x16xf32>
    %171 = arith.divf %169, %170 : vector<8x16xf32>
    %172 = vector.shape_cast %171 : vector<8x16xf32> to vector<1x8x16xf32>
    %173 = vector.broadcast %172 : vector<1x8x16xf32> to vector<8x8x16xf32>
    %174 = arith.subf %164, %173 : vector<8x8x16xf32>
    %175 = arith.mulf %174, %174 : vector<8x8x16xf32>
    %cst_183 = arith.constant dense<0.000000e+00> : vector<8x16xf32>
    %176 = vector.multi_reduction <add>, %175, %cst_183 [0] : vector<8x8x16xf32> to vector<8x16xf32>
    %cst_184 = arith.constant 8.000000e+00 : f32
    %177 = vector.broadcast %cst_184 : f32 to vector<8x16xf32>
    %178 = arith.divf %176, %177 : vector<8x16xf32>
    %179 = math.sqrt %178 : vector<8x16xf32>
    %180 = tpu.concatenate %166, %167, %168, %171, %179 in 1 : vector<8x16xf32>, vector<8x16xf32>, vector<8x16xf32>, vector<8x16xf32>, vector<8x16xf32> -> vector<8x80xf32>
    %181 = tpu.concatenate %27#0, %74#0, %163#0 in 1 : vector<8x32xf32>, vector<8x32xf32>, vector<8x32xf32> -> vector<8x96xf32>
    %182 = arith.negf %181 : vector<8x96xf32>
    %183 = math.exp %182 : vector<8x96xf32>
    %cst_185 = arith.constant 1.000000e+00 : f32
    %184 = vector.broadcast %cst_185 : f32 to vector<8x96xf32>
    %185 = arith.addf %184, %183 : vector<8x96xf32>
    %186 = arith.divf %184, %185 : vector<8x96xf32>
    %187 = arith.mulf %181, %186 : vector<8x96xf32>
    %188 = arith.truncf %180 : vector<8x80xf32> to vector<8x80xbf16>
    %c0_186 = arith.constant 0 : index
    %c0_187 = arith.constant 0 : index
    %189 = vector.load %arg15[%c0_186, %c0_187] : memref<80x32xbf16, #tpu.memory_space<vmem>>, vector<80x32xbf16>
    %cst_188 = arith.constant dense<0.000000e+00> : vector<8x32xf32>
    %190 = tpu.matmul %188, %189, %cst_188 {dimension_numbers = #tpu.dot_dimension_numbers<[1], [0], [0], [1], [0, 0, 1, 1], [], []>} : vector<8x80xbf16>, vector<80x32xbf16>, vector<8x32xf32> -> vector<8x32xf32>
    %191 = arith.truncf %187 : vector<8x96xf32> to vector<8x96xbf16>
    %c0_189 = arith.constant 0 : index
    %c0_190 = arith.constant 0 : index
    %192 = vector.load %arg16[%c0_189, %c0_190] : memref<96x32xbf16, #tpu.memory_space<vmem>>, vector<96x32xbf16>
    %cst_191 = arith.constant dense<0.000000e+00> : vector<8x32xf32>
    %193 = tpu.matmul %191, %192, %cst_191 {dimension_numbers = #tpu.dot_dimension_numbers<[1], [0], [0], [1], [0, 0, 1, 1], [], []>} : vector<8x96xbf16>, vector<96x32xbf16>, vector<8x32xf32> -> vector<8x32xf32>
    %194 = arith.addf %190, %193 : vector<8x32xf32>
    %c0_192 = arith.constant 0 : index
    %c0_193 = arith.constant 0 : index
    %195 = vector.load %arg17[%c0_192, %c0_193] : memref<1x32xf32, #tpu.memory_space<vmem>>, vector<1x32xf32>
    %196 = vector.broadcast %195 : vector<1x32xf32> to vector<8x32xf32>
    %197 = arith.addf %194, %196 : vector<8x32xf32>
    %198 = math.tanh %197 : vector<8x32xf32>
    %199 = arith.truncf %198 : vector<8x32xf32> to vector<8x32xbf16>
    %c0_194 = arith.constant 0 : index
    %c0_195 = arith.constant 0 : index
    %200 = vector.load %arg18[%c0_194, %c0_195] : memref<32x16xbf16, #tpu.memory_space<vmem>>, vector<32x16xbf16>
    %cst_196 = arith.constant dense<0.000000e+00> : vector<8x16xf32>
    %201 = tpu.matmul %199, %200, %cst_196 {dimension_numbers = #tpu.dot_dimension_numbers<[1], [0], [0], [1], [0, 0, 1, 1], [], []>} : vector<8x32xbf16>, vector<32x16xbf16>, vector<8x16xf32> -> vector<8x16xf32>
    %c0_197 = arith.constant 0 : index
    %c0_198 = arith.constant 0 : index
    %202 = vector.load %arg19[%c0_197, %c0_198] : memref<1x16xf32, #tpu.memory_space<vmem>>, vector<1x16xf32>
    %203 = vector.broadcast %202 : vector<1x16xf32> to vector<8x16xf32>
    %204 = arith.addf %201, %203 : vector<8x16xf32>
    %c0_199 = arith.constant 0 : index
    %c0_200 = arith.constant 0 : index
    %205 = vector.load %arg20[%c0_199, %c0_200] : memref<8x16xf32, #tpu.memory_space<vmem>>, vector<8x16xf32>
    tpu.vector_store %arg20[%c0_199, %c0_200], %204 {strides = array<i32>} : memref<8x16xf32, #tpu.memory_space<vmem>>, vector<8x16xf32>,
    return
  }
}

</mosaic_0001>

<llo_original>
// kernel: vid2fmri_forward.1
$region0: #{vid2fmri_forward.1}
  #allocation0 [shape = 'u32[]', space=smem, size = 0x4, offset = 0x4, fixed_abs, tag = 'smem constant byte address 0x4 - core index']
  #allocation1 [shape = 'u32[144,128]{1,0:T(1,128)}', space=vmem, size = 0x12000, scoped, tag = 'internal scratch']
  #allocation2 [shape = 'bf16[2,64,128]{2,1,0:T(16,128)(2,1)}', space=vmem, size = 0x8000, scoped, tag = 'scratch operand']
  #allocation3 [shape = 's32[2]{0}', space=sflag, size = 0x8, scoped, tag = 'scratch operand']
  #allocation4 [shape = 'bf16[8,8,32]{2,1,0:T(8,128)(2,1)}', space=vmem, size = 0x4000, scoped, tag = 'scratch operand']
  #allocation5 [shape = 'bf16[8,8,128]{2,1,0:T(8,128)(2,1)}', space=vmem, size = 0x4000, scoped, tag = 'scratch operand']
  #allocation10 [shape = 's32[]', space=sflag, size = 0x4, offset = 0, fixed_abs, tag = 'sflag constant byte address 0x0 - dummy sync flag']
  #allocation11 [shape = 's32[]', space=sflag, size = 0x4, offset = 0, fixed_abs, tag = 'sflag constant byte address 0x0 - dummy sync flag']
  #allocation12 [shape = 's32[]', space=sflag, size = 0x4, offset = 0, fixed_abs, tag = 'sflag constant byte address 0x0 - dummy sync flag']
  #allocation13 [shape = 's32[]', space=sflag, size = 0x4, offset = 0, fixed_abs, tag = 'sflag constant byte address 0x0 - dummy sync flag']
  #allocation14 [shape = 's32[]', space=sflag, size = 0x4, offset = 0, fixed_abs, tag = 'sflag constant byte address 0x0 - dummy sync flag']
  #allocation15 [shape = 's32[]', space=sflag, size = 0x4, offset = 0, fixed_abs, tag = 'sflag constant byte address 0x0 - dummy sync flag']
  #allocation16 [shape = 's32[]', space=sflag, size = 0x4, offset = 0, fixed_abs, tag = 'sflag constant byte address 0x0 - dummy sync flag']
  %s0 = inlined_call_operand.vmem [shape: f32[8,8,16], index: 0, kind: input, shape index: {}]
  %s1 = inlined_call_operand.vmem [shape: bf16[64,128], index: 1, kind: input, shape index: {}]
  %s2 = inlined_call_operand.vmem [shape: bf16[64,128], index: 2, kind: input, shape index: {}]
  %s3 = inlined_call_operand.vmem [shape: bf16[64,128], index: 3, kind: input, shape index: {}]
  %s4 = inlined_call_operand.vmem [shape: bf16[64,128], index: 4, kind: input, shape index: {}]
  %s5 = inlined_call_operand.vmem [shape: bf16[64,128], index: 5, kind: input, shape index: {}]
  %s6 = inlined_call_operand.vmem [shape: bf16[64,128], index: 6, kind: input, shape index: {}]
  %s7 = inlined_call_operand.vmem [shape: bf16[64,128], index: 7, kind: input, shape index: {}]
  %s8 = inlined_call_operand.vmem [shape: f32[1,128], index: 8, kind: input, shape index: {}]
  %s9 = inlined_call_operand.vmem [shape: f32[1,128], index: 9, kind: input, shape index: {}]
  %s10 = inlined_call_operand.vmem [shape: f32[1,128], index: 10, kind: input, shape index: {}]
  %s11 = inlined_call_operand.vmem [shape: f32[1,128], index: 11, kind: input, shape index: {}]
  %s12 = inlined_call_operand.vmem [shape: f32[1,128], index: 12, kind: input, shape index: {}]
  %s13 = inlined_call_operand.vmem [shape: f32[1,128], index: 13, kind: input, shape index: {}]
  %s14 = inlined_call_operand.vmem [shape: f32[1,128], index: 14, kind: input, shape index: {}]
  %s15 = inlined_call_operand.vmem [shape: bf16[80,32], index: 15, kind: input, shape index: {}]
  %s16 = inlined_call_operand.vmem [shape: bf16[96,32], index: 16, kind: input, shape index: {}]
  %s17 = inlined_call_operand.hbm [shape: f32[1,32], index: 17, kind: input, shape index: {}]
  %s18 = inlined_call_operand.vmem [shape: bf16[32,16], index: 18, kind: input, shape index: {}]
  %s19 = inlined_call_operand.hbm [shape: f32[1,16], index: 19, kind: input, shape index: {}]
  %s20 = inlined_call_operand.vmem [shape: f32[8,16], index: 20, kind: output, shape index: {}]
  %s21 = sld [smem:[#allocation0]]
  $region357: #{vid2fmri_forward.1} parent=0
    _
  %s23 = ssub.s32 1, %s21
  %s24 = scalar_select 0, %s23, %s21
  $region1: #{vid2fmri_forward.1} parent=0
    #allocation6 [shape = 'u8[512]{0}', space=vmem, size = 0x400, scoped, tag = 'input window, operand 17, single buffered']
    #allocation7 [shape = 's32[1]{0}', space=sflag, size = 0x4, scoped, tag = 'scoped memory for vid2fmri_forward.1']
    #allocation8 [shape = 'u8[512]{0}', space=vmem, size = 0x400, scoped, tag = 'input window, operand 19, single buffered']
    #allocation9 [shape = 's32[1]{0}', space=sflag, size = 0x4, scoped, tag = 'scoped memory for vid2fmri_forward.1']
    %25 = vsyncpa [#allocation7], 0
    %26 = vsyncpa [#allocation9], 0
    // Predicated region
    $region2: #{vid2fmri_forward.1} parent=1 // pred_check
      _
    $region3: #{vid2fmri_forward.1} parent=1 // pred_check_branch
      %28 = sbr.rel (0) target = $region5
    $region4: #{vid2fmri_forward.1} parent=1 // pred_region
      _
    $region5: #{vid2fmri_forward.1} parent=1 // pred_fallthru
      _
    // Predicated region
    $region6: #{vid2fmri_forward.1} parent=1 // pred_check
      _
    $region7: #{vid2fmri_forward.1} parent=1 // pred_check_branch
      %30 = sbr.rel (0) target = $region9
    $region8: #{vid2fmri_forward.1} parent=1 // pred_region
      _
    $region9: #{vid2fmri_forward.1} parent=1 // pred_fallthru
      _
    // Predicated region
    $region10: #{vid2fmri_forward.1} parent=1 // pred_check
      _
    $region11: #{vid2fmri_forward.1} parent=1 // pred_check_branch
      %32 = sbr.rel (0) target = $region13
    $region12: #{vid2fmri_forward.1} parent=1 // pred_region
      _
    $region13: #{vid2fmri_forward.1} parent=1 // pred_fallthru
      _
    // Predicated region
    $region14: #{vid2fmri_forward.1} parent=1 // pred_check
      _
    $region15: #{vid2fmri_forward.1} parent=1 // pred_check_branch
      %34 = sbr.rel (0) target = $region17
    $region16: #{vid2fmri_forward.1} parent=1 // pred_region
      _
    $region17: #{vid2fmri_forward.1} parent=1 // pred_fallthru
      _
    // Predicated region
    $region18: #{vid2fmri_forward.1} parent=1 // pred_check
      _
    $region19: #{vid2fmri_forward.1} parent=1 // pred_check_branch
      %36 = sbr.rel (0) target = $region21
    $region20: #{vid2fmri_forward.1} parent=1 // pred_region
      _
    $region21: #{vid2fmri_forward.1} parent=1 // pred_fallthru
      _
    // Predicated region
    $region22: #{vid2fmri_forward.1} parent=1 // pred_check
      _
    $region23: #{vid2fmri_forward.1} parent=1 // pred_check_branch
      %38 = sbr.rel (0) target = $region25
    $region24: #{vid2fmri_forward.1} parent=1 // pred_region
      _
    $region25: #{vid2fmri_forward.1} parent=1 // pred_fallthru
      _
    // Predicated region
    $region26: #{vid2fmri_forward.1} parent=1 // pred_check
      _
    $region27: #{vid2fmri_forward.1} parent=1 // pred_check_branch
      %40 = sbr.rel (0) target = $region29
    $region28: #{vid2fmri_forward.1} parent=1 // pred_region
      _
    $region29: #{vid2fmri_forward.1} parent=1 // pred_fallthru
      _
    // Predicated region
    $region30: #{vid2fmri_forward.1} parent=1 // pred_check
      _
    $region31: #{vid2fmri_forward.1} parent=1 // pred_check_branch
      %42 = sbr.rel (0) target = $region33
    $region32: #{vid2fmri_forward.1} parent=1 // pred_region
      _
    $region33: #{vid2fmri_forward.1} parent=1 // pred_fallthru
      _
    // Predicated region
    $region34: #{vid2fmri_forward.1} parent=1 // pred_check
      _
    $region35: #{vid2fmri_forward.1} parent=1 // pred_check_branch
      %44 = sbr.rel (0) target = $region37
    $region36: #{vid2fmri_forward.1} parent=1 // pred_region
      _
    $region37: #{vid2fmri_forward.1} parent=1 // pred_fallthru
      _
    // Predicated region
    $region38: #{vid2fmri_forward.1} parent=1 // pred_check
      _
    $region39: #{vid2fmri_forward.1} parent=1 // pred_check_branch
      %46 = sbr.rel (0) target = $region41
    $region40: #{vid2fmri_forward.1} parent=1 // pred_region
      _
    $region41: #{vid2fmri_forward.1} parent=1 // pred_fallthru
      _
    // Predicated region
    $region42: #{vid2fmri_forward.1} parent=1 // pred_check
      _
    $region43: #{vid2fmri_forward.1} parent=1 // pred_check_branch
      %48 = sbr.rel (0) target = $region45
    $region44: #{vid2fmri_forward.1} parent=1 // pred_region
      %s50 = ssub.s32 16, 16
      %51 = vsyncadd [#allocation7], %s50
      %s53 = sshll.u32 [#allocation6], 4
      %s54 = int_to_ptr.vmem [resolvable:$true] %s53
      %56 = dma.hbm_to_vmem [thread:$0]  %s17, 16, %s54, [#allocation7]
    $region45: #{vid2fmri_forward.1} parent=1 // pred_fallthru
      _
    // Predicated region
    $region46: #{vid2fmri_forward.1} parent=1 // pred_check
      _
    $region47: #{vid2fmri_forward.1} parent=1 // pred_check_branch
      %58 = sbr.rel (0) target = $region49
    $region48: #{vid2fmri_forward.1} parent=1 // pred_region
      _
    $region49: #{vid2fmri_forward.1} parent=1 // pred_fallthru
      _
    // Predicated region
    $region50: #{vid2fmri_forward.1} parent=1 // pred_check
      _
    $region51: #{vid2fmri_forward.1} parent=1 // pred_check_branch
      %60 = sbr.rel (0) target = $region53
    $region52: #{vid2fmri_forward.1} parent=1 // pred_region
      %s62 = ssub.s32 16, 16
      %63 = vsyncadd [#allocation9], %s62
      %s65 = sshll.u32 [#allocation8], 4
      %s66 = int_to_ptr.vmem [resolvable:$true] %s65
      %68 = dma.hbm_to_vmem [thread:$0]  %s19, 16, %s66, [#allocation9]
    $region53: #{vid2fmri_forward.1} parent=1 // pred_fallthru
      _
    // Predicated region
    $region54: #{vid2fmri_forward.1} parent=1 // pred_check
      _
    $region55: #{vid2fmri_forward.1} parent=1 // pred_check_branch
      %70 = sbr.rel (0) target = $region57
    $region56: #{vid2fmri_forward.1} parent=1 // pred_region
      %71 = dma.done [#allocation7], 16
    $region57: #{vid2fmri_forward.1} parent=1 // pred_fallthru
      _
    // Predicated region
    $region58: #{vid2fmri_forward.1} parent=1 // pred_check
      _
    $region59: #{vid2fmri_forward.1} parent=1 // pred_check_branch
      %73 = sbr.rel (0) target = $region61
    $region60: #{vid2fmri_forward.1} parent=1 // pred_region
      %74 = dma.done [#allocation9], 16
    $region61: #{vid2fmri_forward.1} parent=1 // pred_fallthru
      _
    %p77 = scmp.lt.u32.totalorder 32, 8
    %p78 = pneg %p77
    // Predicated region
    $region62: #{vid2fmri_forward.1} parent=1 // pred_check
      _
    $region63: #{vid2fmri_forward.1} parent=1 // pred_check_branch
      %80 = sbr.rel (%p77) target = $region65
    $region64: #{vid2fmri_forward.1} parent=1 // pred_region
      %s95 = sand.u32 32, 7
      %p96 = scmp.eq.s32.totalorder %s95, 0
      // Predicated region
      $region77: #{vid2fmri_forward.1} parent=64 // pred_check
        %p97 = pneg %p96
      $region78: #{vid2fmri_forward.1} parent=64 // pred_check_branch
        %99 = sbr.rel (%p97) target = $region80
      $region79: #{vid2fmri_forward.1} parent=64 // pred_region
        loop: start=0, step=1, limit=1
        $region81: #{vid2fmri_forward.1} parent=79 // loop_pre_header
          _
        $region82: #{vid2fmri_forward.1} parent=79 // loop_header
          %s101 = sphi 0, %s105
          %p102 = scmp.ge.s32.totalorder %s101, 1
          %s106 = sphi %s1, %s1
          %s107 = sphi [#allocation2], [#allocation2]
        $region83: #{vid2fmri_forward.1} parent=79 // loop_header_branch
          %104 = sbr.rel (%p102) target = $region87
        $region84: #{vid2fmri_forward.1} parent=79 // loop_body
          %v108 = vld [vmem:[%s106] sm:$0xff]
          %109 = vst [vmem:[%s107] sm:$0xff] %v108
          %v110 = vld [vmem:[%s106 + $0x8] sm:$0xff]
          %111 = vst [vmem:[%s107 + $0x8] sm:$0xff] %v110
          %v112 = vld [vmem:[%s106 + $0x10] sm:$0xff]
          %113 = vst [vmem:[%s107 + $0x10] sm:$0xff] %v112
          %v114 = vld [vmem:[%s106 + $0x18] sm:$0xff]
          %115 = vst [vmem:[%s107 + $0x18] sm:$0xff] %v114
        $region85: #{vid2fmri_forward.1} parent=79 // loop_footer
          %s105 = sadd.s32 1, %s101
        $region86: #{vid2fmri_forward.1} parent=79 // loop_footer_branch
          %100 = sbr.rel target = $region82
        $region87: #{vid2fmri_forward.1} parent=79 // loop_exit
          _
      $region80: #{vid2fmri_forward.1} parent=64 // pred_fallthru
        _
      %p116 = pneg %p96
      // Predicated region
      $region88: #{vid2fmri_forward.1} parent=64 // pred_check
        _
      $region89: #{vid2fmri_forward.1} parent=64 // pred_check_branch
        %118 = sbr.rel (%p96) target = $region91
      $region90: #{vid2fmri_forward.1} parent=64 // pred_region
        %s119 = sand.u32 32, 7
      $region91: #{vid2fmri_forward.1} parent=64 // pred_fallthru
        _
    $region65: #{vid2fmri_forward.1} parent=1 // pred_fallthru
      _
    // Predicated region
    $region66: #{vid2fmri_forward.1} parent=1 // pred_check
      %p81 = pneg %p77
    $region67: #{vid2fmri_forward.1} parent=1 // pred_check_branch
      %83 = sbr.rel (%p81) target = $region69
    $region68: #{vid2fmri_forward.1} parent=1 // pred_region
      %s84 = sshllo.u32 0, 32
      loop: start=0, step=1, limit=1
      $region70: #{vid2fmri_forward.1} parent=68 // loop_pre_header
        _
      $region71: #{vid2fmri_forward.1} parent=68 // loop_header
        %s86 = sphi 0, %s90
        %p87 = scmp.ge.s32.totalorder %s86, 1
        %s91 = sphi %s1, %s1
        %s92 = sphi [#allocation2], [#allocation2]
      $region72: #{vid2fmri_forward.1} parent=68 // loop_header_branch
        %89 = sbr.rel (%p87) target = $region76
      $region73: #{vid2fmri_forward.1} parent=68 // loop_body
        %v93 = vld [vmem:[%s91] sm:%s84]
        %94 = vst [vmem:[%s92] sm:%s84] %v93
      $region74: #{vid2fmri_forward.1} parent=68 // loop_footer
        %s90 = sadd.s32 1, %s86
      $region75: #{vid2fmri_forward.1} parent=68 // loop_footer_branch
        %85 = sbr.rel target = $region71
      $region76: #{vid2fmri_forward.1} parent=68 // loop_exit
        _
    $region69: #{vid2fmri_forward.1} parent=1 // pred_fallthru
      _
    // Predicated region
    $region92: #{vid2fmri_forward.1} parent=1 // pred_check
      _
    $region93: #{vid2fmri_forward.1} parent=1 // pred_check_branch
      %122 = sbr.rel (0) target = $region95
    $region94: #{vid2fmri_forward.1} parent=1 // pred_region
      %123 = vsyncadd [#allocation3], 512
    $region95: #{vid2fmri_forward.1} parent=1 // pred_fallthru
      _
    %s124 = smul.u32 4, 8
    %s125 = smul.u32 %s124, 1
    %s126 = sshll.u32 %s125, 4
    %127 = dma.done [#allocation3], %s126
    %s128 = scalar_lea.vmem [#allocation2], 32
    %s129 = scalar_lea.sflag [#allocation3], 1
    %p131 = scmp.lt.u32.totalorder 32, 8
    %p132 = pneg %p131
    // Predicated region
    $region96: #{vid2fmri_forward.1} parent=1 // pred_check
      _
    $region97: #{vid2fmri_forward.1} parent=1 // pred_check_branch
      %134 = sbr.rel (%p131) target = $region99
    $region98: #{vid2fmri_forward.1} parent=1 // pred_region
      %s149 = sand.u32 32, 7
      %p150 = scmp.eq.s32.totalorder %s149, 0
      // Predicated region
      $region111: #{vid2fmri_forward.1} parent=98 // pred_check
        %p151 = pneg %p150
      $region112: #{vid2fmri_forward.1} parent=98 // pred_check_branch
        %153 = sbr.rel (%p151) target = $region114
      $region113: #{vid2fmri_forward.1} parent=98 // pred_region
        loop: start=0, step=1, limit=1
        $region115: #{vid2fmri_forward.1} parent=113 // loop_pre_header
          _
        $region116: #{vid2fmri_forward.1} parent=113 // loop_header
          %s155 = sphi 0, %s159
          %p156 = scmp.ge.s32.totalorder %s155, 1
          %s160 = sphi %s2, %s2
          %s161 = sphi %s128, %s128
        $region117: #{vid2fmri_forward.1} parent=113 // loop_header_branch
          %158 = sbr.rel (%p156) target = $region121
        $region118: #{vid2fmri_forward.1} parent=113 // loop_body
          %v162 = vld [vmem:[%s160] sm:$0xff]
          %163 = vst [vmem:[%s161] sm:$0xff] %v162
          %v164 = vld [vmem:[%s160 + $0x8] sm:$0xff]
          %165 = vst [vmem:[%s161 + $0x8] sm:$0xff] %v164
          %v166 = vld [vmem:[%s160 + $0x10] sm:$0xff]
          %167 = vst [vmem:[%s161 + $0x10] sm:$0xff] %v166
          %v168 = vld [vmem:[%s160 + $0x18] sm:$0xff]
          %169 = vst [vmem:[%s161 + $0x18] sm:$0xff] %v168
        $region119: #{vid2fmri_forward.1} parent=113 // loop_footer
          %s159 = sadd.s32 1, %s155
        $region120: #{vid2fmri_forward.1} parent=113 // loop_footer_branch
          %154 = sbr.rel target = $region116
        $region121: #{vid2fmri_forward.1} parent=113 // loop_exit
          _
      $region114: #{vid2fmri_forward.1} parent=98 // pred_fallthru
        _
      %p170 = pneg %p150
      // Predicated region
      $region122: #{vid2fmri_forward.1} parent=98 // pred_check
        _
      $region123: #{vid2fmri_forward.1} parent=98 // pred_check_branch
        %172 = sbr.rel (%p150) target = $region125
      $region124: #{vid2fmri_forward.1} parent=98 // pred_region
        %s173 = sand.u32 32, 7
      $region125: #{vid2fmri_forward.1} parent=98 // pred_fallthru
        _
    $region99: #{vid2fmri_forward.1} parent=1 // pred_fallthru
      _
    // Predicated region
    $region100: #{vid2fmri_forward.1} parent=1 // pred_check
      %p135 = pneg %p131
    $region101: #{vid2fmri_forward.1} parent=1 // pred_check_branch
      %137 = sbr.rel (%p135) target = $region103
    $region102: #{vid2fmri_forward.1} parent=1 // pred_region
      %s138 = sshllo.u32 0, 32
      loop: start=0, step=1, limit=1
      $region104: #{vid2fmri_forward.1} parent=102 // loop_pre_header
        _
      $region105: #{vid2fmri_forward.1} parent=102 // loop_header
        %s140 = sphi 0, %s144
        %p141 = scmp.ge.s32.totalorder %s140, 1
        %s145 = sphi %s2, %s2
        %s146 = sphi %s128, %s128
      $region106: #{vid2fmri_forward.1} parent=102 // loop_header_branch
        %143 = sbr.rel (%p141) target = $region110
      $region107: #{vid2fmri_forward.1} parent=102 // loop_body
        %v147 = vld [vmem:[%s145] sm:%s138]
        %148 = vst [vmem:[%s146] sm:%s138] %v147
      $region108: #{vid2fmri_forward.1} parent=102 // loop_footer
        %s144 = sadd.s32 1, %s140
      $region109: #{vid2fmri_forward.1} parent=102 // loop_footer_branch
        %139 = sbr.rel target = $region105
      $region110: #{vid2fmri_forward.1} parent=102 // loop_exit
        _
    $region103: #{vid2fmri_forward.1} parent=1 // pred_fallthru
      _
    // Predicated region
    $region126: #{vid2fmri_forward.1} parent=1 // pred_check
      _
    $region127: #{vid2fmri_forward.1} parent=1 // pred_check_branch
      %176 = sbr.rel (0) target = $region129
    $region128: #{vid2fmri_forward.1} parent=1 // pred_region
      %177 = vsyncadd %s129, 512
    $region129: #{vid2fmri_forward.1} parent=1 // pred_fallthru
      _
    %v178 = vld [vmem:[%s8] sm:$0x1]
    %v179 = vld [vmem:[%s0] sm:$0xff]
    %v180 = vld [vmem:[%s0 + $0x8] sm:$0xff]
    %v181 = vld [vmem:[%s0 + $0x10] sm:$0xff]
    %v182 = vld [vmem:[%s0 + $0x18] sm:$0xff]
    %v183 = vld [vmem:[%s0 + $0x20] sm:$0xff]
    %v184 = vld [vmem:[%s0 + $0x28] sm:$0xff]
    %v185 = vld [vmem:[%s0 + $0x30] sm:$0xff]
    %v186 = vld [vmem:[%s0 + $0x38] sm:$0xff]
    %v187 = vpack.c.bf16 %v180, %v179
    %v188 = vpack.c.bf16 %v182, %v181
    %v189 = vpack.c.bf16 %v184, %v183
    %v190 = vpack.c.bf16 %v186, %v185
    %v191 = vld [vmem:[#allocation2] sm:$0xff]
    %v193 = vlaneseq
    %v194 = vshrl.u32 %v193, 7
    %v195 = vsub.s32 0, %v194
    %v196 = vrot.slane %v178, %v195
    %vm198 = vcmask 130048
    %v200 = vsel %vm198, %v187, 0
    %v203 = vsel %vm198, %v188, 0
    %v206 = vsel %vm198, %v189, 0
    %v209 = vsel %vm198, %v190, 0
    %211 = vmatprep.subr.bf16.mxu0 0
    %212 = vmatpush1.bf16.msra.mxu0 %v191
    %213 = vmatprep.subr.bf16.mxu0 0
    %214 = vmatpush1.bf16.msra.mxu0 0
    %215 = vmatprep.subr.bf16.mxu0 0
    %216 = vmatpush1.bf16.msra.mxu0 0
    %217 = vmatprep.subr.bf16.mxu0 0
    %218 = vmatpush1.bf16.msra.mxu0 0
    %219 = vmatprep.subr.bf16.mxu0 0
    %220 = vmatpush1.bf16.msra.mxu0 0
    %221 = vmatprep.subr.bf16.mxu0 0
    %222 = vmatpush1.bf16.msra.mxu0 0
    %223 = vmatprep.subr.bf16.mxu0 0
    %224 = vmatpush1.bf16.msra.mxu0 0
    %225 = vmatprep.subr.bf16.mxu0 0
    %226 = vmatpush1.bf16.msra.mxu0 0
    %227 = vmatprep.subr.bf16.mxu0 0
    %228 = vmatpush1.bf16.msra.mxu0 0
    %229 = vmatprep.subr.bf16.mxu0 0
    %230 = vmatpush1.bf16.msra.mxu0 0
    %231 = vmatprep.subr.bf16.mxu0 0
    %232 = vmatpush1.bf16.msra.mxu0 0
    %233 = vmatprep.subr.bf16.mxu0 0
    %234 = vmatpush1.bf16.msra.mxu0 0
    %235 = vmatprep.subr.bf16.mxu0 0
    %236 = vmatpush1.bf16.msra.mxu0 0
    %237 = vmatprep.subr.bf16.mxu0 0
    %238 = vmatpush1.bf16.msra.mxu0 0
    %239 = vmatprep.subr.bf16.mxu0 0
    %240 = vmatpush1.bf16.msra.mxu0 0
    %241 = vmatprep.subr.bf16.mxu0 0
    %242 = vmatpush1.bf16.msra.mxu0 0
    %243 = vmatprep.mubr.bf16.mxu0 0
    %244 = vmatmul.mubr.bf16.gmra.mrb[0].mxu0 %v200
    %v245 = vpop.f32.mrb[0].mxu0
    %v246 = vadd.f32 %v196, %v245
    %v247 = vpop.f32.mrb[0].mxu0
    %v248 = vpop.f32.mrb[0].mxu0
    %v249 = vadd.f32 %v196, %v248
    %v250 = vpop.f32.mrb[0].mxu0
    %251 = vmatprep.mubr.bf16.mxu0 0
    %252 = vmatmul.mubr.bf16.gmra.mrb[0].mxu0 %v203
    %v253 = vpop.f32.mrb[0].mxu0
    %v254 = vadd.f32 %v196, %v253
    %v255 = vpop.f32.mrb[0].mxu0
    %v256 = vpop.f32.mrb[0].mxu0
    %v257 = vadd.f32 %v196, %v256
    %v258 = vpop.f32.mrb[0].mxu0
    %259 = vmatprep.mubr.bf16.mxu0 0
    %260 = vmatmul.mubr.bf16.gmra.mrb[0].mxu0 %v206
    %v261 = vpop.f32.mrb[0].mxu0
    %v262 = vadd.f32 %v196, %v261
    %v263 = vpop.f32.mrb[0].mxu0
    %v264 = vpop.f32.mrb[0].mxu0
    %v265 = vadd.f32 %v196, %v264
    %v266 = vpop.f32.mrb[0].mxu0
    %267 = vmatprep.mubr.bf16.mxu0 0
    %268 = vmatmul.mubr.bf16.gmra.mrb[0].mxu0 %v209
    %v269 = vpop.f32.mrb[0].mxu0
    %v270 = vadd.f32 %v196, %v269
    %v271 = vpop.f32.mrb[0].mxu0
    %v272 = vpop.f32.mrb[0].mxu0
    %v273 = vadd.f32 %v196, %v272
    %v274 = vpop.f32.mrb[0].mxu0
    %275 = vdwg.mxu0
    %v276 = vpack.c.bf16 %v246, %v246
    %v277 = vpack.c.bf16 %v249, %v249
    %v278 = vpack.c.bf16 %v254, %v254
    %v279 = vpack.c.bf16 %v257, %v257
    %v280 = vpack.c.bf16 %v262, %v262
    %v281 = vpack.c.bf16 %v265, %v265
    %v282 = vpack.c.bf16 %v270, %v270
    %v283 = vpack.c.bf16 %v273, %v273
    %284 = vst [vmem:[#allocation5] sm:$0xf] %v276
    %285 = vst [vmem:[#allocation5 + $0x4] sm:$0xf] %v277
    %286 = vst [vmem:[#allocation5 + $0x8] sm:$0xf] %v278
    %287 = vst [vmem:[#allocation5 + $0xc] sm:$0xf] %v279
    %288 = vst [vmem:[#allocation5 + $0x10] sm:$0xf] %v280
    %289 = vst [vmem:[#allocation5 + $0x14] sm:$0xf] %v281
    %290 = vst [vmem:[#allocation5 + $0x18] sm:$0xf] %v282
    %291 = vst [vmem:[#allocation5 + $0x1c] sm:$0xf] %v283
    loop: start=0, step=1, limit=8
    $region130: #{vid2fmri_forward.1} parent=1 // loop_pre_header
      _
    $region131: #{vid2fmri_forward.1} parent=1 // loop_header
      %s293 = sphi 0, %s297
      %p294 = scmp.ge.s32.totalorder %s293, 8
      %v298 = vphi 0.0, %v378
      %v299 = vphi 0.0, %v372
    $region132: #{vid2fmri_forward.1} parent=1 // loop_header_branch
      %296 = sbr.rel (%p294) target = $region136
    $region133: #{vid2fmri_forward.1} parent=1 // loop_body
      %v300 = vld [vmem:[#allocation2 + $0x10] sm:$0xff]
      %v301 = vld [vmem:[#allocation2 + $0x18] sm:$0xff]
      %s302 = smul.addr %s293, 4
      %s303 = scalar_lea.vmem [#allocation5], %s302
      %v304 = vld [vmem:[%s303] sm:$0xf]
      %v305 = vunpack.c.l.bf16 %v304
      %v306 = vpack.c.bf16 %v298, %v298
      %308 = vrot.lane.b32.xlu0 %v306, 32
      %v309 = vpop.permute.xlu0 %308
      %vm310 = vcmask 261120
      %v312 = vsel %vm310, %v309, 0
      %314 = vmatprep.subr.bf16.mxu0 0
      %315 = vmatpush1.bf16.msra.mxu0 %v300
      %316 = vmatprep.subr.bf16.mxu0 0
      %317 = vmatpush1.bf16.msra.mxu0 %v301
      %318 = vmatprep.subr.bf16.mxu0 0
      %319 = vmatpush1.bf16.msra.mxu0 0
      %320 = vmatprep.subr.bf16.mxu0 0
      %321 = vmatpush1.bf16.msra.mxu0 0
      %322 = vmatprep.subr.bf16.mxu0 0
      %323 = vmatpush1.bf16.msra.mxu0 0
      %324 = vmatprep.subr.bf16.mxu0 0
      %325 = vmatpush1.bf16.msra.mxu0 0
      %326 = vmatprep.subr.bf16.mxu0 0
      %327 = vmatpush1.bf16.msra.mxu0 0
      %328 = vmatprep.subr.bf16.mxu0 0
      %329 = vmatpush1.bf16.msra.mxu0 0
      %330 = vmatprep.subr.bf16.mxu0 0
      %331 = vmatpush1.bf16.msra.mxu0 0
      %332 = vmatprep.subr.bf16.mxu0 0
      %333 = vmatpush1.bf16.msra.mxu0 0
      %334 = vmatprep.subr.bf16.mxu0 0
      %335 = vmatpush1.bf16.msra.mxu0 0
      %336 = vmatprep.subr.bf16.mxu0 0
      %337 = vmatpush1.bf16.msra.mxu0 0
      %338 = vmatprep.subr.bf16.mxu0 0
      %339 = vmatpush1.bf16.msra.mxu0 0
      %340 = vmatprep.subr.bf16.mxu0 0
      %341 = vmatpush1.bf16.msra.mxu0 0
      %342 = vmatprep.subr.bf16.mxu0 0
      %343 = vmatpush1.bf16.msra.mxu0 0
      %344 = vmatprep.subr.bf16.mxu0 0
      %345 = vmatpush1.bf16.msra.mxu0 0
      %346 = vmatprep.mubr.bf16.mxu0 0
      %347 = vmatmul.mubr.bf16.gmra.mrb[0].mxu0 %v312
      %v348 = vpop.f32.mrb[0].mxu0
      %v349 = vadd.f32 0.0, %v348
      %v350 = vpop.f32.mrb[0].mxu0
      %v351 = vpop.f32.mrb[0].mxu0
      %v352 = vpop.f32.mrb[0].mxu0
      %353 = vdwg.mxu0
      %v354 = vadd.f32 %v305, %v349
      %v355 = vxor.u32 %v354, 2147483648
      %v356 = vmul.f32 %v355, 1.442695
      %v357 = vpow.pop %v356
      %v358 = vadd.f32 %v357, 1.0
      %v359 = vrcp.pop %v358
      %v360 = vmul.f32 1.0, %v359
      %v361 = vtanh.pop %v354
      %v362 = vmul.f32 %v360, %v299
      %364 = vrot.lane.b32.xlu0 %v361, 64
      %v365 = vpop.permute.xlu0 %364
      %v367 = vmul.f32 %v360, %v365
      %369 = vrot.lane.b32.xlu0 %v367, 32
      %v370 = vpop.permute.xlu0 %369
      %v372 = vadd.f32 %v362, %v370
      %v373 = vtanh.pop %v372
      %375 = vrot.lane.b32.xlu0 %v373, 64
      %v376 = vpop.permute.xlu0 %375
      %v378 = vmul.f32 %v360, %v376
    $region134: #{vid2fmri_forward.1} parent=1 // loop_footer
      %s297 = sadd.s32 1, %s293
    $region135: #{vid2fmri_forward.1} parent=1 // loop_footer_branch
      %292 = sbr.rel target = $region131
    $region136: #{vid2fmri_forward.1} parent=1 // loop_exit
      _
    %s379 = sshll.u32 %s125, 4
    %380 = dma.done %s129, %s379
    %p382 = scmp.lt.u32.totalorder 32, 8
    %p383 = pneg %p382
    // Predicated region
    $region137: #{vid2fmri_forward.1} parent=1 // pred_check
      _
    $region138: #{vid2fmri_forward.1} parent=1 // pred_check_branch
      %385 = sbr.rel (%p382) target = $region140
    $region139: #{vid2fmri_forward.1} parent=1 // pred_region
      %s400 = sand.u32 32, 7
      %p401 = scmp.eq.s32.totalorder %s400, 0
      // Predicated region
      $region152: #{vid2fmri_forward.1} parent=139 // pred_check
        %p402 = pneg %p401
      $region153: #{vid2fmri_forward.1} parent=139 // pred_check_branch
        %404 = sbr.rel (%p402) target = $region155
      $region154: #{vid2fmri_forward.1} parent=139 // pred_region
        loop: start=0, step=1, limit=1
        $region156: #{vid2fmri_forward.1} parent=154 // loop_pre_header
          _
        $region157: #{vid2fmri_forward.1} parent=154 // loop_header
          %s406 = sphi 0, %s410
          %p407 = scmp.ge.s32.totalorder %s406, 1
          %s411 = sphi %s3, %s3
          %s412 = sphi [#allocation2], [#allocation2]
        $region158: #{vid2fmri_forward.1} parent=154 // loop_header_branch
          %409 = sbr.rel (%p407) target = $region162
        $region159: #{vid2fmri_forward.1} parent=154 // loop_body
          %v413 = vld [vmem:[%s411] sm:$0xff]
          %414 = vst [vmem:[%s412] sm:$0xff] %v413
          %v415 = vld [vmem:[%s411 + $0x8] sm:$0xff]
          %416 = vst [vmem:[%s412 + $0x8] sm:$0xff] %v415
          %v417 = vld [vmem:[%s411 + $0x10] sm:$0xff]
          %418 = vst [vmem:[%s412 + $0x10] sm:$0xff] %v417
          %v419 = vld [vmem:[%s411 + $0x18] sm:$0xff]
          %420 = vst [vmem:[%s412 + $0x18] sm:$0xff] %v419
        $region160: #{vid2fmri_forward.1} parent=154 // loop_footer
          %s410 = sadd.s32 1, %s406
        $region161: #{vid2fmri_forward.1} parent=154 // loop_footer_branch
          %405 = sbr.rel target = $region157
        $region162: #{vid2fmri_forward.1} parent=154 // loop_exit
          _
      $region155: #{vid2fmri_forward.1} parent=139 // pred_fallthru
        _
      %p421 = pneg %p401
      // Predicated region
      $region163: #{vid2fmri_forward.1} parent=139 // pred_check
        _
      $region164: #{vid2fmri_forward.1} parent=139 // pred_check_branch
        %423 = sbr.rel (%p401) target = $region166
      $region165: #{vid2fmri_forward.1} parent=139 // pred_region
        %s424 = sand.u32 32, 7
      $region166: #{vid2fmri_forward.1} parent=139 // pred_fallthru
        _
    $region140: #{vid2fmri_forward.1} parent=1 // pred_fallthru
      _
    // Predicated region
    $region141: #{vid2fmri_forward.1} parent=1 // pred_check
      %p386 = pneg %p382
    $region142: #{vid2fmri_forward.1} parent=1 // pred_check_branch
      %388 = sbr.rel (%p386) target = $region144
    $region143: #{vid2fmri_forward.1} parent=1 // pred_region
      %s389 = sshllo.u32 0, 32
      loop: start=0, step=1, limit=1
      $region145: #{vid2fmri_forward.1} parent=143 // loop_pre_header
        _
      $region146: #{vid2fmri_forward.1} parent=143 // loop_header
        %s391 = sphi 0, %s395
        %p392 = scmp.ge.s32.totalorder %s391, 1
        %s396 = sphi %s3, %s3
        %s397 = sphi [#allocation2], [#allocation2]
      $region147: #{vid2fmri_forward.1} parent=143 // loop_header_branch
        %394 = sbr.rel (%p392) target = $region151
      $region148: #{vid2fmri_forward.1} parent=143 // loop_body
        %v398 = vld [vmem:[%s396] sm:%s389]
        %399 = vst [vmem:[%s397] sm:%s389] %v398
      $region149: #{vid2fmri_forward.1} parent=143 // loop_footer
        %s395 = sadd.s32 1, %s391
      $region150: #{vid2fmri_forward.1} parent=143 // loop_footer_branch
        %390 = sbr.rel target = $region146
      $region151: #{vid2fmri_forward.1} parent=143 // loop_exit
        _
    $region144: #{vid2fmri_forward.1} parent=1 // pred_fallthru
      _
    // Predicated region
    $region167: #{vid2fmri_forward.1} parent=1 // pred_check
      _
    $region168: #{vid2fmri_forward.1} parent=1 // pred_check_branch
      %427 = sbr.rel (0) target = $region170
    $region169: #{vid2fmri_forward.1} parent=1 // pred_region
      %428 = vsyncadd [#allocation3], 512
    $region170: #{vid2fmri_forward.1} parent=1 // pred_fallthru
      _
    %v429 = vld [vmem:[%s9] sm:$0x1]
    %v430 = vld [vmem:[%s0] sm:$0xff]
    %v431 = vld [vmem:[%s0 + $0x8] sm:$0xff]
    %v432 = vld [vmem:[%s0 + $0x10] sm:$0xff]
    %v433 = vld [vmem:[%s0 + $0x18] sm:$0xff]
    %v434 = vld [vmem:[%s0 + $0x20] sm:$0xff]
    %v435 = vld [vmem:[%s0 + $0x28] sm:$0xff]
    %v436 = vld [vmem:[%s0 + $0x30] sm:$0xff]
    %v437 = vld [vmem:[%s0 + $0x38] sm:$0xff]
    %v438 = vpack.c.bf16 %v431, %v430
    %v439 = vpack.c.bf16 %v433, %v432
    %v440 = vpack.c.bf16 %v435, %v434
    %v441 = vpack.c.bf16 %v437, %v436
    %v442 = vld [vmem:[%s128] sm:$0xff]
    %v444 = vlaneseq
    %v445 = vshrl.u32 %v444, 7
    %v446 = vsub.s32 0, %v445
    %v447 = vrot.slane %v429, %v446
    %v450 = vsel %vm198, %v438, 0
    %v453 = vsel %vm198, %v439, 0
    %v456 = vsel %vm198, %v440, 0
    %v459 = vsel %vm198, %v441, 0
    %461 = vmatprep.subr.bf16.mxu0 0
    %462 = vmatpush1.bf16.msra.mxu0 %v442
    %463 = vmatprep.subr.bf16.mxu0 0
    %464 = vmatpush1.bf16.msra.mxu0 0
    %465 = vmatprep.subr.bf16.mxu0 0
    %466 = vmatpush1.bf16.msra.mxu0 0
    %467 = vmatprep.subr.bf16.mxu0 0
    %468 = vmatpush1.bf16.msra.mxu0 0
    %469 = vmatprep.subr.bf16.mxu0 0
    %470 = vmatpush1.bf16.msra.mxu0 0
    %471 = vmatprep.subr.bf16.mxu0 0
    %472 = vmatpush1.bf16.msra.mxu0 0
    %473 = vmatprep.subr.bf16.mxu0 0
    %474 = vmatpush1.bf16.msra.mxu0 0
    %475 = vmatprep.subr.bf16.mxu0 0
    %476 = vmatpush1.bf16.msra.mxu0 0
    %477 = vmatprep.subr.bf16.mxu0 0
    %478 = vmatpush1.bf16.msra.mxu0 0
    %479 = vmatprep.subr.bf16.mxu0 0
    %480 = vmatpush1.bf16.msra.mxu0 0
    %481 = vmatprep.subr.bf16.mxu0 0
    %482 = vmatpush1.bf16.msra.mxu0 0
    %483 = vmatprep.subr.bf16.mxu0 0
    %484 = vmatpush1.bf16.msra.mxu0 0
    %485 = vmatprep.subr.bf16.mxu0 0
    %486 = vmatpush1.bf16.msra.mxu0 0
    %487 = vmatprep.subr.bf16.mxu0 0
    %488 = vmatpush1.bf16.msra.mxu0 0
    %489 = vmatprep.subr.bf16.mxu0 0
    %490 = vmatpush1.bf16.msra.mxu0 0
    %491 = vmatprep.subr.bf16.mxu0 0
    %492 = vmatpush1.bf16.msra.mxu0 0
    %493 = vmatprep.mubr.bf16.mxu0 0
    %494 = vmatmul.mubr.bf16.gmra.mrb[0].mxu0 %v450
    %v495 = vpop.f32.mrb[0].mxu0
    %v496 = vadd.f32 %v447, %v495
    %v497 = vpop.f32.mrb[0].mxu0
    %v498 = vpop.f32.mrb[0].mxu0
    %v499 = vadd.f32 %v447, %v498
    %v500 = vpop.f32.mrb[0].mxu0
    %501 = vmatprep.mubr.bf16.mxu0 0
    %502 = vmatmul.mubr.bf16.gmra.mrb[0].mxu0 %v453
    %v503 = vpop.f32.mrb[0].mxu0
    %v504 = vadd.f32 %v447, %v503
    %v505 = vpop.f32.mrb[0].mxu0
    %v506 = vpop.f32.mrb[0].mxu0
    %v507 = vadd.f32 %v447, %v506
    %v508 = vpop.f32.mrb[0].mxu0
    %509 = vmatprep.mubr.bf16.mxu0 0
    %510 = vmatmul.mubr.bf16.gmra.mrb[0].mxu0 %v456
    %v511 = vpop.f32.mrb[0].mxu0
    %v512 = vadd.f32 %v447, %v511
    %v513 = vpop.f32.mrb[0].mxu0
    %v514 = vpop.f32.mrb[0].mxu0
    %v515 = vadd.f32 %v447, %v514
    %v516 = vpop.f32.mrb[0].mxu0
    %517 = vmatprep.mubr.bf16.mxu0 0
    %518 = vmatmul.mubr.bf16.gmra.mrb[0].mxu0 %v459
    %v519 = vpop.f32.mrb[0].mxu0
    %v520 = vadd.f32 %v447, %v519
    %v521 = vpop.f32.mrb[0].mxu0
    %v522 = vpop.f32.mrb[0].mxu0
    %v523 = vadd.f32 %v447, %v522
    %v524 = vpop.f32.mrb[0].mxu0
    %525 = vdwg.mxu0
    %v526 = vpack.c.bf16 %v496, %v496
    %v527 = vpack.c.bf16 %v499, %v499
    %v528 = vpack.c.bf16 %v504, %v504
    %v529 = vpack.c.bf16 %v507, %v507
    %v530 = vpack.c.bf16 %v512, %v512
    %v531 = vpack.c.bf16 %v515, %v515
    %v532 = vpack.c.bf16 %v520, %v520
    %v533 = vpack.c.bf16 %v523, %v523
    %534 = vst [vmem:[#allocation5] sm:$0xf] %v526
    %535 = vst [vmem:[#allocation5 + $0x4] sm:$0xf] %v527
    %536 = vst [vmem:[#allocation5 + $0x8] sm:$0xf] %v528
    %537 = vst [vmem:[#allocation5 + $0xc] sm:$0xf] %v529
    %538 = vst [vmem:[#allocation5 + $0x10] sm:$0xf] %v530
    %539 = vst [vmem:[#allocation5 + $0x14] sm:$0xf] %v531
    %540 = vst [vmem:[#allocation5 + $0x18] sm:$0xf] %v532
    %541 = vst [vmem:[#allocation5 + $0x1c] sm:$0xf] %v533
    loop: start=0, step=1, limit=8
    $region171: #{vid2fmri_forward.1} parent=1 // loop_pre_header
      _
    $region172: #{vid2fmri_forward.1} parent=1 // loop_header
      %s543 = sphi 0, %s547
      %p544 = scmp.ge.s32.totalorder %s543, 8
      %v548 = vphi 0.0, %v628
      %v549 = vphi 0.0, %v622
    $region173: #{vid2fmri_forward.1} parent=1 // loop_header_branch
      %546 = sbr.rel (%p544) target = $region177
    $region174: #{vid2fmri_forward.1} parent=1 // loop_body
      %v550 = vld [vmem:[%s128 + $0x10] sm:$0xff]
      %v551 = vld [vmem:[%s128 + $0x18] sm:$0xff]
      %s552 = smul.addr %s543, 4
      %s553 = scalar_lea.vmem [#allocation5], %s552
      %v554 = vld [vmem:[%s553] sm:$0xf]
      %v555 = vunpack.c.l.bf16 %v554
      %v556 = vpack.c.bf16 %v548, %v548
      %558 = vrot.lane.b32.xlu0 %v556, 32
      %v559 = vpop.permute.xlu0 %558
      %vm560 = vcmask 261120
      %v562 = vsel %vm560, %v559, 0
      %564 = vmatprep.subr.bf16.mxu0 0
      %565 = vmatpush1.bf16.msra.mxu0 %v550
      %566 = vmatprep.subr.bf16.mxu0 0
      %567 = vmatpush1.bf16.msra.mxu0 %v551
      %568 = vmatprep.subr.bf16.mxu0 0
      %569 = vmatpush1.bf16.msra.mxu0 0
      %570 = vmatprep.subr.bf16.mxu0 0
      %571 = vmatpush1.bf16.msra.mxu0 0
      %572 = vmatprep.subr.bf16.mxu0 0
      %573 = vmatpush1.bf16.msra.mxu0 0
      %574 = vmatprep.subr.bf16.mxu0 0
      %575 = vmatpush1.bf16.msra.mxu0 0
      %576 = vmatprep.subr.bf16.mxu0 0
      %577 = vmatpush1.bf16.msra.mxu0 0
      %578 = vmatprep.subr.bf16.mxu0 0
      %579 = vmatpush1.bf16.msra.mxu0 0
      %580 = vmatprep.subr.bf16.mxu0 0
      %581 = vmatpush1.bf16.msra.mxu0 0
      %582 = vmatprep.subr.bf16.mxu0 0
      %583 = vmatpush1.bf16.msra.mxu0 0
      %584 = vmatprep.subr.bf16.mxu0 0
      %585 = vmatpush1.bf16.msra.mxu0 0
      %586 = vmatprep.subr.bf16.mxu0 0
      %587 = vmatpush1.bf16.msra.mxu0 0
      %588 = vmatprep.subr.bf16.mxu0 0
      %589 = vmatpush1.bf16.msra.mxu0 0
      %590 = vmatprep.subr.bf16.mxu0 0
      %591 = vmatpush1.bf16.msra.mxu0 0
      %592 = vmatprep.subr.bf16.mxu0 0
      %593 = vmatpush1.bf16.msra.mxu0 0
      %594 = vmatprep.subr.bf16.mxu0 0
      %595 = vmatpush1.bf16.msra.mxu0 0
      %596 = vmatprep.mubr.bf16.mxu0 0
      %597 = vmatmul.mubr.bf16.gmra.mrb[0].mxu0 %v562
      %v598 = vpop.f32.mrb[0].mxu0
      %v599 = vadd.f32 0.0, %v598
      %v600 = vpop.f32.mrb[0].mxu0
      %v601 = vpop.f32.mrb[0].mxu0
      %v602 = vpop.f32.mrb[0].mxu0
      %603 = vdwg.mxu0
      %v604 = vadd.f32 %v555, %v599
      %v605 = vxor.u32 %v604, 2147483648
      %v606 = vmul.f32 %v605, 1.442695
      %v607 = vpow.pop %v606
      %v608 = vadd.f32 %v607, 1.0
      %v609 = vrcp.pop %v608
      %v610 = vmul.f32 1.0, %v609
      %v611 = vtanh.pop %v604
      %v612 = vmul.f32 %v610, %v549
      %614 = vrot.lane.b32.xlu0 %v611, 64
      %v615 = vpop.permute.xlu0 %614
      %v617 = vmul.f32 %v610, %v615
      %619 = vrot.lane.b32.xlu0 %v617, 32
      %v620 = vpop.permute.xlu0 %619
      %v622 = vadd.f32 %v612, %v620
      %v623 = vtanh.pop %v622
      %625 = vrot.lane.b32.xlu0 %v623, 64
      %v626 = vpop.permute.xlu0 %625
      %v628 = vmul.f32 %v610, %v626
      %v629 = vpack.c.bf16 %v628, %v628
      %v631 = vunpack.c.l.b16 %v629
      %v632 = vpack.c.b16 %v631, %v631
      %633 = vrot.lane.b32.xlu0 %v632, 32
      %v634 = vpop.permute.xlu0 %633
      %s636 = smul.addr %s543, 4
      %s637 = scalar_lea.vmem [#allocation4], %s636
      %vm638 = vcmask 257024
      %639 = vst.msk [vmem:[%s637] sm:$0xf] %vm638, %v634
    $region175: #{vid2fmri_forward.1} parent=1 // loop_footer
      %s547 = sadd.s32 1, %s543
    $region176: #{vid2fmri_forward.1} parent=1 // loop_footer_branch
      %542 = sbr.rel target = $region172
    $region177: #{vid2fmri_forward.1} parent=1 // loop_exit
      _
    %s640 = sshll.u32 %s125, 4
    %641 = dma.done [#allocation3], %s640
    %p643 = scmp.lt.u32.totalorder 32, 8
    %p644 = pneg %p643
    // Predicated region
    $region178: #{vid2fmri_forward.1} parent=1 // pred_check
      _
    $region179: #{vid2fmri_forward.1} parent=1 // pred_check_branch
      %646 = sbr.rel (%p643) target = $region181
    $region180: #{vid2fmri_forward.1} parent=1 // pred_region
      %s661 = sand.u32 32, 7
      %p662 = scmp.eq.s32.totalorder %s661, 0
      // Predicated region
      $region193: #{vid2fmri_forward.1} parent=180 // pred_check
        %p663 = pneg %p662
      $region194: #{vid2fmri_forward.1} parent=180 // pred_check_branch
        %665 = sbr.rel (%p663) target = $region196
      $region195: #{vid2fmri_forward.1} parent=180 // pred_region
        loop: start=0, step=1, limit=1
        $region197: #{vid2fmri_forward.1} parent=195 // loop_pre_header
          _
        $region198: #{vid2fmri_forward.1} parent=195 // loop_header
          %s667 = sphi 0, %s671
          %p668 = scmp.ge.s32.totalorder %s667, 1
          %s672 = sphi %s4, %s4
          %s673 = sphi %s128, %s128
        $region199: #{vid2fmri_forward.1} parent=195 // loop_header_branch
          %670 = sbr.rel (%p668) target = $region203
        $region200: #{vid2fmri_forward.1} parent=195 // loop_body
          %v674 = vld [vmem:[%s672] sm:$0xff]
          %675 = vst [vmem:[%s673] sm:$0xff] %v674
          %v676 = vld [vmem:[%s672 + $0x8] sm:$0xff]
          %677 = vst [vmem:[%s673 + $0x8] sm:$0xff] %v676
          %v678 = vld [vmem:[%s672 + $0x10] sm:$0xff]
          %679 = vst [vmem:[%s673 + $0x10] sm:$0xff] %v678
          %v680 = vld [vmem:[%s672 + $0x18] sm:$0xff]
          %681 = vst [vmem:[%s673 + $0x18] sm:$0xff] %v680
        $region201: #{vid2fmri_forward.1} parent=195 // loop_footer
          %s671 = sadd.s32 1, %s667
        $region202: #{vid2fmri_forward.1} parent=195 // loop_footer_branch
          %666 = sbr.rel target = $region198
        $region203: #{vid2fmri_forward.1} parent=195 // loop_exit
          _
      $region196: #{vid2fmri_forward.1} parent=180 // pred_fallthru
        _
      %p682 = pneg %p662
      // Predicated region
      $region204: #{vid2fmri_forward.1} parent=180 // pred_check
        _
      $region205: #{vid2fmri_forward.1} parent=180 // pred_check_branch
        %684 = sbr.rel (%p662) target = $region207
      $region206: #{vid2fmri_forward.1} parent=180 // pred_region
        %s685 = sand.u32 32, 7
      $region207: #{vid2fmri_forward.1} parent=180 // pred_fallthru
        _
    $region181: #{vid2fmri_forward.1} parent=1 // pred_fallthru
      _
    // Predicated region
    $region182: #{vid2fmri_forward.1} parent=1 // pred_check
      %p647 = pneg %p643
    $region183: #{vid2fmri_forward.1} parent=1 // pred_check_branch
      %649 = sbr.rel (%p647) target = $region185
    $region184: #{vid2fmri_forward.1} parent=1 // pred_region
      %s650 = sshllo.u32 0, 32
      loop: start=0, step=1, limit=1
      $region186: #{vid2fmri_forward.1} parent=184 // loop_pre_header
        _
      $region187: #{vid2fmri_forward.1} parent=184 // loop_header
        %s652 = sphi 0, %s656
        %p653 = scmp.ge.s32.totalorder %s652, 1
        %s657 = sphi %s4, %s4
        %s658 = sphi %s128, %s128
      $region188: #{vid2fmri_forward.1} parent=184 // loop_header_branch
        %655 = sbr.rel (%p653) target = $region192
      $region189: #{vid2fmri_forward.1} parent=184 // loop_body
        %v659 = vld [vmem:[%s657] sm:%s650]
        %660 = vst [vmem:[%s658] sm:%s650] %v659
      $region190: #{vid2fmri_forward.1} parent=184 // loop_footer
        %s656 = sadd.s32 1, %s652
      $region191: #{vid2fmri_forward.1} parent=184 // loop_footer_branch
        %651 = sbr.rel target = $region187
      $region192: #{vid2fmri_forward.1} parent=184 // loop_exit
        _
    $region185: #{vid2fmri_forward.1} parent=1 // pred_fallthru
      _
    // Predicated region
    $region208: #{vid2fmri_forward.1} parent=1 // pred_check
      _
    $region209: #{vid2fmri_forward.1} parent=1 // pred_check_branch
      %688 = sbr.rel (0) target = $region211
    $region210: #{vid2fmri_forward.1} parent=1 // pred_region
      %689 = vsyncadd %s129, 512
    $region211: #{vid2fmri_forward.1} parent=1 // pred_fallthru
      _
    %v690 = vld [vmem:[%s10] sm:$0x1]
    %v691 = vld [vmem:[#allocation4] sm:$0xf]
    %v692 = vld [vmem:[#allocation4 + $0x4] sm:$0xf]
    %v693 = vld [vmem:[#allocation4 + $0x8] sm:$0xf]
    %v694 = vld [vmem:[#allocation4 + $0xc] sm:$0xf]
    %v695 = vld [vmem:[#allocation4 + $0x10] sm:$0xf]
    %v696 = vld [vmem:[#allocation4 + $0x14] sm:$0xf]
    %v697 = vld [vmem:[#allocation4 + $0x18] sm:$0xf]
    %v698 = vld [vmem:[#allocation4 + $0x1c] sm:$0xf]
    %v699 = vld [vmem:[#allocation2] sm:$0xff]
    %v700 = vld [vmem:[#allocation2 + $0x8] sm:$0xff]
    %v702 = vlaneseq
    %v703 = vshrl.u32 %v702, 7
    %v704 = vsub.s32 0, %v703
    %v705 = vrot.slane %v690, %v704
    %v715 = vunpack.c.l.b16 %v691
    %v716 = vunpack.c.l.b16 %v692
    %v717 = vunpack.c.l.b16 %v693
    %v718 = vunpack.c.l.b16 %v694
    %v719 = vunpack.c.l.b16 %v695
    %v720 = vunpack.c.l.b16 %v696
    %v721 = vunpack.c.l.b16 %v697
    %v722 = vunpack.c.l.b16 %v698
    %v723 = vpack.c.b16 %v716, %v715
    %v724 = vpack.c.b16 %v718, %v717
    %v725 = vpack.c.b16 %v720, %v719
    %v726 = vpack.c.b16 %v722, %v721
    %vm727 = vcmask 261120
    %v729 = vsel %vm727, %v723, 0
    %v732 = vsel %vm727, %v724, 0
    %v735 = vsel %vm727, %v725, 0
    %v738 = vsel %vm727, %v726, 0
    %740 = vmatprep.subr.bf16.mxu0 0
    %741 = vmatpush1.bf16.msra.mxu0 %v699
    %742 = vmatprep.subr.bf16.mxu0 0
    %743 = vmatpush1.bf16.msra.mxu0 %v700
    %744 = vmatprep.subr.bf16.mxu0 0
    %745 = vmatpush1.bf16.msra.mxu0 0
    %746 = vmatprep.subr.bf16.mxu0 0
    %747 = vmatpush1.bf16.msra.mxu0 0
    %748 = vmatprep.subr.bf16.mxu0 0
    %749 = vmatpush1.bf16.msra.mxu0 0
    %750 = vmatprep.subr.bf16.mxu0 0
    %751 = vmatpush1.bf16.msra.mxu0 0
    %752 = vmatprep.subr.bf16.mxu0 0
    %753 = vmatpush1.bf16.msra.mxu0 0
    %754 = vmatprep.subr.bf16.mxu0 0
    %755 = vmatpush1.bf16.msra.mxu0 0
    %756 = vmatprep.subr.bf16.mxu0 0
    %757 = vmatpush1.bf16.msra.mxu0 0
    %758 = vmatprep.subr.bf16.mxu0 0
    %759 = vmatpush1.bf16.msra.mxu0 0
    %760 = vmatprep.subr.bf16.mxu0 0
    %761 = vmatpush1.bf16.msra.mxu0 0
    %762 = vmatprep.subr.bf16.mxu0 0
    %763 = vmatpush1.bf16.msra.mxu0 0
    %764 = vmatprep.subr.bf16.mxu0 0
    %765 = vmatpush1.bf16.msra.mxu0 0
    %766 = vmatprep.subr.bf16.mxu0 0
    %767 = vmatpush1.bf16.msra.mxu0 0
    %768 = vmatprep.subr.bf16.mxu0 0
    %769 = vmatpush1.bf16.msra.mxu0 0
    %770 = vmatprep.subr.bf16.mxu0 0
    %771 = vmatpush1.bf16.msra.mxu0 0
    %772 = vmatprep.mubr.bf16.mxu0 0
    %773 = vmatmul.mubr.bf16.gmra.mrb[0].mxu0 %v729
    %v774 = vpop.f32.mrb[0].mxu0
    %v775 = vadd.f32 %v705, %v774
    %v776 = vpop.f32.mrb[0].mxu0
    %v777 = vpop.f32.mrb[0].mxu0
    %v778 = vadd.f32 %v705, %v777
    %v779 = vpop.f32.mrb[0].mxu0
    %780 = vmatprep.mubr.bf16.mxu0 0
    %781 = vmatmul.mubr.bf16.gmra.mrb[0].mxu0 %v732
    %v782 = vpop.f32.mrb[0].mxu0
    %v783 = vadd.f32 %v705, %v782
    %v784 = vpop.f32.mrb[0].mxu0
    %v785 = vpop.f32.mrb[0].mxu0
    %v786 = vadd.f32 %v705, %v785
    %v787 = vpop.f32.mrb[0].mxu0
    %788 = vmatprep.mubr.bf16.mxu0 0
    %789 = vmatmul.mubr.bf16.gmra.mrb[0].mxu0 %v735
    %v790 = vpop.f32.mrb[0].mxu0
    %v791 = vadd.f32 %v705, %v790
    %v792 = vpop.f32.mrb[0].mxu0
    %v793 = vpop.f32.mrb[0].mxu0
    %v794 = vadd.f32 %v705, %v793
    %v795 = vpop.f32.mrb[0].mxu0
    %796 = vmatprep.mubr.bf16.mxu0 0
    %797 = vmatmul.mubr.bf16.gmra.mrb[0].mxu0 %v738
    %v798 = vpop.f32.mrb[0].mxu0
    %v799 = vadd.f32 %v705, %v798
    %v800 = vpop.f32.mrb[0].mxu0
    %v801 = vpop.f32.mrb[0].mxu0
    %v802 = vadd.f32 %v705, %v801
    %v803 = vpop.f32.mrb[0].mxu0
    %804 = vdwg.mxu0
    %v805 = vpack.c.bf16 %v775, %v775
    %v806 = vpack.c.bf16 %v778, %v778
    %v807 = vpack.c.bf16 %v783, %v783
    %v808 = vpack.c.bf16 %v786, %v786
    %v809 = vpack.c.bf16 %v791, %v791
    %v810 = vpack.c.bf16 %v794, %v794
    %v811 = vpack.c.bf16 %v799, %v799
    %v812 = vpack.c.bf16 %v802, %v802
    %813 = vst [vmem:[#allocation5] sm:$0xf] %v805
    %814 = vst [vmem:[#allocation5 + $0x4] sm:$0xf] %v806
    %815 = vst [vmem:[#allocation5 + $0x8] sm:$0xf] %v807
    %816 = vst [vmem:[#allocation5 + $0xc] sm:$0xf] %v808
    %817 = vst [vmem:[#allocation5 + $0x10] sm:$0xf] %v809
    %818 = vst [vmem:[#allocation5 + $0x14] sm:$0xf] %v810
    %819 = vst [vmem:[#allocation5 + $0x18] sm:$0xf] %v811
    %820 = vst [vmem:[#allocation5 + $0x1c] sm:$0xf] %v812
    loop: start=0, step=1, limit=8
    $region212: #{vid2fmri_forward.1} parent=1 // loop_pre_header
      _
    $region213: #{vid2fmri_forward.1} parent=1 // loop_header
      %s822 = sphi 0, %s826
      %p823 = scmp.ge.s32.totalorder %s822, 8
      %v827 = vphi 0.0, %v906
      %v828 = vphi 0.0, %v900
    $region214: #{vid2fmri_forward.1} parent=1 // loop_header_branch
      %825 = sbr.rel (%p823) target = $region218
    $region215: #{vid2fmri_forward.1} parent=1 // loop_body
      %v829 = vld [vmem:[#allocation2 + $0x10] sm:$0xff]
      %v830 = vld [vmem:[#allocation2 + $0x18] sm:$0xff]
      %s831 = smul.addr %s822, 4
      %s832 = scalar_lea.vmem [#allocation5], %s831
      %v833 = vld [vmem:[%s832] sm:$0xf]
      %v834 = vunpack.c.l.bf16 %v833
      %v835 = vpack.c.bf16 %v827, %v827
      %837 = vrot.lane.b32.xlu0 %v835, 32
      %v838 = vpop.permute.xlu0 %837
      %v840 = vsel %vm727, %v838, 0
      %842 = vmatprep.subr.bf16.mxu0 0
      %843 = vmatpush1.bf16.msra.mxu0 %v829
      %844 = vmatprep.subr.bf16.mxu0 0
      %845 = vmatpush1.bf16.msra.mxu0 %v830
      %846 = vmatprep.subr.bf16.mxu0 0
      %847 = vmatpush1.bf16.msra.mxu0 0
      %848 = vmatprep.subr.bf16.mxu0 0
      %849 = vmatpush1.bf16.msra.mxu0 0
      %850 = vmatprep.subr.bf16.mxu0 0
      %851 = vmatpush1.bf16.msra.mxu0 0
      %852 = vmatprep.subr.bf16.mxu0 0
      %853 = vmatpush1.bf16.msra.mxu0 0
      %854 = vmatprep.subr.bf16.mxu0 0
      %855 = vmatpush1.bf16.msra.mxu0 0
      %856 = vmatprep.subr.bf16.mxu0 0
      %857 = vmatpush1.bf16.msra.mxu0 0
      %858 = vmatprep.subr.bf16.mxu0 0
      %859 = vmatpush1.bf16.msra.mxu0 0
      %860 = vmatprep.subr.bf16.mxu0 0
      %861 = vmatpush1.bf16.msra.mxu0 0
      %862 = vmatprep.subr.bf16.mxu0 0
      %863 = vmatpush1.bf16.msra.mxu0 0
      %864 = vmatprep.subr.bf16.mxu0 0
      %865 = vmatpush1.bf16.msra.mxu0 0
      %866 = vmatprep.subr.bf16.mxu0 0
      %867 = vmatpush1.bf16.msra.mxu0 0
      %868 = vmatprep.subr.bf16.mxu0 0
      %869 = vmatpush1.bf16.msra.mxu0 0
      %870 = vmatprep.subr.bf16.mxu0 0
      %871 = vmatpush1.bf16.msra.mxu0 0
      %872 = vmatprep.subr.bf16.mxu0 0
      %873 = vmatpush1.bf16.msra.mxu0 0
      %874 = vmatprep.mubr.bf16.mxu0 0
      %875 = vmatmul.mubr.bf16.gmra.mrb[0].mxu0 %v840
      %v876 = vpop.f32.mrb[0].mxu0
      %v877 = vadd.f32 0.0, %v876
      %v878 = vpop.f32.mrb[0].mxu0
      %v879 = vpop.f32.mrb[0].mxu0
      %v880 = vpop.f32.mrb[0].mxu0
      %881 = vdwg.mxu0
      %v882 = vadd.f32 %v834, %v877
      %v883 = vxor.u32 %v882, 2147483648
      %v884 = vmul.f32 %v883, 1.442695
      %v885 = vpow.pop %v884
      %v886 = vadd.f32 %v885, 1.0
      %v887 = vrcp.pop %v886
      %v888 = vmul.f32 1.0, %v887
      %v889 = vtanh.pop %v882
      %v890 = vmul.f32 %v888, %v828
      %892 = vrot.lane.b32.xlu0 %v889, 64
      %v893 = vpop.permute.xlu0 %892
      %v895 = vmul.f32 %v888, %v893
      %897 = vrot.lane.b32.xlu0 %v895, 32
      %v898 = vpop.permute.xlu0 %897
      %v900 = vadd.f32 %v890, %v898
      %v901 = vtanh.pop %v900
      %903 = vrot.lane.b32.xlu0 %v901, 64
      %v904 = vpop.permute.xlu0 %903
      %v906 = vmul.f32 %v888, %v904
    $region216: #{vid2fmri_forward.1} parent=1 // loop_footer
      %s826 = sadd.s32 1, %s822
    $region217: #{vid2fmri_forward.1} parent=1 // loop_footer_branch
      %821 = sbr.rel target = $region213
    $region218: #{vid2fmri_forward.1} parent=1 // loop_exit
      _
    %s907 = sshll.u32 %s125, 4
    %908 = dma.done %s129, %s907
    %p910 = scmp.lt.u32.totalorder 32, 8
    %p911 = pneg %p910
    // Predicated region
    $region219: #{vid2fmri_forward.1} parent=1 // pred_check
      _
    $region220: #{vid2fmri_forward.1} parent=1 // pred_check_branch
      %913 = sbr.rel (%p910) target = $region222
    $region221: #{vid2fmri_forward.1} parent=1 // pred_region
      %s928 = sand.u32 32, 7
      %p929 = scmp.eq.s32.totalorder %s928, 0
      // Predicated region
      $region234: #{vid2fmri_forward.1} parent=221 // pred_check
        %p930 = pneg %p929
      $region235: #{vid2fmri_forward.1} parent=221 // pred_check_branch
        %932 = sbr.rel (%p930) target = $region237
      $region236: #{vid2fmri_forward.1} parent=221 // pred_region
        loop: start=0, step=1, limit=1
        $region238: #{vid2fmri_forward.1} parent=236 // loop_pre_header
          _
        $region239: #{vid2fmri_forward.1} parent=236 // loop_header
          %s934 = sphi 0, %s938
          %p935 = scmp.ge.s32.totalorder %s934, 1
          %s939 = sphi %s5, %s5
          %s940 = sphi [#allocation2], [#allocation2]
        $region240: #{vid2fmri_forward.1} parent=236 // loop_header_branch
          %937 = sbr.rel (%p935) target = $region244
        $region241: #{vid2fmri_forward.1} parent=236 // loop_body
          %v941 = vld [vmem:[%s939] sm:$0xff]
          %942 = vst [vmem:[%s940] sm:$0xff] %v941
          %v943 = vld [vmem:[%s939 + $0x8] sm:$0xff]
          %944 = vst [vmem:[%s940 + $0x8] sm:$0xff] %v943
          %v945 = vld [vmem:[%s939 + $0x10] sm:$0xff]
          %946 = vst [vmem:[%s940 + $0x10] sm:$0xff] %v945
          %v947 = vld [vmem:[%s939 + $0x18] sm:$0xff]
          %948 = vst [vmem:[%s940 + $0x18] sm:$0xff] %v947
        $region242: #{vid2fmri_forward.1} parent=236 // loop_footer
          %s938 = sadd.s32 1, %s934
        $region243: #{vid2fmri_forward.1} parent=236 // loop_footer_branch
          %933 = sbr.rel target = $region239
        $region244: #{vid2fmri_forward.1} parent=236 // loop_exit
          _
      $region237: #{vid2fmri_forward.1} parent=221 // pred_fallthru
        _
      %p949 = pneg %p929
      // Predicated region
      $region245: #{vid2fmri_forward.1} parent=221 // pred_check
        _
      $region246: #{vid2fmri_forward.1} parent=221 // pred_check_branch
        %951 = sbr.rel (%p929) target = $region248
      $region247: #{vid2fmri_forward.1} parent=221 // pred_region
        %s952 = sand.u32 32, 7
      $region248: #{vid2fmri_forward.1} parent=221 // pred_fallthru
        _
    $region222: #{vid2fmri_forward.1} parent=1 // pred_fallthru
      _
    // Predicated region
    $region223: #{vid2fmri_forward.1} parent=1 // pred_check
      %p914 = pneg %p910
    $region224: #{vid2fmri_forward.1} parent=1 // pred_check_branch
      %916 = sbr.rel (%p914) target = $region226
    $region225: #{vid2fmri_forward.1} parent=1 // pred_region
      %s917 = sshllo.u32 0, 32
      loop: start=0, step=1, limit=1
      $region227: #{vid2fmri_forward.1} parent=225 // loop_pre_header
        _
      $region228: #{vid2fmri_forward.1} parent=225 // loop_header
        %s919 = sphi 0, %s923
        %p920 = scmp.ge.s32.totalorder %s919, 1
        %s924 = sphi %s5, %s5
        %s925 = sphi [#allocation2], [#allocation2]
      $region229: #{vid2fmri_forward.1} parent=225 // loop_header_branch
        %922 = sbr.rel (%p920) target = $region233
      $region230: #{vid2fmri_forward.1} parent=225 // loop_body
        %v926 = vld [vmem:[%s924] sm:%s917]
        %927 = vst [vmem:[%s925] sm:%s917] %v926
      $region231: #{vid2fmri_forward.1} parent=225 // loop_footer
        %s923 = sadd.s32 1, %s919
      $region232: #{vid2fmri_forward.1} parent=225 // loop_footer_branch
        %918 = sbr.rel target = $region228
      $region233: #{vid2fmri_forward.1} parent=225 // loop_exit
        _
    $region226: #{vid2fmri_forward.1} parent=1 // pred_fallthru
      _
    // Predicated region
    $region249: #{vid2fmri_forward.1} parent=1 // pred_check
      _
    $region250: #{vid2fmri_forward.1} parent=1 // pred_check_branch
      %955 = sbr.rel (0) target = $region252
    $region251: #{vid2fmri_forward.1} parent=1 // pred_region
      %956 = vsyncadd [#allocation3], 512
    $region252: #{vid2fmri_forward.1} parent=1 // pred_fallthru
      _
    %v957 = vld [vmem:[%s11] sm:$0x1]
    %v958 = vld [vmem:[%s0] sm:$0xff]
    %v959 = vld [vmem:[%s0 + $0x8] sm:$0xff]
    %v960 = vld [vmem:[%s0 + $0x10] sm:$0xff]
    %v961 = vld [vmem:[%s0 + $0x18] sm:$0xff]
    %v962 = vld [vmem:[%s0 + $0x20] sm:$0xff]
    %v963 = vld [vmem:[%s0 + $0x28] sm:$0xff]
    %v964 = vld [vmem:[%s0 + $0x30] sm:$0xff]
    %v965 = vld [vmem:[%s0 + $0x38] sm:$0xff]
    %v966 = vpack.c.bf16 %v959, %v958
    %v967 = vpack.c.bf16 %v961, %v960
    %v968 = vpack.c.bf16 %v963, %v962
    %v969 = vpack.c.bf16 %v965, %v964
    %v970 = vld [vmem:[%s128] sm:$0xff]
    %v972 = vlaneseq
    %v973 = vshrl.u32 %v972, 7
    %v974 = vsub.s32 0, %v973
    %v975 = vrot.slane %v957, %v974
    %v978 = vsel %vm198, %v966, 0
    %v981 = vsel %vm198, %v967, 0
    %v984 = vsel %vm198, %v968, 0
    %v987 = vsel %vm198, %v969, 0
    %989 = vmatprep.subr.bf16.mxu0 0
    %990 = vmatpush1.bf16.msra.mxu0 %v970
    %991 = vmatprep.subr.bf16.mxu0 0
    %992 = vmatpush1.bf16.msra.mxu0 0
    %993 = vmatprep.subr.bf16.mxu0 0
    %994 = vmatpush1.bf16.msra.mxu0 0
    %995 = vmatprep.subr.bf16.mxu0 0
    %996 = vmatpush1.bf16.msra.mxu0 0
    %997 = vmatprep.subr.bf16.mxu0 0
    %998 = vmatpush1.bf16.msra.mxu0 0
    %999 = vmatprep.subr.bf16.mxu0 0
    %1000 = vmatpush1.bf16.msra.mxu0 0
    %1001 = vmatprep.subr.bf16.mxu0 0
    %1002 = vmatpush1.bf16.msra.mxu0 0
    %1003 = vmatprep.subr.bf16.mxu0 0
    %1004 = vmatpush1.bf16.msra.mxu0 0
    %1005 = vmatprep.subr.bf16.mxu0 0
    %1006 = vmatpush1.bf16.msra.mxu0 0
    %1007 = vmatprep.subr.bf16.mxu0 0
    %1008 = vmatpush1.bf16.msra.mxu0 0
    %1009 = vmatprep.subr.bf16.mxu0 0
    %1010 = vmatpush1.bf16.msra.mxu0 0
    %1011 = vmatprep.subr.bf16.mxu0 0
    %1012 = vmatpush1.bf16.msra.mxu0 0
    %1013 = vmatprep.subr.bf16.mxu0 0
    %1014 = vmatpush1.bf16.msra.mxu0 0
    %1015 = vmatprep.subr.bf16.mxu0 0
    %1016 = vmatpush1.bf16.msra.mxu0 0
    %1017 = vmatprep.subr.bf16.mxu0 0
    %1018 = vmatpush1.bf16.msra.mxu0 0
    %1019 = vmatprep.subr.bf16.mxu0 0
    %1020 = vmatpush1.bf16.msra.mxu0 0
    %1021 = vmatprep.mubr.bf16.mxu0 0
    %1022 = vmatmul.mubr.bf16.gmra.mrb[0].mxu0 %v978
    %v1023 = vpop.f32.mrb[0].mxu0
    %v1024 = vadd.f32 %v975, %v1023
    %v1025 = vpop.f32.mrb[0].mxu0
    %v1026 = vpop.f32.mrb[0].mxu0
    %v1027 = vadd.f32 %v975, %v1026
    %v1028 = vpop.f32.mrb[0].mxu0
    %1029 = vmatprep.mubr.bf16.mxu0 0
    %1030 = vmatmul.mubr.bf16.gmra.mrb[0].mxu0 %v981
    %v1031 = vpop.f32.mrb[0].mxu0
    %v1032 = vadd.f32 %v975, %v1031
    %v1033 = vpop.f32.mrb[0].mxu0
    %v1034 = vpop.f32.mrb[0].mxu0
    %v1035 = vadd.f32 %v975, %v1034
    %v1036 = vpop.f32.mrb[0].mxu0
    %1037 = vmatprep.mubr.bf16.mxu0 0
    %1038 = vmatmul.mubr.bf16.gmra.mrb[0].mxu0 %v984
    %v1039 = vpop.f32.mrb[0].mxu0
    %v1040 = vadd.f32 %v975, %v1039
    %v1041 = vpop.f32.mrb[0].mxu0
    %v1042 = vpop.f32.mrb[0].mxu0
    %v1043 = vadd.f32 %v975, %v1042
    %v1044 = vpop.f32.mrb[0].mxu0
    %1045 = vmatprep.mubr.bf16.mxu0 0
    %1046 = vmatmul.mubr.bf16.gmra.mrb[0].mxu0 %v987
    %v1047 = vpop.f32.mrb[0].mxu0
    %v1048 = vadd.f32 %v975, %v1047
    %v1049 = vpop.f32.mrb[0].mxu0
    %v1050 = vpop.f32.mrb[0].mxu0
    %v1051 = vadd.f32 %v975, %v1050
    %v1052 = vpop.f32.mrb[0].mxu0
    %1053 = vdwg.mxu0
    %v1054 = vpack.c.bf16 %v1024, %v1024
    %v1055 = vpack.c.bf16 %v1027, %v1027
    %v1056 = vpack.c.bf16 %v1032, %v1032
    %v1057 = vpack.c.bf16 %v1035, %v1035
    %v1058 = vpack.c.bf16 %v1040, %v1040
    %v1059 = vpack.c.bf16 %v1043, %v1043
    %v1060 = vpack.c.bf16 %v1048, %v1048
    %v1061 = vpack.c.bf16 %v1051, %v1051
    %1062 = vst [vmem:[#allocation5] sm:$0xf] %v1054
    %1063 = vst [vmem:[#allocation5 + $0x4] sm:$0xf] %v1055
    %1064 = vst [vmem:[#allocation5 + $0x8] sm:$0xf] %v1056
    %1065 = vst [vmem:[#allocation5 + $0xc] sm:$0xf] %v1057
    %1066 = vst [vmem:[#allocation5 + $0x10] sm:$0xf] %v1058
    %1067 = vst [vmem:[#allocation5 + $0x14] sm:$0xf] %v1059
    %1068 = vst [vmem:[#allocation5 + $0x18] sm:$0xf] %v1060
    %1069 = vst [vmem:[#allocation5 + $0x1c] sm:$0xf] %v1061
    loop: start=0, step=1, limit=8
    $region253: #{vid2fmri_forward.1} parent=1 // loop_pre_header
      _
    $region254: #{vid2fmri_forward.1} parent=1 // loop_header
      %s1071 = sphi 0, %s1075
      %p1072 = scmp.ge.s32.totalorder %s1071, 8
      %v1076 = vphi 0.0, %v1155
      %v1077 = vphi 0.0, %v1149
    $region255: #{vid2fmri_forward.1} parent=1 // loop_header_branch
      %1074 = sbr.rel (%p1072) target = $region259
    $region256: #{vid2fmri_forward.1} parent=1 // loop_body
      %v1078 = vld [vmem:[%s128 + $0x10] sm:$0xff]
      %v1079 = vld [vmem:[%s128 + $0x18] sm:$0xff]
      %s1080 = smul.addr %s1071, 4
      %s1081 = scalar_lea.vmem [#allocation5], %s1080
      %v1082 = vld [vmem:[%s1081] sm:$0xf]
      %v1083 = vunpack.c.l.bf16 %v1082
      %v1084 = vpack.c.bf16 %v1076, %v1076
      %1086 = vrot.lane.b32.xlu0 %v1084, 32
      %v1087 = vpop.permute.xlu0 %1086
      %v1089 = vsel %vm727, %v1087, 0
      %1091 = vmatprep.subr.bf16.mxu0 0
      %1092 = vmatpush1.bf16.msra.mxu0 %v1078
      %1093 = vmatprep.subr.bf16.mxu0 0
      %1094 = vmatpush1.bf16.msra.mxu0 %v1079
      %1095 = vmatprep.subr.bf16.mxu0 0
      %1096 = vmatpush1.bf16.msra.mxu0 0
      %1097 = vmatprep.subr.bf16.mxu0 0
      %1098 = vmatpush1.bf16.msra.mxu0 0
      %1099 = vmatprep.subr.bf16.mxu0 0
      %1100 = vmatpush1.bf16.msra.mxu0 0
      %1101 = vmatprep.subr.bf16.mxu0 0
      %1102 = vmatpush1.bf16.msra.mxu0 0
      %1103 = vmatprep.subr.bf16.mxu0 0
      %1104 = vmatpush1.bf16.msra.mxu0 0
      %1105 = vmatprep.subr.bf16.mxu0 0
      %1106 = vmatpush1.bf16.msra.mxu0 0
      %1107 = vmatprep.subr.bf16.mxu0 0
      %1108 = vmatpush1.bf16.msra.mxu0 0
      %1109 = vmatprep.subr.bf16.mxu0 0
      %1110 = vmatpush1.bf16.msra.mxu0 0
      %1111 = vmatprep.subr.bf16.mxu0 0
      %1112 = vmatpush1.bf16.msra.mxu0 0
      %1113 = vmatprep.subr.bf16.mxu0 0
      %1114 = vmatpush1.bf16.msra.mxu0 0
      %1115 = vmatprep.subr.bf16.mxu0 0
      %1116 = vmatpush1.bf16.msra.mxu0 0
      %1117 = vmatprep.subr.bf16.mxu0 0
      %1118 = vmatpush1.bf16.msra.mxu0 0
      %1119 = vmatprep.subr.bf16.mxu0 0
      %1120 = vmatpush1.bf16.msra.mxu0 0
      %1121 = vmatprep.subr.bf16.mxu0 0
      %1122 = vmatpush1.bf16.msra.mxu0 0
      %1123 = vmatprep.mubr.bf16.mxu0 0
      %1124 = vmatmul.mubr.bf16.gmra.mrb[0].mxu0 %v1089
      %v1125 = vpop.f32.mrb[0].mxu0
      %v1126 = vadd.f32 0.0, %v1125
      %v1127 = vpop.f32.mrb[0].mxu0
      %v1128 = vpop.f32.mrb[0].mxu0
      %v1129 = vpop.f32.mrb[0].mxu0
      %1130 = vdwg.mxu0
      %v1131 = vadd.f32 %v1083, %v1126
      %v1132 = vxor.u32 %v1131, 2147483648
      %v1133 = vmul.f32 %v1132, 1.442695
      %v1134 = vpow.pop %v1133
      %v1135 = vadd.f32 %v1134, 1.0
      %v1136 = vrcp.pop %v1135
      %v1137 = vmul.f32 1.0, %v1136
      %v1138 = vtanh.pop %v1131
      %v1139 = vmul.f32 %v1137, %v1077
      %1141 = vrot.lane.b32.xlu0 %v1138, 64
      %v1142 = vpop.permute.xlu0 %1141
      %v1144 = vmul.f32 %v1137, %v1142
      %1146 = vrot.lane.b32.xlu0 %v1144, 32
      %v1147 = vpop.permute.xlu0 %1146
      %v1149 = vadd.f32 %v1139, %v1147
      %v1150 = vtanh.pop %v1149
      %1152 = vrot.lane.b32.xlu0 %v1150, 64
      %v1153 = vpop.permute.xlu0 %1152
      %v1155 = vmul.f32 %v1137, %v1153
      %v1156 = vpack.c.bf16 %v1155, %v1155
      %v1158 = vunpack.c.l.b16 %v1156
      %v1159 = vpack.c.b16 %v1158, %v1158
      %1160 = vrot.lane.b32.xlu0 %v1159, 32
      %v1161 = vpop.permute.xlu0 %1160
      %s1163 = smul.addr %s1071, 4
      %s1164 = scalar_lea.vmem [#allocation4], %s1163
      %vm1165 = vcmask 257024
      %1166 = vst.msk [vmem:[%s1164] sm:$0xf] %vm1165, %v1161
    $region257: #{vid2fmri_forward.1} parent=1 // loop_footer
      %s1075 = sadd.s32 1, %s1071
    $region258: #{vid2fmri_forward.1} parent=1 // loop_footer_branch
      %1070 = sbr.rel target = $region254
    $region259: #{vid2fmri_forward.1} parent=1 // loop_exit
      _
    %s1167 = sshll.u32 %s125, 4
    %1168 = dma.done [#allocation3], %s1167
    %p1170 = scmp.lt.u32.totalorder 32, 8
    %p1171 = pneg %p1170
    // Predicated region
    $region260: #{vid2fmri_forward.1} parent=1 // pred_check
      _
    $region261: #{vid2fmri_forward.1} parent=1 // pred_check_branch
      %1173 = sbr.rel (%p1170) target = $region263
    $region262: #{vid2fmri_forward.1} parent=1 // pred_region
      %s1188 = sand.u32 32, 7
      %p1189 = scmp.eq.s32.totalorder %s1188, 0
      // Predicated region
      $region275: #{vid2fmri_forward.1} parent=262 // pred_check
        %p1190 = pneg %p1189
      $region276: #{vid2fmri_forward.1} parent=262 // pred_check_branch
        %1192 = sbr.rel (%p1190) target = $region278
      $region277: #{vid2fmri_forward.1} parent=262 // pred_region
        loop: start=0, step=1, limit=1
        $region279: #{vid2fmri_forward.1} parent=277 // loop_pre_header
          _
        $region280: #{vid2fmri_forward.1} parent=277 // loop_header
          %s1194 = sphi 0, %s1198
          %p1195 = scmp.ge.s32.totalorder %s1194, 1
          %s1199 = sphi %s6, %s6
          %s1200 = sphi %s128, %s128
        $region281: #{vid2fmri_forward.1} parent=277 // loop_header_branch
          %1197 = sbr.rel (%p1195) target = $region285
        $region282: #{vid2fmri_forward.1} parent=277 // loop_body
          %v1201 = vld [vmem:[%s1199] sm:$0xff]
          %1202 = vst [vmem:[%s1200] sm:$0xff] %v1201
          %v1203 = vld [vmem:[%s1199 + $0x8] sm:$0xff]
          %1204 = vst [vmem:[%s1200 + $0x8] sm:$0xff] %v1203
          %v1205 = vld [vmem:[%s1199 + $0x10] sm:$0xff]
          %1206 = vst [vmem:[%s1200 + $0x10] sm:$0xff] %v1205
          %v1207 = vld [vmem:[%s1199 + $0x18] sm:$0xff]
          %1208 = vst [vmem:[%s1200 + $0x18] sm:$0xff] %v1207
        $region283: #{vid2fmri_forward.1} parent=277 // loop_footer
          %s1198 = sadd.s32 1, %s1194
        $region284: #{vid2fmri_forward.1} parent=277 // loop_footer_branch
          %1193 = sbr.rel target = $region280
        $region285: #{vid2fmri_forward.1} parent=277 // loop_exit
          _
      $region278: #{vid2fmri_forward.1} parent=262 // pred_fallthru
        _
      %p1209 = pneg %p1189
      // Predicated region
      $region286: #{vid2fmri_forward.1} parent=262 // pred_check
        _
      $region287: #{vid2fmri_forward.1} parent=262 // pred_check_branch
        %1211 = sbr.rel (%p1189) target = $region289
      $region288: #{vid2fmri_forward.1} parent=262 // pred_region
        %s1212 = sand.u32 32, 7
      $region289: #{vid2fmri_forward.1} parent=262 // pred_fallthru
        _
    $region263: #{vid2fmri_forward.1} parent=1 // pred_fallthru
      _
    // Predicated region
    $region264: #{vid2fmri_forward.1} parent=1 // pred_check
      %p1174 = pneg %p1170
    $region265: #{vid2fmri_forward.1} parent=1 // pred_check_branch
      %1176 = sbr.rel (%p1174) target = $region267
    $region266: #{vid2fmri_forward.1} parent=1 // pred_region
      %s1177 = sshllo.u32 0, 32
      loop: start=0, step=1, limit=1
      $region268: #{vid2fmri_forward.1} parent=266 // loop_pre_header
        _
      $region269: #{vid2fmri_forward.1} parent=266 // loop_header
        %s1179 = sphi 0, %s1183
        %p1180 = scmp.ge.s32.totalorder %s1179, 1
        %s1184 = sphi %s6, %s6
        %s1185 = sphi %s128, %s128
      $region270: #{vid2fmri_forward.1} parent=266 // loop_header_branch
        %1182 = sbr.rel (%p1180) target = $region274
      $region271: #{vid2fmri_forward.1} parent=266 // loop_body
        %v1186 = vld [vmem:[%s1184] sm:%s1177]
        %1187 = vst [vmem:[%s1185] sm:%s1177] %v1186
      $region272: #{vid2fmri_forward.1} parent=266 // loop_footer
        %s1183 = sadd.s32 1, %s1179
      $region273: #{vid2fmri_forward.1} parent=266 // loop_footer_branch
        %1178 = sbr.rel target = $region269
      $region274: #{vid2fmri_forward.1} parent=266 // loop_exit
        _
    $region267: #{vid2fmri_forward.1} parent=1 // pred_fallthru
      _
    // Predicated region
    $region290: #{vid2fmri_forward.1} parent=1 // pred_check
      _
    $region291: #{vid2fmri_forward.1} parent=1 // pred_check_branch
      %1215 = sbr.rel (0) target = $region293
    $region292: #{vid2fmri_forward.1} parent=1 // pred_region
      %1216 = vsyncadd %s129, 512
    $region293: #{vid2fmri_forward.1} parent=1 // pred_fallthru
      _
    %v1217 = vld [vmem:[%s12] sm:$0x1]
    %v1218 = vld [vmem:[#allocation4] sm:$0xf]
    %v1219 = vld [vmem:[#allocation4 + $0x4] sm:$0xf]
    %v1220 = vld [vmem:[#allocation4 + $0x8] sm:$0xf]
    %v1221 = vld [vmem:[#allocation4 + $0xc] sm:$0xf]
    %v1222 = vld [vmem:[#allocation4 + $0x10] sm:$0xf]
    %v1223 = vld [vmem:[#allocation4 + $0x14] sm:$0xf]
    %v1224 = vld [vmem:[#allocation4 + $0x18] sm:$0xf]
    %v1225 = vld [vmem:[#allocation4 + $0x1c] sm:$0xf]
    %v1226 = vld [vmem:[#allocation2] sm:$0xff]
    %v1227 = vld [vmem:[#allocation2 + $0x8] sm:$0xff]
    %v1229 = vlaneseq
    %v1230 = vshrl.u32 %v1229, 7
    %v1231 = vsub.s32 0, %v1230
    %v1232 = vrot.slane %v1217, %v1231
    %v1242 = vunpack.c.l.b16 %v1218
    %v1243 = vunpack.c.l.b16 %v1219
    %v1244 = vunpack.c.l.b16 %v1220
    %v1245 = vunpack.c.l.b16 %v1221
    %v1246 = vunpack.c.l.b16 %v1222
    %v1247 = vunpack.c.l.b16 %v1223
    %v1248 = vunpack.c.l.b16 %v1224
    %v1249 = vunpack.c.l.b16 %v1225
    %v1250 = vpack.c.b16 %v1243, %v1242
    %v1251 = vpack.c.b16 %v1245, %v1244
    %v1252 = vpack.c.b16 %v1247, %v1246
    %v1253 = vpack.c.b16 %v1249, %v1248
    %v1255 = vsel %vm727, %v1250, 0
    %v1258 = vsel %vm727, %v1251, 0
    %v1261 = vsel %vm727, %v1252, 0
    %v1264 = vsel %vm727, %v1253, 0
    %1266 = vmatprep.subr.bf16.mxu0 0
    %1267 = vmatpush1.bf16.msra.mxu0 %v1226
    %1268 = vmatprep.subr.bf16.mxu0 0
    %1269 = vmatpush1.bf16.msra.mxu0 %v1227
    %1270 = vmatprep.subr.bf16.mxu0 0
    %1271 = vmatpush1.bf16.msra.mxu0 0
    %1272 = vmatprep.subr.bf16.mxu0 0
    %1273 = vmatpush1.bf16.msra.mxu0 0
    %1274 = vmatprep.subr.bf16.mxu0 0
    %1275 = vmatpush1.bf16.msra.mxu0 0
    %1276 = vmatprep.subr.bf16.mxu0 0
    %1277 = vmatpush1.bf16.msra.mxu0 0
    %1278 = vmatprep.subr.bf16.mxu0 0
    %1279 = vmatpush1.bf16.msra.mxu0 0
    %1280 = vmatprep.subr.bf16.mxu0 0
    %1281 = vmatpush1.bf16.msra.mxu0 0
    %1282 = vmatprep.subr.bf16.mxu0 0
    %1283 = vmatpush1.bf16.msra.mxu0 0
    %1284 = vmatprep.subr.bf16.mxu0 0
    %1285 = vmatpush1.bf16.msra.mxu0 0
    %1286 = vmatprep.subr.bf16.mxu0 0
    %1287 = vmatpush1.bf16.msra.mxu0 0
    %1288 = vmatprep.subr.bf16.mxu0 0
    %1289 = vmatpush1.bf16.msra.mxu0 0
    %1290 = vmatprep.subr.bf16.mxu0 0
    %1291 = vmatpush1.bf16.msra.mxu0 0
    %1292 = vmatprep.subr.bf16.mxu0 0
    %1293 = vmatpush1.bf16.msra.mxu0 0
    %1294 = vmatprep.subr.bf16.mxu0 0
    %1295 = vmatpush1.bf16.msra.mxu0 0
    %1296 = vmatprep.subr.bf16.mxu0 0
    %1297 = vmatpush1.bf16.msra.mxu0 0
    %1298 = vmatprep.mubr.bf16.mxu0 0
    %1299 = vmatmul.mubr.bf16.gmra.mrb[0].mxu0 %v1255
    %v1300 = vpop.f32.mrb[0].mxu0
    %v1301 = vadd.f32 %v1232, %v1300
    %v1302 = vpop.f32.mrb[0].mxu0
    %v1303 = vpop.f32.mrb[0].mxu0
    %v1304 = vadd.f32 %v1232, %v1303
    %v1305 = vpop.f32.mrb[0].mxu0
    %1306 = vmatprep.mubr.bf16.mxu0 0
    %1307 = vmatmul.mubr.bf16.gmra.mrb[0].mxu0 %v1258
    %v1308 = vpop.f32.mrb[0].mxu0
    %v1309 = vadd.f32 %v1232, %v1308
    %v1310 = vpop.f32.mrb[0].mxu0
    %v1311 = vpop.f32.mrb[0].mxu0
    %v1312 = vadd.f32 %v1232, %v1311
    %v1313 = vpop.f32.mrb[0].mxu0
    %1314 = vmatprep.mubr.bf16.mxu0 0
    %1315 = vmatmul.mubr.bf16.gmra.mrb[0].mxu0 %v1261
    %v1316 = vpop.f32.mrb[0].mxu0
    %v1317 = vadd.f32 %v1232, %v1316
    %v1318 = vpop.f32.mrb[0].mxu0
    %v1319 = vpop.f32.mrb[0].mxu0
    %v1320 = vadd.f32 %v1232, %v1319
    %v1321 = vpop.f32.mrb[0].mxu0
    %1322 = vmatprep.mubr.bf16.mxu0 0
    %1323 = vmatmul.mubr.bf16.gmra.mrb[0].mxu0 %v1264
    %v1324 = vpop.f32.mrb[0].mxu0
    %v1325 = vadd.f32 %v1232, %v1324
    %v1326 = vpop.f32.mrb[0].mxu0
    %v1327 = vpop.f32.mrb[0].mxu0
    %v1328 = vadd.f32 %v1232, %v1327
    %v1329 = vpop.f32.mrb[0].mxu0
    %1330 = vdwg.mxu0
    %v1331 = vpack.c.bf16 %v1301, %v1301
    %v1332 = vpack.c.bf16 %v1304, %v1304
    %v1333 = vpack.c.bf16 %v1309, %v1309
    %v1334 = vpack.c.bf16 %v1312, %v1312
    %v1335 = vpack.c.bf16 %v1317, %v1317
    %v1336 = vpack.c.bf16 %v1320, %v1320
    %v1337 = vpack.c.bf16 %v1325, %v1325
    %v1338 = vpack.c.bf16 %v1328, %v1328
    %1339 = vst [vmem:[#allocation5] sm:$0xf] %v1331
    %1340 = vst [vmem:[#allocation5 + $0x4] sm:$0xf] %v1332
    %1341 = vst [vmem:[#allocation5 + $0x8] sm:$0xf] %v1333
    %1342 = vst [vmem:[#allocation5 + $0xc] sm:$0xf] %v1334
    %1343 = vst [vmem:[#allocation5 + $0x10] sm:$0xf] %v1335
    %1344 = vst [vmem:[#allocation5 + $0x14] sm:$0xf] %v1336
    %1345 = vst [vmem:[#allocation5 + $0x18] sm:$0xf] %v1337
    %1346 = vst [vmem:[#allocation5 + $0x1c] sm:$0xf] %v1338
    loop: start=0, step=1, limit=8
    $region294: #{vid2fmri_forward.1} parent=1 // loop_pre_header
      _
    $region295: #{vid2fmri_forward.1} parent=1 // loop_header
      %s1348 = sphi 0, %s1352
      %p1349 = scmp.ge.s32.totalorder %s1348, 8
      %v1353 = vphi 0.0, %v1432
      %v1354 = vphi 0.0, %v1426
    $region296: #{vid2fmri_forward.1} parent=1 // loop_header_branch
      %1351 = sbr.rel (%p1349) target = $region300
    $region297: #{vid2fmri_forward.1} parent=1 // loop_body
      %v1355 = vld [vmem:[#allocation2 + $0x10] sm:$0xff]
      %v1356 = vld [vmem:[#allocation2 + $0x18] sm:$0xff]
      %s1357 = smul.addr %s1348, 4
      %s1358 = scalar_lea.vmem [#allocation5], %s1357
      %v1359 = vld [vmem:[%s1358] sm:$0xf]
      %v1360 = vunpack.c.l.bf16 %v1359
      %v1361 = vpack.c.bf16 %v1353, %v1353
      %1363 = vrot.lane.b32.xlu0 %v1361, 32
      %v1364 = vpop.permute.xlu0 %1363
      %v1366 = vsel %vm727, %v1364, 0
      %1368 = vmatprep.subr.bf16.mxu0 0
      %1369 = vmatpush1.bf16.msra.mxu0 %v1355
      %1370 = vmatprep.subr.bf16.mxu0 0
      %1371 = vmatpush1.bf16.msra.mxu0 %v1356
      %1372 = vmatprep.subr.bf16.mxu0 0
      %1373 = vmatpush1.bf16.msra.mxu0 0
      %1374 = vmatprep.subr.bf16.mxu0 0
      %1375 = vmatpush1.bf16.msra.mxu0 0
      %1376 = vmatprep.subr.bf16.mxu0 0
      %1377 = vmatpush1.bf16.msra.mxu0 0
      %1378 = vmatprep.subr.bf16.mxu0 0
      %1379 = vmatpush1.bf16.msra.mxu0 0
      %1380 = vmatprep.subr.bf16.mxu0 0
      %1381 = vmatpush1.bf16.msra.mxu0 0
      %1382 = vmatprep.subr.bf16.mxu0 0
      %1383 = vmatpush1.bf16.msra.mxu0 0
      %1384 = vmatprep.subr.bf16.mxu0 0
      %1385 = vmatpush1.bf16.msra.mxu0 0
      %1386 = vmatprep.subr.bf16.mxu0 0
      %1387 = vmatpush1.bf16.msra.mxu0 0
      %1388 = vmatprep.subr.bf16.mxu0 0
      %1389 = vmatpush1.bf16.msra.mxu0 0
      %1390 = vmatprep.subr.bf16.mxu0 0
      %1391 = vmatpush1.bf16.msra.mxu0 0
      %1392 = vmatprep.subr.bf16.mxu0 0
      %1393 = vmatpush1.bf16.msra.mxu0 0
      %1394 = vmatprep.subr.bf16.mxu0 0
      %1395 = vmatpush1.bf16.msra.mxu0 0
      %1396 = vmatprep.subr.bf16.mxu0 0
      %1397 = vmatpush1.bf16.msra.mxu0 0
      %1398 = vmatprep.subr.bf16.mxu0 0
      %1399 = vmatpush1.bf16.msra.mxu0 0
      %1400 = vmatprep.mubr.bf16.mxu0 0
      %1401 = vmatmul.mubr.bf16.gmra.mrb[0].mxu0 %v1366
      %v1402 = vpop.f32.mrb[0].mxu0
      %v1403 = vadd.f32 0.0, %v1402
      %v1404 = vpop.f32.mrb[0].mxu0
      %v1405 = vpop.f32.mrb[0].mxu0
      %v1406 = vpop.f32.mrb[0].mxu0
      %1407 = vdwg.mxu0
      %v1408 = vadd.f32 %v1360, %v1403
      %v1409 = vxor.u32 %v1408, 2147483648
      %v1410 = vmul.f32 %v1409, 1.442695
      %v1411 = vpow.pop %v1410
      %v1412 = vadd.f32 %v1411, 1.0
      %v1413 = vrcp.pop %v1412
      %v1414 = vmul.f32 1.0, %v1413
      %v1415 = vtanh.pop %v1408
      %v1416 = vmul.f32 %v1414, %v1354
      %1418 = vrot.lane.b32.xlu0 %v1415, 64
      %v1419 = vpop.permute.xlu0 %1418
      %v1421 = vmul.f32 %v1414, %v1419
      %1423 = vrot.lane.b32.xlu0 %v1421, 32
      %v1424 = vpop.permute.xlu0 %1423
      %v1426 = vadd.f32 %v1416, %v1424
      %v1427 = vtanh.pop %v1426
      %1429 = vrot.lane.b32.xlu0 %v1427, 64
      %v1430 = vpop.permute.xlu0 %1429
      %v1432 = vmul.f32 %v1414, %v1430
      %v1433 = vpack.c.bf16 %v1432, %v1432
      %v1435 = vunpack.c.l.b16 %v1433
      %v1436 = vpack.c.b16 %v1435, %v1435
      %1437 = vrot.lane.b32.xlu0 %v1436, 32
      %v1438 = vpop.permute.xlu0 %1437
      %s1440 = smul.addr %s1348, 4
      %s1441 = scalar_lea.vmem [#allocation4], %s1440
      %vm1442 = vcmask 257024
      %1443 = vst.msk [vmem:[%s1441] sm:$0xf] %vm1442, %v1438
    $region298: #{vid2fmri_forward.1} parent=1 // loop_footer
      %s1352 = sadd.s32 1, %s1348
    $region299: #{vid2fmri_forward.1} parent=1 // loop_footer_branch
      %1347 = sbr.rel target = $region295
    $region300: #{vid2fmri_forward.1} parent=1 // loop_exit
      _
    %s1444 = sshll.u32 %s125, 4
    %1445 = dma.done %s129, %s1444
    %p1447 = scmp.lt.u32.totalorder 32, 8
    %p1448 = pneg %p1447
    // Predicated region
    $region301: #{vid2fmri_forward.1} parent=1 // pred_check
      _
    $region302: #{vid2fmri_forward.1} parent=1 // pred_check_branch
      %1450 = sbr.rel (%p1447) target = $region304
    $region303: #{vid2fmri_forward.1} parent=1 // pred_region
      %s1465 = sand.u32 32, 7
      %p1466 = scmp.eq.s32.totalorder %s1465, 0
      // Predicated region
      $region316: #{vid2fmri_forward.1} parent=303 // pred_check
        %p1467 = pneg %p1466
      $region317: #{vid2fmri_forward.1} parent=303 // pred_check_branch
        %1469 = sbr.rel (%p1467) target = $region319
      $region318: #{vid2fmri_forward.1} parent=303 // pred_region
        loop: start=0, step=1, limit=1
        $region320: #{vid2fmri_forward.1} parent=318 // loop_pre_header
          _
        $region321: #{vid2fmri_forward.1} parent=318 // loop_header
          %s1471 = sphi 0, %s1475
          %p1472 = scmp.ge.s32.totalorder %s1471, 1
          %s1476 = sphi %s7, %s7
          %s1477 = sphi [#allocation2], [#allocation2]
        $region322: #{vid2fmri_forward.1} parent=318 // loop_header_branch
          %1474 = sbr.rel (%p1472) target = $region326
        $region323: #{vid2fmri_forward.1} parent=318 // loop_body
          %v1478 = vld [vmem:[%s1476] sm:$0xff]
          %1479 = vst [vmem:[%s1477] sm:$0xff] %v1478
          %v1480 = vld [vmem:[%s1476 + $0x8] sm:$0xff]
          %1481 = vst [vmem:[%s1477 + $0x8] sm:$0xff] %v1480
          %v1482 = vld [vmem:[%s1476 + $0x10] sm:$0xff]
          %1483 = vst [vmem:[%s1477 + $0x10] sm:$0xff] %v1482
          %v1484 = vld [vmem:[%s1476 + $0x18] sm:$0xff]
          %1485 = vst [vmem:[%s1477 + $0x18] sm:$0xff] %v1484
        $region324: #{vid2fmri_forward.1} parent=318 // loop_footer
          %s1475 = sadd.s32 1, %s1471
        $region325: #{vid2fmri_forward.1} parent=318 // loop_footer_branch
          %1470 = sbr.rel target = $region321
        $region326: #{vid2fmri_forward.1} parent=318 // loop_exit
          _
      $region319: #{vid2fmri_forward.1} parent=303 // pred_fallthru
        _
      %p1486 = pneg %p1466
      // Predicated region
      $region327: #{vid2fmri_forward.1} parent=303 // pred_check
        _
      $region328: #{vid2fmri_forward.1} parent=303 // pred_check_branch
        %1488 = sbr.rel (%p1466) target = $region330
      $region329: #{vid2fmri_forward.1} parent=303 // pred_region
        %s1489 = sand.u32 32, 7
      $region330: #{vid2fmri_forward.1} parent=303 // pred_fallthru
        _
    $region304: #{vid2fmri_forward.1} parent=1 // pred_fallthru
      _
    // Predicated region
    $region305: #{vid2fmri_forward.1} parent=1 // pred_check
      %p1451 = pneg %p1447
    $region306: #{vid2fmri_forward.1} parent=1 // pred_check_branch
      %1453 = sbr.rel (%p1451) target = $region308
    $region307: #{vid2fmri_forward.1} parent=1 // pred_region
      %s1454 = sshllo.u32 0, 32
      loop: start=0, step=1, limit=1
      $region309: #{vid2fmri_forward.1} parent=307 // loop_pre_header
        _
      $region310: #{vid2fmri_forward.1} parent=307 // loop_header
        %s1456 = sphi 0, %s1460
        %p1457 = scmp.ge.s32.totalorder %s1456, 1
        %s1461 = sphi %s7, %s7
        %s1462 = sphi [#allocation2], [#allocation2]
      $region311: #{vid2fmri_forward.1} parent=307 // loop_header_branch
        %1459 = sbr.rel (%p1457) target = $region315
      $region312: #{vid2fmri_forward.1} parent=307 // loop_body
        %v1463 = vld [vmem:[%s1461] sm:%s1454]
        %1464 = vst [vmem:[%s1462] sm:%s1454] %v1463
      $region313: #{vid2fmri_forward.1} parent=307 // loop_footer
        %s1460 = sadd.s32 1, %s1456
      $region314: #{vid2fmri_forward.1} parent=307 // loop_footer_branch
        %1455 = sbr.rel target = $region310
      $region315: #{vid2fmri_forward.1} parent=307 // loop_exit
        _
    $region308: #{vid2fmri_forward.1} parent=1 // pred_fallthru
      _
    // Predicated region
    $region331: #{vid2fmri_forward.1} parent=1 // pred_check
      _
    $region332: #{vid2fmri_forward.1} parent=1 // pred_check_branch
      %1492 = sbr.rel (0) target = $region334
    $region333: #{vid2fmri_forward.1} parent=1 // pred_region
      %1493 = vsyncadd [#allocation3], 512
    $region334: #{vid2fmri_forward.1} parent=1 // pred_fallthru
      _
    %v1494 = vld [vmem:[%s13] sm:$0x1]
    %v1495 = vld [vmem:[#allocation4] sm:$0xf]
    %v1496 = vld [vmem:[#allocation4 + $0x4] sm:$0xf]
    %v1497 = vld [vmem:[#allocation4 + $0x8] sm:$0xf]
    %v1498 = vld [vmem:[#allocation4 + $0xc] sm:$0xf]
    %v1499 = vld [vmem:[#allocation4 + $0x10] sm:$0xf]
    %v1500 = vld [vmem:[#allocation4 + $0x14] sm:$0xf]
    %v1501 = vld [vmem:[#allocation4 + $0x18] sm:$0xf]
    %v1502 = vld [vmem:[#allocation4 + $0x1c] sm:$0xf]
    %v1503 = vld [vmem:[%s128] sm:$0xff]
    %v1504 = vld [vmem:[%s128 + $0x8] sm:$0xff]
    %v1506 = vlaneseq
    %v1507 = vshrl.u32 %v1506, 7
    %v1508 = vsub.s32 0, %v1507
    %v1509 = vrot.slane %v1494, %v1508
    %v1519 = vunpack.c.l.b16 %v1495
    %v1520 = vunpack.c.l.b16 %v1496
    %v1521 = vunpack.c.l.b16 %v1497
    %v1522 = vunpack.c.l.b16 %v1498
    %v1523 = vunpack.c.l.b16 %v1499
    %v1524 = vunpack.c.l.b16 %v1500
    %v1525 = vunpack.c.l.b16 %v1501
    %v1526 = vunpack.c.l.b16 %v1502
    %v1527 = vpack.c.b16 %v1520, %v1519
    %v1528 = vpack.c.b16 %v1522, %v1521
    %v1529 = vpack.c.b16 %v1524, %v1523
    %v1530 = vpack.c.b16 %v1526, %v1525
    %v1532 = vsel %vm727, %v1527, 0
    %v1535 = vsel %vm727, %v1528, 0
    %v1538 = vsel %vm727, %v1529, 0
    %v1541 = vsel %vm727, %v1530, 0
    %1543 = vmatprep.subr.bf16.mxu0 0
    %1544 = vmatpush1.bf16.msra.mxu0 %v1503
    %1545 = vmatprep.subr.bf16.mxu0 0
    %1546 = vmatpush1.bf16.msra.mxu0 %v1504
    %1547 = vmatprep.subr.bf16.mxu0 0
    %1548 = vmatpush1.bf16.msra.mxu0 0
    %1549 = vmatprep.subr.bf16.mxu0 0
    %1550 = vmatpush1.bf16.msra.mxu0 0
    %1551 = vmatprep.subr.bf16.mxu0 0
    %1552 = vmatpush1.bf16.msra.mxu0 0
    %1553 = vmatprep.subr.bf16.mxu0 0
    %1554 = vmatpush1.bf16.msra.mxu0 0
    %1555 = vmatprep.subr.bf16.mxu0 0
    %1556 = vmatpush1.bf16.msra.mxu0 0
    %1557 = vmatprep.subr.bf16.mxu0 0
    %1558 = vmatpush1.bf16.msra.mxu0 0
    %1559 = vmatprep.subr.bf16.mxu0 0
    %1560 = vmatpush1.bf16.msra.mxu0 0
    %1561 = vmatprep.subr.bf16.mxu0 0
    %1562 = vmatpush1.bf16.msra.mxu0 0
    %1563 = vmatprep.subr.bf16.mxu0 0
    %1564 = vmatpush1.bf16.msra.mxu0 0
    %1565 = vmatprep.subr.bf16.mxu0 0
    %1566 = vmatpush1.bf16.msra.mxu0 0
    %1567 = vmatprep.subr.bf16.mxu0 0
    %1568 = vmatpush1.bf16.msra.mxu0 0
    %1569 = vmatprep.subr.bf16.mxu0 0
    %1570 = vmatpush1.bf16.msra.mxu0 0
    %1571 = vmatprep.subr.bf16.mxu0 0
    %1572 = vmatpush1.bf16.msra.mxu0 0
    %1573 = vmatprep.subr.bf16.mxu0 0
    %1574 = vmatpush1.bf16.msra.mxu0 0
    %1575 = vmatprep.mubr.bf16.mxu0 0
    %1576 = vmatmul.mubr.bf16.gmra.mrb[0].mxu0 %v1532
    %v1577 = vpop.f32.mrb[0].mxu0
    %v1578 = vadd.f32 %v1509, %v1577
    %v1579 = vpop.f32.mrb[0].mxu0
    %v1580 = vpop.f32.mrb[0].mxu0
    %v1581 = vadd.f32 %v1509, %v1580
    %v1582 = vpop.f32.mrb[0].mxu0
    %1583 = vmatprep.mubr.bf16.mxu0 0
    %1584 = vmatmul.mubr.bf16.gmra.mrb[0].mxu0 %v1535
    %v1585 = vpop.f32.mrb[0].mxu0
    %v1586 = vadd.f32 %v1509, %v1585
    %v1587 = vpop.f32.mrb[0].mxu0
    %v1588 = vpop.f32.mrb[0].mxu0
    %v1589 = vadd.f32 %v1509, %v1588
    %v1590 = vpop.f32.mrb[0].mxu0
    %1591 = vmatprep.mubr.bf16.mxu0 0
    %1592 = vmatmul.mubr.bf16.gmra.mrb[0].mxu0 %v1538
    %v1593 = vpop.f32.mrb[0].mxu0
    %v1594 = vadd.f32 %v1509, %v1593
    %v1595 = vpop.f32.mrb[0].mxu0
    %v1596 = vpop.f32.mrb[0].mxu0
    %v1597 = vadd.f32 %v1509, %v1596
    %v1598 = vpop.f32.mrb[0].mxu0
    %1599 = vmatprep.mubr.bf16.mxu0 0
    %1600 = vmatmul.mubr.bf16.gmra.mrb[0].mxu0 %v1541
    %v1601 = vpop.f32.mrb[0].mxu0
    %v1602 = vadd.f32 %v1509, %v1601
    %v1603 = vpop.f32.mrb[0].mxu0
    %v1604 = vpop.f32.mrb[0].mxu0
    %v1605 = vadd.f32 %v1509, %v1604
    %v1606 = vpop.f32.mrb[0].mxu0
    %1607 = vdwg.mxu0
    %v1608 = vpack.c.bf16 %v1578, %v1578
    %v1609 = vpack.c.bf16 %v1581, %v1581
    %v1610 = vpack.c.bf16 %v1586, %v1586
    %v1611 = vpack.c.bf16 %v1589, %v1589
    %v1612 = vpack.c.bf16 %v1594, %v1594
    %v1613 = vpack.c.bf16 %v1597, %v1597
    %v1614 = vpack.c.bf16 %v1602, %v1602
    %v1615 = vpack.c.bf16 %v1605, %v1605
    %1616 = vst [vmem:[#allocation5] sm:$0xf] %v1608
    %1617 = vst [vmem:[#allocation5 + $0x4] sm:$0xf] %v1609
    %1618 = vst [vmem:[#allocation5 + $0x8] sm:$0xf] %v1610
    %1619 = vst [vmem:[#allocation5 + $0xc] sm:$0xf] %v1611
    %1620 = vst [vmem:[#allocation5 + $0x10] sm:$0xf] %v1612
    %1621 = vst [vmem:[#allocation5 + $0x14] sm:$0xf] %v1613
    %1622 = vst [vmem:[#allocation5 + $0x18] sm:$0xf] %v1614
    %1623 = vst [vmem:[#allocation5 + $0x1c] sm:$0xf] %v1615
    loop: start=0, step=1, limit=8
    $region335: #{vid2fmri_forward.1} parent=1 // loop_pre_header
      _
    $region336: #{vid2fmri_forward.1} parent=1 // loop_header
      %s1625 = sphi 0, %s1629
      %p1626 = scmp.ge.s32.totalorder %s1625, 8
      %v1630 = vphi 0.0, %v1709
      %v1631 = vphi 0.0, %v1703
    $region337: #{vid2fmri_forward.1} parent=1 // loop_header_branch
      %1628 = sbr.rel (%p1626) target = $region341
    $region338: #{vid2fmri_forward.1} parent=1 // loop_body
      %v1632 = vld [vmem:[%s128 + $0x10] sm:$0xff]
      %v1633 = vld [vmem:[%s128 + $0x18] sm:$0xff]
      %s1634 = smul.addr %s1625, 4
      %s1635 = scalar_lea.vmem [#allocation5], %s1634
      %v1636 = vld [vmem:[%s1635] sm:$0xf]
      %v1637 = vunpack.c.l.bf16 %v1636
      %v1638 = vpack.c.bf16 %v1630, %v1630
      %1640 = vrot.lane.b32.xlu0 %v1638, 32
      %v1641 = vpop.permute.xlu0 %1640
      %v1643 = vsel %vm727, %v1641, 0
      %1645 = vmatprep.subr.bf16.mxu0 0
      %1646 = vmatpush1.bf16.msra.mxu0 %v1632
      %1647 = vmatprep.subr.bf16.mxu0 0
      %1648 = vmatpush1.bf16.msra.mxu0 %v1633
      %1649 = vmatprep.subr.bf16.mxu0 0
      %1650 = vmatpush1.bf16.msra.mxu0 0
      %1651 = vmatprep.subr.bf16.mxu0 0
      %1652 = vmatpush1.bf16.msra.mxu0 0
      %1653 = vmatprep.subr.bf16.mxu0 0
      %1654 = vmatpush1.bf16.msra.mxu0 0
      %1655 = vmatprep.subr.bf16.mxu0 0
      %1656 = vmatpush1.bf16.msra.mxu0 0
      %1657 = vmatprep.subr.bf16.mxu0 0
      %1658 = vmatpush1.bf16.msra.mxu0 0
      %1659 = vmatprep.subr.bf16.mxu0 0
      %1660 = vmatpush1.bf16.msra.mxu0 0
      %1661 = vmatprep.subr.bf16.mxu0 0
      %1662 = vmatpush1.bf16.msra.mxu0 0
      %1663 = vmatprep.subr.bf16.mxu0 0
      %1664 = vmatpush1.bf16.msra.mxu0 0
      %1665 = vmatprep.subr.bf16.mxu0 0
      %1666 = vmatpush1.bf16.msra.mxu0 0
      %1667 = vmatprep.subr.bf16.mxu0 0
      %1668 = vmatpush1.bf16.msra.mxu0 0
      %1669 = vmatprep.subr.bf16.mxu0 0
      %1670 = vmatpush1.bf16.msra.mxu0 0
      %1671 = vmatprep.subr.bf16.mxu0 0
      %1672 = vmatpush1.bf16.msra.mxu0 0
      %1673 = vmatprep.subr.bf16.mxu0 0
      %1674 = vmatpush1.bf16.msra.mxu0 0
      %1675 = vmatprep.subr.bf16.mxu0 0
      %1676 = vmatpush1.bf16.msra.mxu0 0
      %1677 = vmatprep.mubr.bf16.mxu0 0
      %1678 = vmatmul.mubr.bf16.gmra.mrb[0].mxu0 %v1643
      %v1679 = vpop.f32.mrb[0].mxu0
      %v1680 = vadd.f32 0.0, %v1679
      %v1681 = vpop.f32.mrb[0].mxu0
      %v1682 = vpop.f32.mrb[0].mxu0
      %v1683 = vpop.f32.mrb[0].mxu0
      %1684 = vdwg.mxu0
      %v1685 = vadd.f32 %v1637, %v1680
      %v1686 = vxor.u32 %v1685, 2147483648
      %v1687 = vmul.f32 %v1686, 1.442695
      %v1688 = vpow.pop %v1687
      %v1689 = vadd.f32 %v1688, 1.0
      %v1690 = vrcp.pop %v1689
      %v1691 = vmul.f32 1.0, %v1690
      %v1692 = vtanh.pop %v1685
      %v1693 = vmul.f32 %v1691, %v1631
      %1695 = vrot.lane.b32.xlu0 %v1692, 64
      %v1696 = vpop.permute.xlu0 %1695
      %v1698 = vmul.f32 %v1691, %v1696
      %1700 = vrot.lane.b32.xlu0 %v1698, 32
      %v1701 = vpop.permute.xlu0 %1700
      %v1703 = vadd.f32 %v1693, %v1701
      %v1704 = vtanh.pop %v1703
      %1706 = vrot.lane.b32.xlu0 %v1704, 64
      %v1707 = vpop.permute.xlu0 %1706
      %v1709 = vmul.f32 %v1691, %v1707
      %v1710 = vpack.c.bf16 %v1709, %v1709
      %v1712 = vunpack.c.l.b16 %v1710
      %v1713 = vpack.c.b16 %v1712, %v1712
      %1714 = vrot.lane.b32.xlu0 %v1713, 32
      %v1715 = vpop.permute.xlu0 %1714
      %s1717 = smul.addr %s1625, 4
      %s1718 = scalar_lea.vmem [#allocation4], %s1717
      %vm1719 = vcmask 257024
      %1720 = vst.msk [vmem:[%s1718] sm:$0xf] %vm1719, %v1715
    $region339: #{vid2fmri_forward.1} parent=1 // loop_footer
      %s1629 = sadd.s32 1, %s1625
    $region340: #{vid2fmri_forward.1} parent=1 // loop_footer_branch
      %1624 = sbr.rel target = $region336
    $region341: #{vid2fmri_forward.1} parent=1 // loop_exit
      _
    %s1721 = sshll.u32 %s125, 4
    %1722 = dma.done [#allocation3], %s1721
    %v1723 = vld [vmem:[%s14] sm:$0x1]
    %v1724 = vld [vmem:[#allocation4] sm:$0xf]
    %v1725 = vld [vmem:[#allocation4 + $0x4] sm:$0xf]
    %v1726 = vld [vmem:[#allocation4 + $0x8] sm:$0xf]
    %v1727 = vld [vmem:[#allocation4 + $0xc] sm:$0xf]
    %v1728 = vld [vmem:[#allocation4 + $0x10] sm:$0xf]
    %v1729 = vld [vmem:[#allocation4 + $0x14] sm:$0xf]
    %v1730 = vld [vmem:[#allocation4 + $0x18] sm:$0xf]
    %v1731 = vld [vmem:[#allocation4 + $0x1c] sm:$0xf]
    %v1732 = vld [vmem:[#allocation2] sm:$0xff]
    %v1733 = vld [vmem:[#allocation2 + $0x8] sm:$0xff]
    %v1735 = vlaneseq
    %v1736 = vshrl.u32 %v1735, 7
    %v1737 = vsub.s32 0, %v1736
    %v1738 = vrot.slane %v1723, %v1737
    %v1748 = vunpack.c.l.b16 %v1724
    %v1749 = vunpack.c.l.b16 %v1725
    %v1750 = vunpack.c.l.b16 %v1726
    %v1751 = vunpack.c.l.b16 %v1727
    %v1752 = vunpack.c.l.b16 %v1728
    %v1753 = vunpack.c.l.b16 %v1729
    %v1754 = vunpack.c.l.b16 %v1730
    %v1755 = vunpack.c.l.b16 %v1731
    %v1756 = vpack.c.b16 %v1749, %v1748
    %v1757 = vpack.c.b16 %v1751, %v1750
    %v1758 = vpack.c.b16 %v1753, %v1752
    %v1759 = vpack.c.b16 %v1755, %v1754
    %v1761 = vsel %vm727, %v1756, 0
    %v1764 = vsel %vm727, %v1757, 0
    %v1767 = vsel %vm727, %v1758, 0
    %v1770 = vsel %vm727, %v1759, 0
    %1772 = vmatprep.subr.bf16.mxu0 0
    %1773 = vmatpush1.bf16.msra.mxu0 %v1732
    %1774 = vmatprep.subr.bf16.mxu0 0
    %1775 = vmatpush1.bf16.msra.mxu0 %v1733
    %1776 = vmatprep.subr.bf16.mxu0 0
    %1777 = vmatpush1.bf16.msra.mxu0 0
    %1778 = vmatprep.subr.bf16.mxu0 0
    %1779 = vmatpush1.bf16.msra.mxu0 0
    %1780 = vmatprep.subr.bf16.mxu0 0
    %1781 = vmatpush1.bf16.msra.mxu0 0
    %1782 = vmatprep.subr.bf16.mxu0 0
    %1783 = vmatpush1.bf16.msra.mxu0 0
    %1784 = vmatprep.subr.bf16.mxu0 0
    %1785 = vmatpush1.bf16.msra.mxu0 0
    %1786 = vmatprep.subr.bf16.mxu0 0
    %1787 = vmatpush1.bf16.msra.mxu0 0
    %1788 = vmatprep.subr.bf16.mxu0 0
    %1789 = vmatpush1.bf16.msra.mxu0 0
    %1790 = vmatprep.subr.bf16.mxu0 0
    %1791 = vmatpush1.bf16.msra.mxu0 0
    %1792 = vmatprep.subr.bf16.mxu0 0
    %1793 = vmatpush1.bf16.msra.mxu0 0
    %1794 = vmatprep.subr.bf16.mxu0 0
    %1795 = vmatpush1.bf16.msra.mxu0 0
    %1796 = vmatprep.subr.bf16.mxu0 0
    %1797 = vmatpush1.bf16.msra.mxu0 0
    %1798 = vmatprep.subr.bf16.mxu0 0
    %1799 = vmatpush1.bf16.msra.mxu0 0
    %1800 = vmatprep.subr.bf16.mxu0 0
    %1801 = vmatpush1.bf16.msra.mxu0 0
    %1802 = vmatprep.subr.bf16.mxu0 0
    %1803 = vmatpush1.bf16.msra.mxu0 0
    %1804 = vmatprep.mubr.bf16.mxu0 0
    %1805 = vmatmul.mubr.bf16.gmra.mrb[0].mxu0 %v1761
    %v1806 = vpop.f32.mrb[0].mxu0
    %v1807 = vadd.f32 %v1738, %v1806
    %v1808 = vpop.f32.mrb[0].mxu0
    %v1809 = vpop.f32.mrb[0].mxu0
    %v1810 = vadd.f32 %v1738, %v1809
    %v1811 = vpop.f32.mrb[0].mxu0
    %1812 = vmatprep.mubr.bf16.mxu0 0
    %1813 = vmatmul.mubr.bf16.gmra.mrb[0].mxu0 %v1764
    %v1814 = vpop.f32.mrb[0].mxu0
    %v1815 = vadd.f32 %v1738, %v1814
    %v1816 = vpop.f32.mrb[0].mxu0
    %v1817 = vpop.f32.mrb[0].mxu0
    %v1818 = vadd.f32 %v1738, %v1817
    %v1819 = vpop.f32.mrb[0].mxu0
    %1820 = vmatprep.mubr.bf16.mxu0 0
    %1821 = vmatmul.mubr.bf16.gmra.mrb[0].mxu0 %v1767
    %v1822 = vpop.f32.mrb[0].mxu0
    %v1823 = vadd.f32 %v1738, %v1822
    %v1824 = vpop.f32.mrb[0].mxu0
    %v1825 = vpop.f32.mrb[0].mxu0
    %v1826 = vadd.f32 %v1738, %v1825
    %v1827 = vpop.f32.mrb[0].mxu0
    %1828 = vmatprep.mubr.bf16.mxu0 0
    %1829 = vmatmul.mubr.bf16.gmra.mrb[0].mxu0 %v1770
    %v1830 = vpop.f32.mrb[0].mxu0
    %v1831 = vadd.f32 %v1738, %v1830
    %v1832 = vpop.f32.mrb[0].mxu0
    %v1833 = vpop.f32.mrb[0].mxu0
    %v1834 = vadd.f32 %v1738, %v1833
    %v1835 = vpop.f32.mrb[0].mxu0
    %1836 = vdwg.mxu0
    %v1837 = vpack.c.bf16 %v1807, %v1807
    %v1838 = vpack.c.bf16 %v1810, %v1810
    %v1839 = vpack.c.bf16 %v1815, %v1815
    %v1840 = vpack.c.bf16 %v1818, %v1818
    %v1841 = vpack.c.bf16 %v1823, %v1823
    %v1842 = vpack.c.bf16 %v1826, %v1826
    %v1843 = vpack.c.bf16 %v1831, %v1831
    %v1844 = vpack.c.bf16 %v1834, %v1834
    %1845 = vst [vmem:[#allocation5] sm:$0xf] %v1837
    %1846 = vst [vmem:[#allocation5 + $0x4] sm:$0xf] %v1838
    %1847 = vst [vmem:[#allocation5 + $0x8] sm:$0xf] %v1839
    %1848 = vst [vmem:[#allocation5 + $0xc] sm:$0xf] %v1840
    %1849 = vst [vmem:[#allocation5 + $0x10] sm:$0xf] %v1841
    %1850 = vst [vmem:[#allocation5 + $0x14] sm:$0xf] %v1842
    %1851 = vst [vmem:[#allocation5 + $0x18] sm:$0xf] %v1843
    %1852 = vst [vmem:[#allocation5 + $0x1c] sm:$0xf] %v1844
    loop: start=0, step=1, limit=8
    $region342: #{vid2fmri_forward.1} parent=1 // loop_pre_header
      _
    $region343: #{vid2fmri_forward.1} parent=1 // loop_header
      %s1854 = sphi 0, %s1858
      %p1855 = scmp.ge.s32.totalorder %s1854, 8
      %v1859 = vphi 0.0, %v1938
      %v1860 = vphi 0.0, %v1932
    $region344: #{vid2fmri_forward.1} parent=1 // loop_header_branch
      %1857 = sbr.rel (%p1855) target = $region348
    $region345: #{vid2fmri_forward.1} parent=1 // loop_body
      %v1861 = vld [vmem:[#allocation2 + $0x10] sm:$0xff]
      %v1862 = vld [vmem:[#allocation2 + $0x18] sm:$0xff]
      %s1863 = smul.addr %s1854, 4
      %s1864 = scalar_lea.vmem [#allocation5], %s1863
      %v1865 = vld [vmem:[%s1864] sm:$0xf]
      %v1866 = vunpack.c.l.bf16 %v1865
      %v1867 = vpack.c.bf16 %v1859, %v1859
      %1869 = vrot.lane.b32.xlu0 %v1867, 32
      %v1870 = vpop.permute.xlu0 %1869
      %v1872 = vsel %vm727, %v1870, 0
      %1874 = vmatprep.subr.bf16.mxu0 0
      %1875 = vmatpush1.bf16.msra.mxu0 %v1861
      %1876 = vmatprep.subr.bf16.mxu0 0
      %1877 = vmatpush1.bf16.msra.mxu0 %v1862
      %1878 = vmatprep.subr.bf16.mxu0 0
      %1879 = vmatpush1.bf16.msra.mxu0 0
      %1880 = vmatprep.subr.bf16.mxu0 0
      %1881 = vmatpush1.bf16.msra.mxu0 0
      %1882 = vmatprep.subr.bf16.mxu0 0
      %1883 = vmatpush1.bf16.msra.mxu0 0
      %1884 = vmatprep.subr.bf16.mxu0 0
      %1885 = vmatpush1.bf16.msra.mxu0 0
      %1886 = vmatprep.subr.bf16.mxu0 0
      %1887 = vmatpush1.bf16.msra.mxu0 0
      %1888 = vmatprep.subr.bf16.mxu0 0
      %1889 = vmatpush1.bf16.msra.mxu0 0
      %1890 = vmatprep.subr.bf16.mxu0 0
      %1891 = vmatpush1.bf16.msra.mxu0 0
      %1892 = vmatprep.subr.bf16.mxu0 0
      %1893 = vmatpush1.bf16.msra.mxu0 0
      %1894 = vmatprep.subr.bf16.mxu0 0
      %1895 = vmatpush1.bf16.msra.mxu0 0
      %1896 = vmatprep.subr.bf16.mxu0 0
      %1897 = vmatpush1.bf16.msra.mxu0 0
      %1898 = vmatprep.subr.bf16.mxu0 0
      %1899 = vmatpush1.bf16.msra.mxu0 0
      %1900 = vmatprep.subr.bf16.mxu0 0
      %1901 = vmatpush1.bf16.msra.mxu0 0
      %1902 = vmatprep.subr.bf16.mxu0 0
      %1903 = vmatpush1.bf16.msra.mxu0 0
      %1904 = vmatprep.subr.bf16.mxu0 0
      %1905 = vmatpush1.bf16.msra.mxu0 0
      %1906 = vmatprep.mubr.bf16.mxu0 0
      %1907 = vmatmul.mubr.bf16.gmra.mrb[0].mxu0 %v1872
      %v1908 = vpop.f32.mrb[0].mxu0
      %v1909 = vadd.f32 0.0, %v1908
      %v1910 = vpop.f32.mrb[0].mxu0
      %v1911 = vpop.f32.mrb[0].mxu0
      %v1912 = vpop.f32.mrb[0].mxu0
      %1913 = vdwg.mxu0
      %v1914 = vadd.f32 %v1866, %v1909
      %v1915 = vxor.u32 %v1914, 2147483648
      %v1916 = vmul.f32 %v1915, 1.442695
      %v1917 = vpow.pop %v1916
      %v1918 = vadd.f32 %v1917, 1.0
      %v1919 = vrcp.pop %v1918
      %v1920 = vmul.f32 1.0, %v1919
      %v1921 = vtanh.pop %v1914
      %v1922 = vmul.f32 %v1920, %v1860
      %1924 = vrot.lane.b32.xlu0 %v1921, 64
      %v1925 = vpop.permute.xlu0 %1924
      %v1927 = vmul.f32 %v1920, %v1925
      %1929 = vrot.lane.b32.xlu0 %v1927, 32
      %v1930 = vpop.permute.xlu0 %1929
      %v1932 = vadd.f32 %v1922, %v1930
      %v1933 = vtanh.pop %v1932
      %1935 = vrot.lane.b32.xlu0 %v1933, 64
      %v1936 = vpop.permute.xlu0 %1935
      %v1938 = vmul.f32 %v1920, %v1936
    $region346: #{vid2fmri_forward.1} parent=1 // loop_footer
      %s1858 = sadd.s32 1, %s1854
    $region347: #{vid2fmri_forward.1} parent=1 // loop_footer_branch
      %1853 = sbr.rel target = $region343
    $region348: #{vid2fmri_forward.1} parent=1 // loop_exit
      _
    %v1939 = vld [vmem:[%s0] sm:$0xff]
    %v1940 = vld [vmem:[%s0 + $0x8] sm:$0xff]
    %v1941 = vld [vmem:[%s0 + $0x10] sm:$0xff]
    %v1942 = vld [vmem:[%s0 + $0x18] sm:$0xff]
    %v1943 = vld [vmem:[%s0 + $0x20] sm:$0xff]
    %v1944 = vld [vmem:[%s0 + $0x28] sm:$0xff]
    %v1945 = vld [vmem:[%s0 + $0x30] sm:$0xff]
    %v1946 = vld [vmem:[%s0 + $0x38] sm:$0xff]
    %v1947 = vsel %vm198, %v1939, inf
    %v1948 = vsel %vm198, %v1940, inf
    %v1949 = vsel %vm198, %v1941, inf
    %v1950 = vsel %vm198, %v1942, inf
    %v1951 = vsel %vm198, %v1943, inf
    %v1952 = vmin.f32 %v1947, %v1951
    %v1953 = vsel %vm198, %v1944, inf
    %v1954 = vmin.f32 %v1948, %v1953
    %v1955 = vsel %vm198, %v1945, inf
    %v1956 = vmin.f32 %v1949, %v1955
    %v1957 = vsel %vm198, %v1946, inf
    %v1958 = vmin.f32 %v1950, %v1957
    %v1959 = vmin.f32 %v1952, %v1954
    %v1960 = vmin.f32 %v1956, %v1958
    %v1961 = vmin.f32 %v1959, %v1960
    %v1962 = vsel %vm198, %v1939, -inf
    %v1963 = vsel %vm198, %v1940, -inf
    %v1964 = vsel %vm198, %v1941, -inf
    %v1965 = vsel %vm198, %v1942, -inf
    %v1966 = vsel %vm198, %v1943, -inf
    %v1967 = vmax.f32 %v1962, %v1966
    %v1968 = vsel %vm198, %v1944, -inf
    %v1969 = vmax.f32 %v1963, %v1968
    %v1970 = vsel %vm198, %v1945, -inf
    %v1971 = vmax.f32 %v1964, %v1970
    %v1972 = vsel %vm198, %v1946, -inf
    %v1973 = vmax.f32 %v1965, %v1972
    %v1974 = vmax.f32 %v1967, %v1969
    %v1975 = vmax.f32 %v1971, %v1973
    %v1976 = vmax.f32 %v1974, %v1975
    %v1977 = vsel %vm198, %v1939, 0.0
    %v1978 = vsel %vm198, %v1940, 0.0
    %v1979 = vadd.f32 %v1977, %v1978
    %v1980 = vsel %vm198, %v1941, 0.0
    %v1981 = vadd.f32 %v1979, %v1980
    %v1982 = vsel %vm198, %v1942, 0.0
    %v1983 = vadd.f32 %v1981, %v1982
    %v1984 = vsel %vm198, %v1943, 0.0
    %v1985 = vadd.f32 %v1983, %v1984
    %v1986 = vsel %vm198, %v1944, 0.0
    %v1987 = vadd.f32 %v1985, %v1986
    %v1988 = vsel %vm198, %v1945, 0.0
    %v1989 = vadd.f32 %v1987, %v1988
    %v1990 = vsel %vm198, %v1946, 0.0
    %v1991 = vadd.f32 %v1989, %v1990
    %v1992 = vrcp.pop 8.0
    %v1993 = vmul.f32 %v1991, %v1992
    %v1994 = vsub.f32 %v1939, %v1993
    %v1995 = vsub.f32 %v1940, %v1993
    %v1996 = vsub.f32 %v1941, %v1993
    %v1997 = vsub.f32 %v1942, %v1993
    %v1998 = vsub.f32 %v1943, %v1993
    %v1999 = vsub.f32 %v1944, %v1993
    %v2000 = vsub.f32 %v1945, %v1993
    %v2001 = vsub.f32 %v1946, %v1993
    %v2002 = vmul.f32 %v1994, %v1994
    %v2003 = vmul.f32 %v1995, %v1995
    %v2004 = vmul.f32 %v1996, %v1996
    %v2005 = vmul.f32 %v1997, %v1997
    %v2006 = vmul.f32 %v1998, %v1998
    %v2007 = vmul.f32 %v1999, %v1999
    %v2008 = vmul.f32 %v2000, %v2000
    %v2009 = vmul.f32 %v2001, %v2001
    %v2010 = vsel %vm198, %v2002, 0.0
    %v2011 = vsel %vm198, %v2003, 0.0
    %v2012 = vadd.f32 %v2010, %v2011
    %v2013 = vsel %vm198, %v2004, 0.0
    %v2014 = vadd.f32 %v2012, %v2013
    %v2015 = vsel %vm198, %v2005, 0.0
    %v2016 = vadd.f32 %v2014, %v2015
    %v2017 = vsel %vm198, %v2006, 0.0
    %v2018 = vadd.f32 %v2016, %v2017
    %v2019 = vsel %vm198, %v2007, 0.0
    %v2020 = vadd.f32 %v2018, %v2019
    %v2021 = vsel %vm198, %v2008, 0.0
    %v2022 = vadd.f32 %v2020, %v2021
    %v2023 = vsel %vm198, %v2009, 0.0
    %v2024 = vadd.f32 %v2022, %v2023
    %v2025 = vmul.f32 %v2024, %v1992
    %v2026 = vrsqrt.pop %v2025
    %v2027 = vmul.f32 %v2025, %v2026
    %vm2028 = vcmp.eq.f32.partialorder %v2025, inf
    %v2029 = vsel %vm2028, %v2025, %v2027
    %vm2030 = vcmp.eq.f32.partialorder %v2025, 0.0
    %v2031 = vand.u32 %v2025, 2147483648
    %v2032 = vsel %vm2030, %v2031, %v2029
    %2034 = vrot.lane.b32.xlu0 %v1961, 16
    %v2035 = vpop.permute.xlu0 %2034
    %2038 = vrot.lane.b32.xlu0 %v1976, 32
    %v2039 = vpop.permute.xlu0 %2038
    %2042 = vrot.lane.b32.xlu0 %v1993, 48
    %v2043 = vpop.permute.xlu0 %2042
    %2046 = vrot.lane.b32.xlu0 %v2032, 64
    %v2047 = vpop.permute.xlu0 %2046
    %v2049 = vsel %vm198, %v1946, %v2035
    %v2050 = vsel %vm727, %v2049, %v2039
    %vm2051 = vcmask 392192
    %v2052 = vsel %vm2051, %v2050, %v2043
    %vm2053 = vcmask 523264
    %v2054 = vsel %vm2053, %v2052, %v2047
    %2056 = vrot.lane.b32.xlu0 %v298, 32
    %v2057 = vpop.permute.xlu0 %2056
    %2060 = vrot.lane.b32.xlu0 %v827, 64
    %v2061 = vpop.permute.xlu0 %2060
    %2064 = vrot.lane.b32.xlu0 %v1859, 96
    %v2065 = vpop.permute.xlu0 %2064
    %v2067 = vsel %vm727, %v2057, %v2061
    %v2068 = vsel %vm2053, %v2067, %v2065
    %v2069 = vxor.u32 %v2068, 2147483648
    %v2070 = vmul.f32 %v2069, 1.442695
    %v2071 = vpow.pop %v2070
    %v2072 = vadd.f32 %v2071, 1.0
    %v2073 = vrcp.pop %v2072
    %v2074 = vmul.f32 1.0, %v2073
    %v2075 = vmul.f32 %v2068, %v2074
    %v2076 = vpack.c.bf16 %v2054, %v2054
    %v2077 = vld [vmem:[%s15] sm:$0xf]
    %v2078 = vld [vmem:[%s15 + $0x4] sm:$0xf]
    %v2079 = vld [vmem:[%s15 + $0x8] sm:$0xf]
    %v2080 = vld [vmem:[%s15 + $0xc] sm:$0xf]
    %v2081 = vld [vmem:[%s15 + $0x10] sm:$0xf]
    %v2082 = vld [vmem:[%s15 + $0x14] sm:$0xf]
    %v2083 = vld [vmem:[%s15 + $0x18] sm:$0xf]
    %v2084 = vld [vmem:[%s15 + $0x1c] sm:$0xf]
    %v2085 = vld [vmem:[%s15 + $0x20] sm:$0xf]
    %v2086 = vld [vmem:[%s15 + $0x24] sm:$0xf]
    %v2087 = vpack.c.bf16 %v2075, %v2075
    %v2088 = vld [vmem:[%s16] sm:$0xf]
    %v2089 = vld [vmem:[%s16 + $0x4] sm:$0xf]
    %v2090 = vld [vmem:[%s16 + $0x8] sm:$0xf]
    %v2091 = vld [vmem:[%s16 + $0xc] sm:$0xf]
    %v2092 = vld [vmem:[%s16 + $0x10] sm:$0xf]
    %v2093 = vld [vmem:[%s16 + $0x14] sm:$0xf]
    %v2094 = vld [vmem:[%s16 + $0x18] sm:$0xf]
    %v2095 = vld [vmem:[%s16 + $0x1c] sm:$0xf]
    %v2096 = vld [vmem:[%s16 + $0x20] sm:$0xf]
    %v2097 = vld [vmem:[%s16 + $0x24] sm:$0xf]
    %v2098 = vld [vmem:[%s16 + $0x28] sm:$0xf]
    %v2099 = vld [vmem:[%s16 + $0x2c] sm:$0xf]
    %v2112 = vunpack.c.l.b16 %v2088
    %v2113 = vunpack.c.l.b16 %v2089
    %v2114 = vunpack.c.l.b16 %v2090
    %v2115 = vunpack.c.l.b16 %v2091
    %v2116 = vunpack.c.l.b16 %v2092
    %v2117 = vunpack.c.l.b16 %v2093
    %v2118 = vunpack.c.l.b16 %v2094
    %v2119 = vunpack.c.l.b16 %v2095
    %v2120 = vunpack.c.l.b16 %v2096
    %v2121 = vunpack.c.l.b16 %v2097
    %v2122 = vunpack.c.l.b16 %v2098
    %v2123 = vunpack.c.l.b16 %v2099
    %v2124 = vpack.c.b16 %v2113, %v2112
    %v2125 = vpack.c.b16 %v2115, %v2114
    %v2126 = vpack.c.b16 %v2117, %v2116
    %v2127 = vpack.c.b16 %v2119, %v2118
    %v2128 = vpack.c.b16 %v2121, %v2120
    %v2129 = vpack.c.b16 %v2123, %v2122
    %vm2136 = vcmask 785408
    %v2138 = vsel %vm2136, %v2087, 0
    %2140 = vmatprep.subr.bf16.mxu0 0
    %2141 = vmatpush1.bf16.msra.mxu0 %v2124
    %2142 = vmatprep.subr.bf16.mxu0 0
    %2143 = vmatpush1.bf16.msra.mxu0 %v2125
    %2144 = vmatprep.subr.bf16.mxu0 0
    %2145 = vmatpush1.bf16.msra.mxu0 %v2126
    %2146 = vmatprep.subr.bf16.mxu0 0
    %2147 = vmatpush1.bf16.msra.mxu0 %v2127
    %2148 = vmatprep.subr.bf16.mxu0 0
    %2149 = vmatpush1.bf16.msra.mxu0 %v2128
    %2150 = vmatprep.subr.bf16.mxu0 0
    %2151 = vmatpush1.bf16.msra.mxu0 %v2129
    %2152 = vmatprep.subr.bf16.mxu0 0
    %2153 = vmatpush1.bf16.msra.mxu0 0
    %2154 = vmatprep.subr.bf16.mxu0 0
    %2155 = vmatpush1.bf16.msra.mxu0 0
    %2156 = vmatprep.subr.bf16.mxu0 0
    %2157 = vmatpush1.bf16.msra.mxu0 0
    %2158 = vmatprep.subr.bf16.mxu0 0
    %2159 = vmatpush1.bf16.msra.mxu0 0
    %2160 = vmatprep.subr.bf16.mxu0 0
    %2161 = vmatpush1.bf16.msra.mxu0 0
    %2162 = vmatprep.subr.bf16.mxu0 0
    %2163 = vmatpush1.bf16.msra.mxu0 0
    %2164 = vmatprep.subr.bf16.mxu0 0
    %2165 = vmatpush1.bf16.msra.mxu0 0
    %2166 = vmatprep.subr.bf16.mxu0 0
    %2167 = vmatpush1.bf16.msra.mxu0 0
    %2168 = vmatprep.subr.bf16.mxu0 0
    %2169 = vmatpush1.bf16.msra.mxu0 0
    %2170 = vmatprep.subr.bf16.mxu0 0
    %2171 = vmatpush1.bf16.msra.mxu0 0
    %2172 = vmatprep.mubr.bf16.mxu0 0
    %2173 = vmatmul.mubr.bf16.gmra.mrb[0].mxu0 %v2138
    %v2174 = vpop.f32.mrb[0].mxu0
    %v2175 = vadd.f32 0.0, %v2174
    %v2176 = vpop.f32.mrb[0].mxu0
    %v2177 = vpop.f32.mrb[0].mxu0
    %v2178 = vpop.f32.mrb[0].mxu0
    %2179 = vdwg.mxu0
    %v2190 = vunpack.c.l.b16 %v2077
    %v2191 = vunpack.c.l.b16 %v2078
    %v2192 = vunpack.c.l.b16 %v2079
    %v2193 = vunpack.c.l.b16 %v2080
    %v2194 = vunpack.c.l.b16 %v2081
    %v2195 = vunpack.c.l.b16 %v2082
    %v2196 = vunpack.c.l.b16 %v2083
    %v2197 = vunpack.c.l.b16 %v2084
    %v2198 = vunpack.c.l.b16 %v2085
    %v2199 = vunpack.c.l.b16 %v2086
    %v2200 = vpack.c.b16 %v2191, %v2190
    %v2201 = vpack.c.b16 %v2193, %v2192
    %v2202 = vpack.c.b16 %v2195, %v2194
    %v2203 = vpack.c.b16 %v2197, %v2196
    %v2204 = vpack.c.b16 %v2199, %v2198
    %vm2210 = vcmask 654336
    %v2212 = vsel %vm2210, %v2076, 0
    %2214 = vmatprep.subr.bf16.mxu0 0
    %2215 = vmatpush1.bf16.msra.mxu0 %v2200
    %2216 = vmatprep.subr.bf16.mxu0 0
    %2217 = vmatpush1.bf16.msra.mxu0 %v2201
    %2218 = vmatprep.subr.bf16.mxu0 0
    %2219 = vmatpush1.bf16.msra.mxu0 %v2202
    %2220 = vmatprep.subr.bf16.mxu0 0
    %2221 = vmatpush1.bf16.msra.mxu0 %v2203
    %2222 = vmatprep.subr.bf16.mxu0 0
    %2223 = vmatpush1.bf16.msra.mxu0 %v2204
    %2224 = vmatprep.subr.bf16.mxu0 0
    %2225 = vmatpush1.bf16.msra.mxu0 0
    %2226 = vmatprep.subr.bf16.mxu0 0
    %2227 = vmatpush1.bf16.msra.mxu0 0
    %2228 = vmatprep.subr.bf16.mxu0 0
    %2229 = vmatpush1.bf16.msra.mxu0 0
    %2230 = vmatprep.subr.bf16.mxu0 0
    %2231 = vmatpush1.bf16.msra.mxu0 0
    %2232 = vmatprep.subr.bf16.mxu0 0
    %2233 = vmatpush1.bf16.msra.mxu0 0
    %2234 = vmatprep.subr.bf16.mxu0 0
    %2235 = vmatpush1.bf16.msra.mxu0 0
    %2236 = vmatprep.subr.bf16.mxu0 0
    %2237 = vmatpush1.bf16.msra.mxu0 0
    %2238 = vmatprep.subr.bf16.mxu0 0
    %2239 = vmatpush1.bf16.msra.mxu0 0
    %2240 = vmatprep.subr.bf16.mxu0 0
    %2241 = vmatpush1.bf16.msra.mxu0 0
    %2242 = vmatprep.subr.bf16.mxu0 0
    %2243 = vmatpush1.bf16.msra.mxu0 0
    %2244 = vmatprep.subr.bf16.mxu0 0
    %2245 = vmatpush1.bf16.msra.mxu0 0
    %2246 = vmatprep.mubr.bf16.mxu0 0
    %2247 = vmatmul.mubr.bf16.gmra.mrb[0].mxu0 %v2212
    %v2248 = vpop.f32.mrb[0].mxu0
    %v2249 = vadd.f32 %v2175, %v2248
    %v2250 = vpop.f32.mrb[0].mxu0
    %v2251 = vpop.f32.mrb[0].mxu0
    %v2252 = vpop.f32.mrb[0].mxu0
    %2253 = vdwg.mxu0
    %v2254 = vld [vmem:[#allocation6] sm:$0x1]
    %v2256 = vlaneseq
    %v2257 = vshrl.u32 %v2256, 7
    %v2258 = vsub.s32 0, %v2257
    %v2259 = vrot.slane %v2254, %v2258
    %v2261 = vadd.f32 %v2249, %v2259
    %v2262 = vtanh.pop %v2261
    %v2263 = vpack.c.bf16 %v2262, %v2262
    %v2264 = vld [vmem:[%s18] sm:$0xf]
    %v2265 = vld [vmem:[%s18 + $0x4] sm:$0xf]
    %v2266 = vld [vmem:[%s18 + $0x8] sm:$0xf]
    %v2267 = vld [vmem:[%s18 + $0xc] sm:$0xf]
    %v2268 = vld [vmem:[#allocation8] sm:$0x1]
    %v2270 = vlaneseq
    %v2271 = vshrl.u32 %v2270, 7
    %v2272 = vsub.s32 0, %v2271
    %v2273 = vrot.slane %v2268, %v2272
    %v2279 = vunpack.c.l.b16 %v2264
    %v2280 = vunpack.c.l.b16 %v2265
    %v2281 = vunpack.c.l.b16 %v2266
    %v2282 = vunpack.c.l.b16 %v2267
    %v2283 = vpack.c.b16 %v2280, %v2279
    %v2284 = vpack.c.b16 %v2282, %v2281
    %v2288 = vsel %vm727, %v2263, 0
    %2290 = vmatprep.subr.bf16.mxu0 0
    %2291 = vmatpush1.bf16.msra.mxu0 %v2283
    %2292 = vmatprep.subr.bf16.mxu0 0
    %2293 = vmatpush1.bf16.msra.mxu0 %v2284
    %2294 = vmatprep.subr.bf16.mxu0 0
    %2295 = vmatpush1.bf16.msra.mxu0 0
    %2296 = vmatprep.subr.bf16.mxu0 0
    %2297 = vmatpush1.bf16.msra.mxu0 0
    %2298 = vmatprep.subr.bf16.mxu0 0
    %2299 = vmatpush1.bf16.msra.mxu0 0
    %2300 = vmatprep.subr.bf16.mxu0 0
    %2301 = vmatpush1.bf16.msra.mxu0 0
    %2302 = vmatprep.subr.bf16.mxu0 0
    %2303 = vmatpush1.bf16.msra.mxu0 0
    %2304 = vmatprep.subr.bf16.mxu0 0
    %2305 = vmatpush1.bf16.msra.mxu0 0
    %2306 = vmatprep.subr.bf16.mxu0 0
    %2307 = vmatpush1.bf16.msra.mxu0 0
    %2308 = vmatprep.subr.bf16.mxu0 0
    %2309 = vmatpush1.bf16.msra.mxu0 0
    %2310 = vmatprep.subr.bf16.mxu0 0
    %2311 = vmatpush1.bf16.msra.mxu0 0
    %2312 = vmatprep.subr.bf16.mxu0 0
    %2313 = vmatpush1.bf16.msra.mxu0 0
    %2314 = vmatprep.subr.bf16.mxu0 0
    %2315 = vmatpush1.bf16.msra.mxu0 0
    %2316 = vmatprep.subr.bf16.mxu0 0
    %2317 = vmatpush1.bf16.msra.mxu0 0
    %2318 = vmatprep.subr.bf16.mxu0 0
    %2319 = vmatpush1.bf16.msra.mxu0 0
    %2320 = vmatprep.subr.bf16.mxu0 0
    %2321 = vmatpush1.bf16.msra.mxu0 0
    %2322 = vmatprep.mubr.bf16.mxu0 0
    %2323 = vmatmul.mubr.bf16.gmra.mrb[0].mxu0 %v2288
    %v2324 = vpop.f32.mrb[0].mxu0
    %v2325 = vadd.f32 %v2273, %v2324
    %v2326 = vpop.f32.mrb[0].mxu0
    %v2327 = vpop.f32.mrb[0].mxu0
    %v2328 = vpop.f32.mrb[0].mxu0
    %2329 = vdwg.mxu0
    %2330 = vst.msk [vmem:[%s20] sm:$0xff] %vm198, %v2325
    // Predicated region
    $region349: #{vid2fmri_forward.1} parent=1 // pred_check
      _
    $region350: #{vid2fmri_forward.1} parent=1 // pred_check_branch
      %2332 = sbr.rel (0) target = $region352
    $region351: #{vid2fmri_forward.1} parent=1 // pred_region
      _
    $region352: #{vid2fmri_forward.1} parent=1 // pred_fallthru
      _
    // Predicated region
    $region353: #{vid2fmri_forward.1} parent=1 // pred_check
      _
    $region354: #{vid2fmri_forward.1} parent=1 // pred_check_branch
      %2334 = sbr.rel (0) target = $region356
    $region355: #{vid2fmri_forward.1} parent=1 // pred_region
      _
    $region356: #{vid2fmri_forward.1} parent=1 // pred_fallthru
      _
    %2335 = vsyncpa [#allocation7], 1
    %2336 = vsyncpa [#allocation9], 1
  %2337 = vsyncmov [#allocation3]
  %s2338 = vpop.sfrf %2337
  %p2339 = scmp.eq.s32.totalorder %s2338, 0
  %p2340 = pneg %p2339
  %2342 = shalt.err (%p2340)
  %s2343 = scalar_lea.sflag [#allocation3], 1
  %2344 = vsyncmov %s2343
  %s2345 = vpop.sfrf %2344
  %p2346 = scmp.eq.s32.totalorder %s2345, 0
  %p2347 = pneg %p2346
  %2349 = shalt.err (%p2347)

</llo_original>
